<compile_context>
chip_gen: v5e
topology: v5e:2x2
jax: 0.10.0
libtpu: 0.0.40
codegen_flags: <defaults>
</compile_context>

<pallas_src>
import jax
import jax.numpy as jnp
from jax.experimental import pallas as pl
from jax.experimental.pallas import tpu as pltpu

NEG_SLOPE = 0.01


def _upconv_kernel(x_ref, w_ref, b_ref, f_ref, o_ref):
    # x_ref: (1, Cin, r, W)    bf16 VMEM  -- r input rows of one image
    # w_ref: (4*Cout, Cin)     f32  SMEM  -- rows ordered (kh, kw, co)
    # b_ref: (Cout,)           f32  SMEM
    # f_ref: (4, W, 4W)        f32  VMEM  -- per-tap 0/1 interleave/scatter matrices
    # o_ref: (1, Cout, r, 4W)  f32  VMEM  -- minor dim = (kh, w, kw) interleaved
    cin = x_ref.shape[1]
    cout = o_ref.shape[1]

    # Hoist the (r, W) activation slabs once per block; accumulate in f32.
    xs = [x_ref[0, ci].astype(jnp.float32) for ci in range(cin)]
    taps = [f_ref[t] for t in range(4)]

    for co in range(cout):
        acc = None
        for t in range(4):
            # Cin-contraction: scalar weight (SMEM) * activation slab (VPU).
            s = w_ref[t * cout + co, 0] * xs[0]
            for ci in range(1, cin):
                s = s + w_ref[t * cout + co, ci] * xs[ci]
            # Scatter this tap into the (kh, w, kw) interleaved minor dim (MXU).
            y = jnp.dot(s, taps[t], preferred_element_type=jnp.float32)
            acc = y if acc is None else acc + y
        acc = acc + b_ref[co]                                   # bias (f32)
        o_ref[0, co] = jnp.where(acc > 0, acc, NEG_SLOPE * acc).astype(o_ref.dtype)


def _pick_rows(H, W, Cin, Cout, target_block_bytes=4 << 20):
    """Input rows per grid step: multiple of 8 dividing H (or H itself), sized so
    the double-buffered blocks stay well inside the scoped-VMEM budget on
    v5e/v6e (128 MiB) and v7x (64 MiB)."""
    bytes_per_row = Cout * 4 * W * 4 + Cin * W * 2   # f32 out block + bf16 in block
    r_max = max(8, target_block_bytes // max(bytes_per_row, 1))
    if H <= r_max:
        return H
    best = None
    for cand in range(8, int(min(H, r_max)) + 1, 8):
        if H % cand == 0:
            best = cand
    # Fallback: take the whole image height (block dim == full dim is always legal).
    return best if best is not None else H


def upconv_forward(x_nchw, weight, bias):
    """ConvTranspose2d(k=2, s=2) + LeakyReLU(0.01).

    x_nchw : (N, Cin, H, W)     float32 (NCHW, PyTorch layout)
    weight : (Cin, Cout, 2, 2)  PyTorch ConvTranspose2d layout
    bias   : (Cout,)
    returns: (N, Cout, 2H, 2W)  float32 (NCHW)
    """
    N, Cin, H, W = x_nchw.shape
    Cout = weight.shape[1]

    r = _pick_rows(H, W, Cin, Cout)
    # v7x has 2 TensorCores: try to keep at least 2 grid steps.
    if N * (H // r) < 2:
        for cand in (r // 2, r // 4):
            if cand >= 8 and cand % 8 == 0 and H % cand == 0:
                r = cand
                break
    grid = (N, H // r)

    # bf16 activations halve the dominant HBM read stream; accumulation and the
    # epilogue stay f32 (in a real model the cast fuses into the producer).
    x_b = x_nchw.astype(jnp.bfloat16)

    # weight[ci, co, kh, kw] -> rows ordered (kh, kw, co), columns ci.  Read as
    # scalars from SMEM inside the kernel.
    wp = jnp.transpose(weight, (2, 3, 1, 0)).reshape(4 * Cout, Cin).astype(jnp.float32)
    b = bias.astype(jnp.float32)

    # Per-tap scatter matrices: F[t, w, kh*2W + 2w + kw] = 1 with t = 2*kh + kw.
    # Right-multiplying an (r, W) tap slab by F[t] places it into the interleaved
    # (kh, w, kw) minor dim of the output block -> the 2x2 upsample interleave is
    # fused into the kernel and no post-kernel HBM pass is needed.
    f_list = []
    for kh in range(2):
        for kw in range(2):
            cols = kh * 2 * W + 2 * jnp.arange(W) + kw
            f_list.append(jax.nn.one_hot(cols, 4 * W, dtype=jnp.float32))
    F = jnp.stack(f_list)  # (4, W, 4W)

    out = pl.pallas_call(
        _upconv_kernel,
        out_shape=jax.ShapeDtypeStruct((N, Cout, H, 4 * W), jnp.float32),
        grid_spec=pltpu.PrefetchScalarGridSpec(
            num_scalar_prefetch=0,
            grid=grid,
            in_specs=[
                pl.BlockSpec((1, Cin, r, W), lambda n, i: (n, 0, i, 0)),
                pl.BlockSpec(memory_space=pltpu.MemorySpace.SMEM),   # packed weights
                pl.BlockSpec(memory_space=pltpu.MemorySpace.SMEM),   # bias
                pl.BlockSpec((4, W, 4 * W), lambda n, i: (0, 0, 0)),  # resident F
            ],
            out_specs=pl.BlockSpec((1, Cout, r, 4 * W), lambda n, i: (n, 0, i, 0)),
        ),
        compiler_params=pltpu.CompilerParams(
            dimension_semantics=("parallel", "parallel"),
            vmem_limit_bytes=32 << 20,
        ),
    )(x_b, wp, b, F)

    # (N, Cout, H, 4W) -> (N, Cout, 2H, 2W): identical row-major order, free view.
    return out.reshape(N, Cout, 2 * H, 2 * W)


def upconv_reference(x_nchw, weight, bias):
    """Pure-JAX reference of ConvTranspose2d(k=2, s=2) + LeakyReLU, NCHW."""
    N, Cin, H, W = x_nchw.shape
    Cout = weight.shape[1]
    y = jnp.einsum("nchw,cokl->nohwkl", x_nchw, weight,
                   precision=jax.lax.Precision.HIGHEST)
    y = jnp.transpose(y, (0, 1, 2, 4, 3, 5)).reshape(N, Cout, 2 * H, 2 * W)
    y = y + bias[None, :, None, None]
    return jnp.where(y > 0, y, NEG_SLOPE * y)


if __name__ == "__main__":
    key = jax.random.PRNGKey(0)
    k_x, k_w, k_b = jax.random.split(key, 3)

    N, Cin, Cout, H, W = 2, 4, 8, 16, 16

    x = jax.random.normal(k_x, (N, Cin, H, W), dtype=jnp.float32)
    bound = 1.0 / jnp.sqrt(jnp.float32(Cin * 2 * 2))
    weight = jax.random.uniform(k_w, (Cin, Cout, 2, 2), jnp.float32, -bound, bound)
    bias = jax.random.uniform(k_b, (Cout,), jnp.float32, -bound, bound)

    fwd = jax.jit(upconv_forward)
    out = jax.block_until_ready(fwd(x, weight, bias))
    assert out.shape == (N, Cout, 2 * H, 2 * W), out.shape

    # The kernel reads bf16 activations (with f32 accumulation), so compare
    # tightly against a reference built from the same bf16-rounded activations,
    # and loosely against the full-f32 math.
    x_bf = x.astype(jnp.bfloat16).astype(jnp.float32)
    ref_bf = upconv_reference(x_bf, weight, bias)
    ref_f32 = upconv_reference(x, weight, bias)

    assert jnp.allclose(out, ref_bf, atol=1e-5, rtol=1e-5), \
        float(jnp.max(jnp.abs(out - ref_bf)))
    assert jnp.allclose(out, ref_f32, atol=5e-2, rtol=5e-2), \
        float(jnp.max(jnp.abs(out - ref_f32)))

    print("KERNEL_OK")
</pallas_src>

<mosaic_0001>
module attributes {stable_mosaic.version = 11 : i64} {
  func.func @_upconv_kernel(%arg0: i32, %arg1: i32, %arg2: memref<1x4x16x16xbf16, #tpu.memory_space<vmem>>, %arg3: memref<32x4xf32, #tpu.memory_space<smem>>, %arg4: memref<8xf32, #tpu.memory_space<smem>>, %arg5: memref<4x16x64xf32, #tpu.memory_space<vmem>>, %arg6: memref<1x8x16x64xf32, #tpu.memory_space<vmem>>) attributes {dimension_semantics = [#tpu.dimension_semantics<parallel>, #tpu.dimension_semantics<parallel>], iteration_bounds = array<i64: 2, 1>, scalar_prefetch = 0 : i64, scratch_operands = 0 : i64, tpu.core_type = #tpu.core_type<tc>, window_params = [{transform_indices = @transform_0, window_bounds = array<i64: 1, 4, 16, 16>}, {transform_indices = @transform_1, window_bounds = array<i64: 32, 4>}, {transform_indices = @transform_2, window_bounds = array<i64: 8>}, {pipeline_mode = #tpu.pipeline_mode<synchronous>, transform_indices = @transform_3, window_bounds = array<i64: 4, 16, 64>}, {transform_indices = @transform_4, window_bounds = array<i64: 1, 8, 16, 64>}]} {
    %c0 = arith.constant 0 : index
    %c0_0 = arith.constant 0 : index
    %c0_1 = arith.constant 0 : index
    %c0_2 = arith.constant 0 : index
    %0 = vector.load %arg2[%c0, %c0_0, %c0_1, %c0_2] : memref<1x4x16x16xbf16, #tpu.memory_space<vmem>>, vector<1x1x16x16xbf16>
    %1 = vector.shape_cast %0 : vector<1x1x16x16xbf16> to vector<16x16xbf16>
    %2 = arith.extf %1 : vector<16x16xbf16> to vector<16x16xf32>
    %c0_3 = arith.constant 0 : index
    %c1 = arith.constant 1 : index
    %c0_4 = arith.constant 0 : index
    %c0_5 = arith.constant 0 : index
    %3 = vector.load %arg2[%c0_3, %c1, %c0_4, %c0_5] : memref<1x4x16x16xbf16, #tpu.memory_space<vmem>>, vector<1x1x16x16xbf16>
    %4 = vector.shape_cast %3 : vector<1x1x16x16xbf16> to vector<16x16xbf16>
    %5 = arith.extf %4 : vector<16x16xbf16> to vector<16x16xf32>
    %c0_6 = arith.constant 0 : index
    %c2 = arith.constant 2 : index
    %c0_7 = arith.constant 0 : index
    %c0_8 = arith.constant 0 : index
    %6 = vector.load %arg2[%c0_6, %c2, %c0_7, %c0_8] : memref<1x4x16x16xbf16, #tpu.memory_space<vmem>>, vector<1x1x16x16xbf16>
    %7 = vector.shape_cast %6 : vector<1x1x16x16xbf16> to vector<16x16xbf16>
    %8 = arith.extf %7 : vector<16x16xbf16> to vector<16x16xf32>
    %c0_9 = arith.constant 0 : index
    %c3 = arith.constant 3 : index
    %c0_10 = arith.constant 0 : index
    %c0_11 = arith.constant 0 : index
    %9 = vector.load %arg2[%c0_9, %c3, %c0_10, %c0_11] : memref<1x4x16x16xbf16, #tpu.memory_space<vmem>>, vector<1x1x16x16xbf16>
    %10 = vector.shape_cast %9 : vector<1x1x16x16xbf16> to vector<16x16xbf16>
    %11 = arith.extf %10 : vector<16x16xbf16> to vector<16x16xf32>
    %c0_12 = arith.constant 0 : index
    %c0_13 = arith.constant 0 : index
    %c0_14 = arith.constant 0 : index
    %12 = vector.load %arg5[%c0_12, %c0_13, %c0_14] : memref<4x16x64xf32, #tpu.memory_space<vmem>>, vector<1x16x64xf32>
    %13 = vector.shape_cast %12 : vector<1x16x64xf32> to vector<16x64xf32>
    %c1_15 = arith.constant 1 : index
    %c0_16 = arith.constant 0 : index
    %c0_17 = arith.constant 0 : index
    %14 = vector.load %arg5[%c1_15, %c0_16, %c0_17] : memref<4x16x64xf32, #tpu.memory_space<vmem>>, vector<1x16x64xf32>
    %15 = vector.shape_cast %14 : vector<1x16x64xf32> to vector<16x64xf32>
    %c2_18 = arith.constant 2 : index
    %c0_19 = arith.constant 0 : index
    %c0_20 = arith.constant 0 : index
    %16 = vector.load %arg5[%c2_18, %c0_19, %c0_20] : memref<4x16x64xf32, #tpu.memory_space<vmem>>, vector<1x16x64xf32>
    %17 = vector.shape_cast %16 : vector<1x16x64xf32> to vector<16x64xf32>
    %c3_21 = arith.constant 3 : index
    %c0_22 = arith.constant 0 : index
    %c0_23 = arith.constant 0 : index
    %18 = vector.load %arg5[%c3_21, %c0_22, %c0_23] : memref<4x16x64xf32, #tpu.memory_space<vmem>>, vector<1x16x64xf32>
    %19 = vector.shape_cast %18 : vector<1x16x64xf32> to vector<16x64xf32>
    %c0_24 = arith.constant 0 : index
    %c0_25 = arith.constant 0 : index
    %20 = memref.load %arg3[%c0_24, %c0_25] : memref<32x4xf32, #tpu.memory_space<smem>>
    %21 = vector.broadcast %20 : f32 to vector<16x16xf32>
    %22 = arith.mulf %21, %2 : vector<16x16xf32>
    %c0_26 = arith.constant 0 : index
    %c1_27 = arith.constant 1 : index
    %23 = memref.load %arg3[%c0_26, %c1_27] : memref<32x4xf32, #tpu.memory_space<smem>>
    %24 = vector.broadcast %23 : f32 to vector<16x16xf32>
    %25 = arith.mulf %24, %5 : vector<16x16xf32>
    %26 = arith.addf %22, %25 : vector<16x16xf32>
    %c0_28 = arith.constant 0 : index
    %c2_29 = arith.constant 2 : index
    %27 = memref.load %arg3[%c0_28, %c2_29] : memref<32x4xf32, #tpu.memory_space<smem>>
    %28 = vector.broadcast %27 : f32 to vector<16x16xf32>
    %29 = arith.mulf %28, %8 : vector<16x16xf32>
    %30 = arith.addf %26, %29 : vector<16x16xf32>
    %c0_30 = arith.constant 0 : index
    %c3_31 = arith.constant 3 : index
    %31 = memref.load %arg3[%c0_30, %c3_31] : memref<32x4xf32, #tpu.memory_space<smem>>
    %32 = vector.broadcast %31 : f32 to vector<16x16xf32>
    %33 = arith.mulf %32, %11 : vector<16x16xf32>
    %34 = arith.addf %30, %33 : vector<16x16xf32>
    %cst = arith.constant dense<0.000000e+00> : vector<16x64xf32>
    %35 = tpu.matmul %34, %13, %cst {dimension_numbers = #tpu.dot_dimension_numbers<[1], [0], [0], [1], [0, 0, 1, 1], [], []>} : vector<16x16xf32>, vector<16x64xf32>, vector<16x64xf32> -> vector<16x64xf32>
    %c8 = arith.constant 8 : index
    %c0_32 = arith.constant 0 : index
    %36 = memref.load %arg3[%c8, %c0_32] : memref<32x4xf32, #tpu.memory_space<smem>>
    %37 = vector.broadcast %36 : f32 to vector<16x16xf32>
    %38 = arith.mulf %37, %2 : vector<16x16xf32>
    %c8_33 = arith.constant 8 : index
    %c1_34 = arith.constant 1 : index
    %39 = memref.load %arg3[%c8_33, %c1_34] : memref<32x4xf32, #tpu.memory_space<smem>>
    %40 = vector.broadcast %39 : f32 to vector<16x16xf32>
    %41 = arith.mulf %40, %5 : vector<16x16xf32>
    %42 = arith.addf %38, %41 : vector<16x16xf32>
    %c8_35 = arith.constant 8 : index
    %c2_36 = arith.constant 2 : index
    %43 = memref.load %arg3[%c8_35, %c2_36] : memref<32x4xf32, #tpu.memory_space<smem>>
    %44 = vector.broadcast %43 : f32 to vector<16x16xf32>
    %45 = arith.mulf %44, %8 : vector<16x16xf32>
    %46 = arith.addf %42, %45 : vector<16x16xf32>
    %c8_37 = arith.constant 8 : index
    %c3_38 = arith.constant 3 : index
    %47 = memref.load %arg3[%c8_37, %c3_38] : memref<32x4xf32, #tpu.memory_space<smem>>
    %48 = vector.broadcast %47 : f32 to vector<16x16xf32>
    %49 = arith.mulf %48, %11 : vector<16x16xf32>
    %50 = arith.addf %46, %49 : vector<16x16xf32>
    %cst_39 = arith.constant dense<0.000000e+00> : vector<16x64xf32>
    %51 = tpu.matmul %50, %15, %cst_39 {dimension_numbers = #tpu.dot_dimension_numbers<[1], [0], [0], [1], [0, 0, 1, 1], [], []>} : vector<16x16xf32>, vector<16x64xf32>, vector<16x64xf32> -> vector<16x64xf32>
    %52 = arith.addf %35, %51 : vector<16x64xf32>
    %c16 = arith.constant 16 : index
    %c0_40 = arith.constant 0 : index
    %53 = memref.load %arg3[%c16, %c0_40] : memref<32x4xf32, #tpu.memory_space<smem>>
    %54 = vector.broadcast %53 : f32 to vector<16x16xf32>
    %55 = arith.mulf %54, %2 : vector<16x16xf32>
    %c16_41 = arith.constant 16 : index
    %c1_42 = arith.constant 1 : index
    %56 = memref.load %arg3[%c16_41, %c1_42] : memref<32x4xf32, #tpu.memory_space<smem>>
    %57 = vector.broadcast %56 : f32 to vector<16x16xf32>
    %58 = arith.mulf %57, %5 : vector<16x16xf32>
    %59 = arith.addf %55, %58 : vector<16x16xf32>
    %c16_43 = arith.constant 16 : index
    %c2_44 = arith.constant 2 : index
    %60 = memref.load %arg3[%c16_43, %c2_44] : memref<32x4xf32, #tpu.memory_space<smem>>
    %61 = vector.broadcast %60 : f32 to vector<16x16xf32>
    %62 = arith.mulf %61, %8 : vector<16x16xf32>
    %63 = arith.addf %59, %62 : vector<16x16xf32>
    %c16_45 = arith.constant 16 : index
    %c3_46 = arith.constant 3 : index
    %64 = memref.load %arg3[%c16_45, %c3_46] : memref<32x4xf32, #tpu.memory_space<smem>>
    %65 = vector.broadcast %64 : f32 to vector<16x16xf32>
    %66 = arith.mulf %65, %11 : vector<16x16xf32>
    %67 = arith.addf %63, %66 : vector<16x16xf32>
    %cst_47 = arith.constant dense<0.000000e+00> : vector<16x64xf32>
    %68 = tpu.matmul %67, %17, %cst_47 {dimension_numbers = #tpu.dot_dimension_numbers<[1], [0], [0], [1], [0, 0, 1, 1], [], []>} : vector<16x16xf32>, vector<16x64xf32>, vector<16x64xf32> -> vector<16x64xf32>
    %69 = arith.addf %52, %68 : vector<16x64xf32>
    %c24 = arith.constant 24 : index
    %c0_48 = arith.constant 0 : index
    %70 = memref.load %arg3[%c24, %c0_48] : memref<32x4xf32, #tpu.memory_space<smem>>
    %71 = vector.broadcast %70 : f32 to vector<16x16xf32>
    %72 = arith.mulf %71, %2 : vector<16x16xf32>
    %c24_49 = arith.constant 24 : index
    %c1_50 = arith.constant 1 : index
    %73 = memref.load %arg3[%c24_49, %c1_50] : memref<32x4xf32, #tpu.memory_space<smem>>
    %74 = vector.broadcast %73 : f32 to vector<16x16xf32>
    %75 = arith.mulf %74, %5 : vector<16x16xf32>
    %76 = arith.addf %72, %75 : vector<16x16xf32>
    %c24_51 = arith.constant 24 : index
    %c2_52 = arith.constant 2 : index
    %77 = memref.load %arg3[%c24_51, %c2_52] : memref<32x4xf32, #tpu.memory_space<smem>>
    %78 = vector.broadcast %77 : f32 to vector<16x16xf32>
    %79 = arith.mulf %78, %8 : vector<16x16xf32>
    %80 = arith.addf %76, %79 : vector<16x16xf32>
    %c24_53 = arith.constant 24 : index
    %c3_54 = arith.constant 3 : index
    %81 = memref.load %arg3[%c24_53, %c3_54] : memref<32x4xf32, #tpu.memory_space<smem>>
    %82 = vector.broadcast %81 : f32 to vector<16x16xf32>
    %83 = arith.mulf %82, %11 : vector<16x16xf32>
    %84 = arith.addf %80, %83 : vector<16x16xf32>
    %cst_55 = arith.constant dense<0.000000e+00> : vector<16x64xf32>
    %85 = tpu.matmul %84, %19, %cst_55 {dimension_numbers = #tpu.dot_dimension_numbers<[1], [0], [0], [1], [0, 0, 1, 1], [], []>} : vector<16x16xf32>, vector<16x64xf32>, vector<16x64xf32> -> vector<16x64xf32>
    %86 = arith.addf %69, %85 : vector<16x64xf32>
    %c0_56 = arith.constant 0 : index
    %87 = memref.load %arg4[%c0_56] : memref<8xf32, #tpu.memory_space<smem>>
    %88 = vector.broadcast %87 : f32 to vector<16x64xf32>
    %89 = arith.addf %86, %88 : vector<16x64xf32>
    %cst_57 = arith.constant 0.000000e+00 : f32
    %90 = vector.broadcast %cst_57 : f32 to vector<16x64xf32>
    %91 = arith.cmpf ogt, %89, %90 : vector<16x64xf32>
    %cst_58 = arith.constant 0.00999999977 : f32
    %92 = vector.broadcast %cst_58 : f32 to vector<16x64xf32>
    %93 = arith.mulf %92, %89 : vector<16x64xf32>
    %94 = arith.select %91, %89, %93 : vector<16x64xi1>, vector<16x64xf32>
    %c0_59 = arith.constant 0 : index
    %c0_60 = arith.constant 0 : index
    %c0_61 = arith.constant 0 : index
    %c0_62 = arith.constant 0 : index
    %95 = vector.load %arg6[%c0_59, %c0_60, %c0_61, %c0_62] : memref<1x8x16x64xf32, #tpu.memory_space<vmem>>, vector<1x1x16x64xf32>
    %96 = vector.shape_cast %95 : vector<1x1x16x64xf32> to vector<16x64xf32>
    %97 = vector.shape_cast %94 : vector<16x64xf32> to vector<1x1x16x64xf32>
    tpu.vector_store %arg6[%c0_59, %c0_60, %c0_61, %c0_62], %97 {strides = array<i32>} : memref<1x8x16x64xf32, #tpu.memory_space<vmem>>, vector<1x1x16x64xf32>,
    %c1_63 = arith.constant 1 : index
    %c0_64 = arith.constant 0 : index
    %98 = memref.load %arg3[%c1_63, %c0_64] : memref<32x4xf32, #tpu.memory_space<smem>>
    %99 = vector.broadcast %98 : f32 to vector<16x16xf32>
    %100 = arith.mulf %99, %2 : vector<16x16xf32>
    %c1_65 = arith.constant 1 : index
    %c1_66 = arith.constant 1 : index
    %101 = memref.load %arg3[%c1_65, %c1_66] : memref<32x4xf32, #tpu.memory_space<smem>>
    %102 = vector.broadcast %101 : f32 to vector<16x16xf32>
    %103 = arith.mulf %102, %5 : vector<16x16xf32>
    %104 = arith.addf %100, %103 : vector<16x16xf32>
    %c1_67 = arith.constant 1 : index
    %c2_68 = arith.constant 2 : index
    %105 = memref.load %arg3[%c1_67, %c2_68] : memref<32x4xf32, #tpu.memory_space<smem>>
    %106 = vector.broadcast %105 : f32 to vector<16x16xf32>
    %107 = arith.mulf %106, %8 : vector<16x16xf32>
    %108 = arith.addf %104, %107 : vector<16x16xf32>
    %c1_69 = arith.constant 1 : index
    %c3_70 = arith.constant 3 : index
    %109 = memref.load %arg3[%c1_69, %c3_70] : memref<32x4xf32, #tpu.memory_space<smem>>
    %110 = vector.broadcast %109 : f32 to vector<16x16xf32>
    %111 = arith.mulf %110, %11 : vector<16x16xf32>
    %112 = arith.addf %108, %111 : vector<16x16xf32>
    %cst_71 = arith.constant dense<0.000000e+00> : vector<16x64xf32>
    %113 = tpu.matmul %112, %13, %cst_71 {dimension_numbers = #tpu.dot_dimension_numbers<[1], [0], [0], [1], [0, 0, 1, 1], [], []>} : vector<16x16xf32>, vector<16x64xf32>, vector<16x64xf32> -> vector<16x64xf32>
    %c9 = arith.constant 9 : index
    %c0_72 = arith.constant 0 : index
    %114 = memref.load %arg3[%c9, %c0_72] : memref<32x4xf32, #tpu.memory_space<smem>>
    %115 = vector.broadcast %114 : f32 to vector<16x16xf32>
    %116 = arith.mulf %115, %2 : vector<16x16xf32>
    %c9_73 = arith.constant 9 : index
    %c1_74 = arith.constant 1 : index
    %117 = memref.load %arg3[%c9_73, %c1_74] : memref<32x4xf32, #tpu.memory_space<smem>>
    %118 = vector.broadcast %117 : f32 to vector<16x16xf32>
    %119 = arith.mulf %118, %5 : vector<16x16xf32>
    %120 = arith.addf %116, %119 : vector<16x16xf32>
    %c9_75 = arith.constant 9 : index
    %c2_76 = arith.constant 2 : index
    %121 = memref.load %arg3[%c9_75, %c2_76] : memref<32x4xf32, #tpu.memory_space<smem>>
    %122 = vector.broadcast %121 : f32 to vector<16x16xf32>
    %123 = arith.mulf %122, %8 : vector<16x16xf32>
    %124 = arith.addf %120, %123 : vector<16x16xf32>
    %c9_77 = arith.constant 9 : index
    %c3_78 = arith.constant 3 : index
    %125 = memref.load %arg3[%c9_77, %c3_78] : memref<32x4xf32, #tpu.memory_space<smem>>
    %126 = vector.broadcast %125 : f32 to vector<16x16xf32>
    %127 = arith.mulf %126, %11 : vector<16x16xf32>
    %128 = arith.addf %124, %127 : vector<16x16xf32>
    %cst_79 = arith.constant dense<0.000000e+00> : vector<16x64xf32>
    %129 = tpu.matmul %128, %15, %cst_79 {dimension_numbers = #tpu.dot_dimension_numbers<[1], [0], [0], [1], [0, 0, 1, 1], [], []>} : vector<16x16xf32>, vector<16x64xf32>, vector<16x64xf32> -> vector<16x64xf32>
    %130 = arith.addf %113, %129 : vector<16x64xf32>
    %c17 = arith.constant 17 : index
    %c0_80 = arith.constant 0 : index
    %131 = memref.load %arg3[%c17, %c0_80] : memref<32x4xf32, #tpu.memory_space<smem>>
    %132 = vector.broadcast %131 : f32 to vector<16x16xf32>
    %133 = arith.mulf %132, %2 : vector<16x16xf32>
    %c17_81 = arith.constant 17 : index
    %c1_82 = arith.constant 1 : index
    %134 = memref.load %arg3[%c17_81, %c1_82] : memref<32x4xf32, #tpu.memory_space<smem>>
    %135 = vector.broadcast %134 : f32 to vector<16x16xf32>
    %136 = arith.mulf %135, %5 : vector<16x16xf32>
    %137 = arith.addf %133, %136 : vector<16x16xf32>
    %c17_83 = arith.constant 17 : index
    %c2_84 = arith.constant 2 : index
    %138 = memref.load %arg3[%c17_83, %c2_84] : memref<32x4xf32, #tpu.memory_space<smem>>
    %139 = vector.broadcast %138 : f32 to vector<16x16xf32>
    %140 = arith.mulf %139, %8 : vector<16x16xf32>
    %141 = arith.addf %137, %140 : vector<16x16xf32>
    %c17_85 = arith.constant 17 : index
    %c3_86 = arith.constant 3 : index
    %142 = memref.load %arg3[%c17_85, %c3_86] : memref<32x4xf32, #tpu.memory_space<smem>>
    %143 = vector.broadcast %142 : f32 to vector<16x16xf32>
    %144 = arith.mulf %143, %11 : vector<16x16xf32>
    %145 = arith.addf %141, %144 : vector<16x16xf32>
    %cst_87 = arith.constant dense<0.000000e+00> : vector<16x64xf32>
    %146 = tpu.matmul %145, %17, %cst_87 {dimension_numbers = #tpu.dot_dimension_numbers<[1], [0], [0], [1], [0, 0, 1, 1], [], []>} : vector<16x16xf32>, vector<16x64xf32>, vector<16x64xf32> -> vector<16x64xf32>
    %147 = arith.addf %130, %146 : vector<16x64xf32>
    %c25 = arith.constant 25 : index
    %c0_88 = arith.constant 0 : index
    %148 = memref.load %arg3[%c25, %c0_88] : memref<32x4xf32, #tpu.memory_space<smem>>
    %149 = vector.broadcast %148 : f32 to vector<16x16xf32>
    %150 = arith.mulf %149, %2 : vector<16x16xf32>
    %c25_89 = arith.constant 25 : index
    %c1_90 = arith.constant 1 : index
    %151 = memref.load %arg3[%c25_89, %c1_90] : memref<32x4xf32, #tpu.memory_space<smem>>
    %152 = vector.broadcast %151 : f32 to vector<16x16xf32>
    %153 = arith.mulf %152, %5 : vector<16x16xf32>
    %154 = arith.addf %150, %153 : vector<16x16xf32>
    %c25_91 = arith.constant 25 : index
    %c2_92 = arith.constant 2 : index
    %155 = memref.load %arg3[%c25_91, %c2_92] : memref<32x4xf32, #tpu.memory_space<smem>>
    %156 = vector.broadcast %155 : f32 to vector<16x16xf32>
    %157 = arith.mulf %156, %8 : vector<16x16xf32>
    %158 = arith.addf %154, %157 : vector<16x16xf32>
    %c25_93 = arith.constant 25 : index
    %c3_94 = arith.constant 3 : index
    %159 = memref.load %arg3[%c25_93, %c3_94] : memref<32x4xf32, #tpu.memory_space<smem>>
    %160 = vector.broadcast %159 : f32 to vector<16x16xf32>
    %161 = arith.mulf %160, %11 : vector<16x16xf32>
    %162 = arith.addf %158, %161 : vector<16x16xf32>
    %cst_95 = arith.constant dense<0.000000e+00> : vector<16x64xf32>
    %163 = tpu.matmul %162, %19, %cst_95 {dimension_numbers = #tpu.dot_dimension_numbers<[1], [0], [0], [1], [0, 0, 1, 1], [], []>} : vector<16x16xf32>, vector<16x64xf32>, vector<16x64xf32> -> vector<16x64xf32>
    %164 = arith.addf %147, %163 : vector<16x64xf32>
    %c1_96 = arith.constant 1 : index
    %165 = memref.load %arg4[%c1_96] : memref<8xf32, #tpu.memory_space<smem>>
    %166 = vector.broadcast %165 : f32 to vector<16x64xf32>
    %167 = arith.addf %164, %166 : vector<16x64xf32>
    %cst_97 = arith.constant 0.000000e+00 : f32
    %168 = vector.broadcast %cst_97 : f32 to vector<16x64xf32>
    %169 = arith.cmpf ogt, %167, %168 : vector<16x64xf32>
    %cst_98 = arith.constant 0.00999999977 : f32
    %170 = vector.broadcast %cst_98 : f32 to vector<16x64xf32>
    %171 = arith.mulf %170, %167 : vector<16x64xf32>
    %172 = arith.select %169, %167, %171 : vector<16x64xi1>, vector<16x64xf32>
    %c0_99 = arith.constant 0 : index
    %c1_100 = arith.constant 1 : index
    %c0_101 = arith.constant 0 : index
    %c0_102 = arith.constant 0 : index
    %173 = vector.load %arg6[%c0_99, %c1_100, %c0_101, %c0_102] : memref<1x8x16x64xf32, #tpu.memory_space<vmem>>, vector<1x1x16x64xf32>
    %174 = vector.shape_cast %173 : vector<1x1x16x64xf32> to vector<16x64xf32>
    %175 = vector.shape_cast %172 : vector<16x64xf32> to vector<1x1x16x64xf32>
    tpu.vector_store %arg6[%c0_99, %c1_100, %c0_101, %c0_102], %175 {strides = array<i32>} : memref<1x8x16x64xf32, #tpu.memory_space<vmem>>, vector<1x1x16x64xf32>,
    %c2_103 = arith.constant 2 : index
    %c0_104 = arith.constant 0 : index
    %176 = memref.load %arg3[%c2_103, %c0_104] : memref<32x4xf32, #tpu.memory_space<smem>>
    %177 = vector.broadcast %176 : f32 to vector<16x16xf32>
    %178 = arith.mulf %177, %2 : vector<16x16xf32>
    %c2_105 = arith.constant 2 : index
    %c1_106 = arith.constant 1 : index
    %179 = memref.load %arg3[%c2_105, %c1_106] : memref<32x4xf32, #tpu.memory_space<smem>>
    %180 = vector.broadcast %179 : f32 to vector<16x16xf32>
    %181 = arith.mulf %180, %5 : vector<16x16xf32>
    %182 = arith.addf %178, %181 : vector<16x16xf32>
    %c2_107 = arith.constant 2 : index
    %c2_108 = arith.constant 2 : index
    %183 = memref.load %arg3[%c2_107, %c2_108] : memref<32x4xf32, #tpu.memory_space<smem>>
    %184 = vector.broadcast %183 : f32 to vector<16x16xf32>
    %185 = arith.mulf %184, %8 : vector<16x16xf32>
    %186 = arith.addf %182, %185 : vector<16x16xf32>
    %c2_109 = arith.constant 2 : index
    %c3_110 = arith.constant 3 : index
    %187 = memref.load %arg3[%c2_109, %c3_110] : memref<32x4xf32, #tpu.memory_space<smem>>
    %188 = vector.broadcast %187 : f32 to vector<16x16xf32>
    %189 = arith.mulf %188, %11 : vector<16x16xf32>
    %190 = arith.addf %186, %189 : vector<16x16xf32>
    %cst_111 = arith.constant dense<0.000000e+00> : vector<16x64xf32>
    %191 = tpu.matmul %190, %13, %cst_111 {dimension_numbers = #tpu.dot_dimension_numbers<[1], [0], [0], [1], [0, 0, 1, 1], [], []>} : vector<16x16xf32>, vector<16x64xf32>, vector<16x64xf32> -> vector<16x64xf32>
    %c10 = arith.constant 10 : index
    %c0_112 = arith.constant 0 : index
    %192 = memref.load %arg3[%c10, %c0_112] : memref<32x4xf32, #tpu.memory_space<smem>>
    %193 = vector.broadcast %192 : f32 to vector<16x16xf32>
    %194 = arith.mulf %193, %2 : vector<16x16xf32>
    %c10_113 = arith.constant 10 : index
    %c1_114 = arith.constant 1 : index
    %195 = memref.load %arg3[%c10_113, %c1_114] : memref<32x4xf32, #tpu.memory_space<smem>>
    %196 = vector.broadcast %195 : f32 to vector<16x16xf32>
    %197 = arith.mulf %196, %5 : vector<16x16xf32>
    %198 = arith.addf %194, %197 : vector<16x16xf32>
    %c10_115 = arith.constant 10 : index
    %c2_116 = arith.constant 2 : index
    %199 = memref.load %arg3[%c10_115, %c2_116] : memref<32x4xf32, #tpu.memory_space<smem>>
    %200 = vector.broadcast %199 : f32 to vector<16x16xf32>
    %201 = arith.mulf %200, %8 : vector<16x16xf32>
    %202 = arith.addf %198, %201 : vector<16x16xf32>
    %c10_117 = arith.constant 10 : index
    %c3_118 = arith.constant 3 : index
    %203 = memref.load %arg3[%c10_117, %c3_118] : memref<32x4xf32, #tpu.memory_space<smem>>
    %204 = vector.broadcast %203 : f32 to vector<16x16xf32>
    %205 = arith.mulf %204, %11 : vector<16x16xf32>
    %206 = arith.addf %202, %205 : vector<16x16xf32>
    %cst_119 = arith.constant dense<0.000000e+00> : vector<16x64xf32>
    %207 = tpu.matmul %206, %15, %cst_119 {dimension_numbers = #tpu.dot_dimension_numbers<[1], [0], [0], [1], [0, 0, 1, 1], [], []>} : vector<16x16xf32>, vector<16x64xf32>, vector<16x64xf32> -> vector<16x64xf32>
    %208 = arith.addf %191, %207 : vector<16x64xf32>
    %c18 = arith.constant 18 : index
    %c0_120 = arith.constant 0 : index
    %209 = memref.load %arg3[%c18, %c0_120] : memref<32x4xf32, #tpu.memory_space<smem>>
    %210 = vector.broadcast %209 : f32 to vector<16x16xf32>
    %211 = arith.mulf %210, %2 : vector<16x16xf32>
    %c18_121 = arith.constant 18 : index
    %c1_122 = arith.constant 1 : index
    %212 = memref.load %arg3[%c18_121, %c1_122] : memref<32x4xf32, #tpu.memory_space<smem>>
    %213 = vector.broadcast %212 : f32 to vector<16x16xf32>
    %214 = arith.mulf %213, %5 : vector<16x16xf32>
    %215 = arith.addf %211, %214 : vector<16x16xf32>
    %c18_123 = arith.constant 18 : index
    %c2_124 = arith.constant 2 : index
    %216 = memref.load %arg3[%c18_123, %c2_124] : memref<32x4xf32, #tpu.memory_space<smem>>
    %217 = vector.broadcast %216 : f32 to vector<16x16xf32>
    %218 = arith.mulf %217, %8 : vector<16x16xf32>
    %219 = arith.addf %215, %218 : vector<16x16xf32>
    %c18_125 = arith.constant 18 : index
    %c3_126 = arith.constant 3 : index
    %220 = memref.load %arg3[%c18_125, %c3_126] : memref<32x4xf32, #tpu.memory_space<smem>>
    %221 = vector.broadcast %220 : f32 to vector<16x16xf32>
    %222 = arith.mulf %221, %11 : vector<16x16xf32>
    %223 = arith.addf %219, %222 : vector<16x16xf32>
    %cst_127 = arith.constant dense<0.000000e+00> : vector<16x64xf32>
    %224 = tpu.matmul %223, %17, %cst_127 {dimension_numbers = #tpu.dot_dimension_numbers<[1], [0], [0], [1], [0, 0, 1, 1], [], []>} : vector<16x16xf32>, vector<16x64xf32>, vector<16x64xf32> -> vector<16x64xf32>
    %225 = arith.addf %208, %224 : vector<16x64xf32>
    %c26 = arith.constant 26 : index
    %c0_128 = arith.constant 0 : index
    %226 = memref.load %arg3[%c26, %c0_128] : memref<32x4xf32, #tpu.memory_space<smem>>
    %227 = vector.broadcast %226 : f32 to vector<16x16xf32>
    %228 = arith.mulf %227, %2 : vector<16x16xf32>
    %c26_129 = arith.constant 26 : index
    %c1_130 = arith.constant 1 : index
    %229 = memref.load %arg3[%c26_129, %c1_130] : memref<32x4xf32, #tpu.memory_space<smem>>
    %230 = vector.broadcast %229 : f32 to vector<16x16xf32>
    %231 = arith.mulf %230, %5 : vector<16x16xf32>
    %232 = arith.addf %228, %231 : vector<16x16xf32>
    %c26_131 = arith.constant 26 : index
    %c2_132 = arith.constant 2 : index
    %233 = memref.load %arg3[%c26_131, %c2_132] : memref<32x4xf32, #tpu.memory_space<smem>>
    %234 = vector.broadcast %233 : f32 to vector<16x16xf32>
    %235 = arith.mulf %234, %8 : vector<16x16xf32>
    %236 = arith.addf %232, %235 : vector<16x16xf32>
    %c26_133 = arith.constant 26 : index
    %c3_134 = arith.constant 3 : index
    %237 = memref.load %arg3[%c26_133, %c3_134] : memref<32x4xf32, #tpu.memory_space<smem>>
    %238 = vector.broadcast %237 : f32 to vector<16x16xf32>
    %239 = arith.mulf %238, %11 : vector<16x16xf32>
    %240 = arith.addf %236, %239 : vector<16x16xf32>
    %cst_135 = arith.constant dense<0.000000e+00> : vector<16x64xf32>
    %241 = tpu.matmul %240, %19, %cst_135 {dimension_numbers = #tpu.dot_dimension_numbers<[1], [0], [0], [1], [0, 0, 1, 1], [], []>} : vector<16x16xf32>, vector<16x64xf32>, vector<16x64xf32> -> vector<16x64xf32>
    %242 = arith.addf %225, %241 : vector<16x64xf32>
    %c2_136 = arith.constant 2 : index
    %243 = memref.load %arg4[%c2_136] : memref<8xf32, #tpu.memory_space<smem>>
    %244 = vector.broadcast %243 : f32 to vector<16x64xf32>
    %245 = arith.addf %242, %244 : vector<16x64xf32>
    %cst_137 = arith.constant 0.000000e+00 : f32
    %246 = vector.broadcast %cst_137 : f32 to vector<16x64xf32>
    %247 = arith.cmpf ogt, %245, %246 : vector<16x64xf32>
    %cst_138 = arith.constant 0.00999999977 : f32
    %248 = vector.broadcast %cst_138 : f32 to vector<16x64xf32>
    %249 = arith.mulf %248, %245 : vector<16x64xf32>
    %250 = arith.select %247, %245, %249 : vector<16x64xi1>, vector<16x64xf32>
    %c0_139 = arith.constant 0 : index
    %c2_140 = arith.constant 2 : index
    %c0_141 = arith.constant 0 : index
    %c0_142 = arith.constant 0 : index
    %251 = vector.load %arg6[%c0_139, %c2_140, %c0_141, %c0_142] : memref<1x8x16x64xf32, #tpu.memory_space<vmem>>, vector<1x1x16x64xf32>
    %252 = vector.shape_cast %251 : vector<1x1x16x64xf32> to vector<16x64xf32>
    %253 = vector.shape_cast %250 : vector<16x64xf32> to vector<1x1x16x64xf32>
    tpu.vector_store %arg6[%c0_139, %c2_140, %c0_141, %c0_142], %253 {strides = array<i32>} : memref<1x8x16x64xf32, #tpu.memory_space<vmem>>, vector<1x1x16x64xf32>,
    %c3_143 = arith.constant 3 : index
    %c0_144 = arith.constant 0 : index
    %254 = memref.load %arg3[%c3_143, %c0_144] : memref<32x4xf32, #tpu.memory_space<smem>>
    %255 = vector.broadcast %254 : f32 to vector<16x16xf32>
    %256 = arith.mulf %255, %2 : vector<16x16xf32>
    %c3_145 = arith.constant 3 : index
    %c1_146 = arith.constant 1 : index
    %257 = memref.load %arg3[%c3_145, %c1_146] : memref<32x4xf32, #tpu.memory_space<smem>>
    %258 = vector.broadcast %257 : f32 to vector<16x16xf32>
    %259 = arith.mulf %258, %5 : vector<16x16xf32>
    %260 = arith.addf %256, %259 : vector<16x16xf32>
    %c3_147 = arith.constant 3 : index
    %c2_148 = arith.constant 2 : index
    %261 = memref.load %arg3[%c3_147, %c2_148] : memref<32x4xf32, #tpu.memory_space<smem>>
    %262 = vector.broadcast %261 : f32 to vector<16x16xf32>
    %263 = arith.mulf %262, %8 : vector<16x16xf32>
    %264 = arith.addf %260, %263 : vector<16x16xf32>
    %c3_149 = arith.constant 3 : index
    %c3_150 = arith.constant 3 : index
    %265 = memref.load %arg3[%c3_149, %c3_150] : memref<32x4xf32, #tpu.memory_space<smem>>
    %266 = vector.broadcast %265 : f32 to vector<16x16xf32>
    %267 = arith.mulf %266, %11 : vector<16x16xf32>
    %268 = arith.addf %264, %267 : vector<16x16xf32>
    %cst_151 = arith.constant dense<0.000000e+00> : vector<16x64xf32>
    %269 = tpu.matmul %268, %13, %cst_151 {dimension_numbers = #tpu.dot_dimension_numbers<[1], [0], [0], [1], [0, 0, 1, 1], [], []>} : vector<16x16xf32>, vector<16x64xf32>, vector<16x64xf32> -> vector<16x64xf32>
    %c11 = arith.constant 11 : index
    %c0_152 = arith.constant 0 : index
    %270 = memref.load %arg3[%c11, %c0_152] : memref<32x4xf32, #tpu.memory_space<smem>>
    %271 = vector.broadcast %270 : f32 to vector<16x16xf32>
    %272 = arith.mulf %271, %2 : vector<16x16xf32>
    %c11_153 = arith.constant 11 : index
    %c1_154 = arith.constant 1 : index
    %273 = memref.load %arg3[%c11_153, %c1_154] : memref<32x4xf32, #tpu.memory_space<smem>>
    %274 = vector.broadcast %273 : f32 to vector<16x16xf32>
    %275 = arith.mulf %274, %5 : vector<16x16xf32>
    %276 = arith.addf %272, %275 : vector<16x16xf32>
    %c11_155 = arith.constant 11 : index
    %c2_156 = arith.constant 2 : index
    %277 = memref.load %arg3[%c11_155, %c2_156] : memref<32x4xf32, #tpu.memory_space<smem>>
    %278 = vector.broadcast %277 : f32 to vector<16x16xf32>
    %279 = arith.mulf %278, %8 : vector<16x16xf32>
    %280 = arith.addf %276, %279 : vector<16x16xf32>
    %c11_157 = arith.constant 11 : index
    %c3_158 = arith.constant 3 : index
    %281 = memref.load %arg3[%c11_157, %c3_158] : memref<32x4xf32, #tpu.memory_space<smem>>
    %282 = vector.broadcast %281 : f32 to vector<16x16xf32>
    %283 = arith.mulf %282, %11 : vector<16x16xf32>
    %284 = arith.addf %280, %283 : vector<16x16xf32>
    %cst_159 = arith.constant dense<0.000000e+00> : vector<16x64xf32>
    %285 = tpu.matmul %284, %15, %cst_159 {dimension_numbers = #tpu.dot_dimension_numbers<[1], [0], [0], [1], [0, 0, 1, 1], [], []>} : vector<16x16xf32>, vector<16x64xf32>, vector<16x64xf32> -> vector<16x64xf32>
    %286 = arith.addf %269, %285 : vector<16x64xf32>
    %c19 = arith.constant 19 : index
    %c0_160 = arith.constant 0 : index
    %287 = memref.load %arg3[%c19, %c0_160] : memref<32x4xf32, #tpu.memory_space<smem>>
    %288 = vector.broadcast %287 : f32 to vector<16x16xf32>
    %289 = arith.mulf %288, %2 : vector<16x16xf32>
    %c19_161 = arith.constant 19 : index
    %c1_162 = arith.constant 1 : index
    %290 = memref.load %arg3[%c19_161, %c1_162] : memref<32x4xf32, #tpu.memory_space<smem>>
    %291 = vector.broadcast %290 : f32 to vector<16x16xf32>
    %292 = arith.mulf %291, %5 : vector<16x16xf32>
    %293 = arith.addf %289, %292 : vector<16x16xf32>
    %c19_163 = arith.constant 19 : index
    %c2_164 = arith.constant 2 : index
    %294 = memref.load %arg3[%c19_163, %c2_164] : memref<32x4xf32, #tpu.memory_space<smem>>
    %295 = vector.broadcast %294 : f32 to vector<16x16xf32>
    %296 = arith.mulf %295, %8 : vector<16x16xf32>
    %297 = arith.addf %293, %296 : vector<16x16xf32>
    %c19_165 = arith.constant 19 : index
    %c3_166 = arith.constant 3 : index
    %298 = memref.load %arg3[%c19_165, %c3_166] : memref<32x4xf32, #tpu.memory_space<smem>>
    %299 = vector.broadcast %298 : f32 to vector<16x16xf32>
    %300 = arith.mulf %299, %11 : vector<16x16xf32>
    %301 = arith.addf %297, %300 : vector<16x16xf32>
    %cst_167 = arith.constant dense<0.000000e+00> : vector<16x64xf32>
    %302 = tpu.matmul %301, %17, %cst_167 {dimension_numbers = #tpu.dot_dimension_numbers<[1], [0], [0], [1], [0, 0, 1, 1], [], []>} : vector<16x16xf32>, vector<16x64xf32>, vector<16x64xf32> -> vector<16x64xf32>
    %303 = arith.addf %286, %302 : vector<16x64xf32>
    %c27 = arith.constant 27 : index
    %c0_168 = arith.constant 0 : index
    %304 = memref.load %arg3[%c27, %c0_168] : memref<32x4xf32, #tpu.memory_space<smem>>
    %305 = vector.broadcast %304 : f32 to vector<16x16xf32>
    %306 = arith.mulf %305, %2 : vector<16x16xf32>
    %c27_169 = arith.constant 27 : index
    %c1_170 = arith.constant 1 : index
    %307 = memref.load %arg3[%c27_169, %c1_170] : memref<32x4xf32, #tpu.memory_space<smem>>
    %308 = vector.broadcast %307 : f32 to vector<16x16xf32>
    %309 = arith.mulf %308, %5 : vector<16x16xf32>
    %310 = arith.addf %306, %309 : vector<16x16xf32>
    %c27_171 = arith.constant 27 : index
    %c2_172 = arith.constant 2 : index
    %311 = memref.load %arg3[%c27_171, %c2_172] : memref<32x4xf32, #tpu.memory_space<smem>>
    %312 = vector.broadcast %311 : f32 to vector<16x16xf32>
    %313 = arith.mulf %312, %8 : vector<16x16xf32>
    %314 = arith.addf %310, %313 : vector<16x16xf32>
    %c27_173 = arith.constant 27 : index
    %c3_174 = arith.constant 3 : index
    %315 = memref.load %arg3[%c27_173, %c3_174] : memref<32x4xf32, #tpu.memory_space<smem>>
    %316 = vector.broadcast %315 : f32 to vector<16x16xf32>
    %317 = arith.mulf %316, %11 : vector<16x16xf32>
    %318 = arith.addf %314, %317 : vector<16x16xf32>
    %cst_175 = arith.constant dense<0.000000e+00> : vector<16x64xf32>
    %319 = tpu.matmul %318, %19, %cst_175 {dimension_numbers = #tpu.dot_dimension_numbers<[1], [0], [0], [1], [0, 0, 1, 1], [], []>} : vector<16x16xf32>, vector<16x64xf32>, vector<16x64xf32> -> vector<16x64xf32>
    %320 = arith.addf %303, %319 : vector<16x64xf32>
    %c3_176 = arith.constant 3 : index
    %321 = memref.load %arg4[%c3_176] : memref<8xf32, #tpu.memory_space<smem>>
    %322 = vector.broadcast %321 : f32 to vector<16x64xf32>
    %323 = arith.addf %320, %322 : vector<16x64xf32>
    %cst_177 = arith.constant 0.000000e+00 : f32
    %324 = vector.broadcast %cst_177 : f32 to vector<16x64xf32>
    %325 = arith.cmpf ogt, %323, %324 : vector<16x64xf32>
    %cst_178 = arith.constant 0.00999999977 : f32
    %326 = vector.broadcast %cst_178 : f32 to vector<16x64xf32>
    %327 = arith.mulf %326, %323 : vector<16x64xf32>
    %328 = arith.select %325, %323, %327 : vector<16x64xi1>, vector<16x64xf32>
    %c0_179 = arith.constant 0 : index
    %c3_180 = arith.constant 3 : index
    %c0_181 = arith.constant 0 : index
    %c0_182 = arith.constant 0 : index
    %329 = vector.load %arg6[%c0_179, %c3_180, %c0_181, %c0_182] : memref<1x8x16x64xf32, #tpu.memory_space<vmem>>, vector<1x1x16x64xf32>
    %330 = vector.shape_cast %329 : vector<1x1x16x64xf32> to vector<16x64xf32>
    %331 = vector.shape_cast %328 : vector<16x64xf32> to vector<1x1x16x64xf32>
    tpu.vector_store %arg6[%c0_179, %c3_180, %c0_181, %c0_182], %331 {strides = array<i32>} : memref<1x8x16x64xf32, #tpu.memory_space<vmem>>, vector<1x1x16x64xf32>,
    %c4 = arith.constant 4 : index
    %c0_183 = arith.constant 0 : index
    %332 = memref.load %arg3[%c4, %c0_183] : memref<32x4xf32, #tpu.memory_space<smem>>
    %333 = vector.broadcast %332 : f32 to vector<16x16xf32>
    %334 = arith.mulf %333, %2 : vector<16x16xf32>
    %c4_184 = arith.constant 4 : index
    %c1_185 = arith.constant 1 : index
    %335 = memref.load %arg3[%c4_184, %c1_185] : memref<32x4xf32, #tpu.memory_space<smem>>
    %336 = vector.broadcast %335 : f32 to vector<16x16xf32>
    %337 = arith.mulf %336, %5 : vector<16x16xf32>
    %338 = arith.addf %334, %337 : vector<16x16xf32>
    %c4_186 = arith.constant 4 : index
    %c2_187 = arith.constant 2 : index
    %339 = memref.load %arg3[%c4_186, %c2_187] : memref<32x4xf32, #tpu.memory_space<smem>>
    %340 = vector.broadcast %339 : f32 to vector<16x16xf32>
    %341 = arith.mulf %340, %8 : vector<16x16xf32>
    %342 = arith.addf %338, %341 : vector<16x16xf32>
    %c4_188 = arith.constant 4 : index
    %c3_189 = arith.constant 3 : index
    %343 = memref.load %arg3[%c4_188, %c3_189] : memref<32x4xf32, #tpu.memory_space<smem>>
    %344 = vector.broadcast %343 : f32 to vector<16x16xf32>
    %345 = arith.mulf %344, %11 : vector<16x16xf32>
    %346 = arith.addf %342, %345 : vector<16x16xf32>
    %cst_190 = arith.constant dense<0.000000e+00> : vector<16x64xf32>
    %347 = tpu.matmul %346, %13, %cst_190 {dimension_numbers = #tpu.dot_dimension_numbers<[1], [0], [0], [1], [0, 0, 1, 1], [], []>} : vector<16x16xf32>, vector<16x64xf32>, vector<16x64xf32> -> vector<16x64xf32>
    %c12 = arith.constant 12 : index
    %c0_191 = arith.constant 0 : index
    %348 = memref.load %arg3[%c12, %c0_191] : memref<32x4xf32, #tpu.memory_space<smem>>
    %349 = vector.broadcast %348 : f32 to vector<16x16xf32>
    %350 = arith.mulf %349, %2 : vector<16x16xf32>
    %c12_192 = arith.constant 12 : index
    %c1_193 = arith.constant 1 : index
    %351 = memref.load %arg3[%c12_192, %c1_193] : memref<32x4xf32, #tpu.memory_space<smem>>
    %352 = vector.broadcast %351 : f32 to vector<16x16xf32>
    %353 = arith.mulf %352, %5 : vector<16x16xf32>
    %354 = arith.addf %350, %353 : vector<16x16xf32>
    %c12_194 = arith.constant 12 : index
    %c2_195 = arith.constant 2 : index
    %355 = memref.load %arg3[%c12_194, %c2_195] : memref<32x4xf32, #tpu.memory_space<smem>>
    %356 = vector.broadcast %355 : f32 to vector<16x16xf32>
    %357 = arith.mulf %356, %8 : vector<16x16xf32>
    %358 = arith.addf %354, %357 : vector<16x16xf32>
    %c12_196 = arith.constant 12 : index
    %c3_197 = arith.constant 3 : index
    %359 = memref.load %arg3[%c12_196, %c3_197] : memref<32x4xf32, #tpu.memory_space<smem>>
    %360 = vector.broadcast %359 : f32 to vector<16x16xf32>
    %361 = arith.mulf %360, %11 : vector<16x16xf32>
    %362 = arith.addf %358, %361 : vector<16x16xf32>
    %cst_198 = arith.constant dense<0.000000e+00> : vector<16x64xf32>
    %363 = tpu.matmul %362, %15, %cst_198 {dimension_numbers = #tpu.dot_dimension_numbers<[1], [0], [0], [1], [0, 0, 1, 1], [], []>} : vector<16x16xf32>, vector<16x64xf32>, vector<16x64xf32> -> vector<16x64xf32>
    %364 = arith.addf %347, %363 : vector<16x64xf32>
    %c20 = arith.constant 20 : index
    %c0_199 = arith.constant 0 : index
    %365 = memref.load %arg3[%c20, %c0_199] : memref<32x4xf32, #tpu.memory_space<smem>>
    %366 = vector.broadcast %365 : f32 to vector<16x16xf32>
    %367 = arith.mulf %366, %2 : vector<16x16xf32>
    %c20_200 = arith.constant 20 : index
    %c1_201 = arith.constant 1 : index
    %368 = memref.load %arg3[%c20_200, %c1_201] : memref<32x4xf32, #tpu.memory_space<smem>>
    %369 = vector.broadcast %368 : f32 to vector<16x16xf32>
    %370 = arith.mulf %369, %5 : vector<16x16xf32>
    %371 = arith.addf %367, %370 : vector<16x16xf32>
    %c20_202 = arith.constant 20 : index
    %c2_203 = arith.constant 2 : index
    %372 = memref.load %arg3[%c20_202, %c2_203] : memref<32x4xf32, #tpu.memory_space<smem>>
    %373 = vector.broadcast %372 : f32 to vector<16x16xf32>
    %374 = arith.mulf %373, %8 : vector<16x16xf32>
    %375 = arith.addf %371, %374 : vector<16x16xf32>
    %c20_204 = arith.constant 20 : index
    %c3_205 = arith.constant 3 : index
    %376 = memref.load %arg3[%c20_204, %c3_205] : memref<32x4xf32, #tpu.memory_space<smem>>
    %377 = vector.broadcast %376 : f32 to vector<16x16xf32>
    %378 = arith.mulf %377, %11 : vector<16x16xf32>
    %379 = arith.addf %375, %378 : vector<16x16xf32>
    %cst_206 = arith.constant dense<0.000000e+00> : vector<16x64xf32>
    %380 = tpu.matmul %379, %17, %cst_206 {dimension_numbers = #tpu.dot_dimension_numbers<[1], [0], [0], [1], [0, 0, 1, 1], [], []>} : vector<16x16xf32>, vector<16x64xf32>, vector<16x64xf32> -> vector<16x64xf32>
    %381 = arith.addf %364, %380 : vector<16x64xf32>
    %c28 = arith.constant 28 : index
    %c0_207 = arith.constant 0 : index
    %382 = memref.load %arg3[%c28, %c0_207] : memref<32x4xf32, #tpu.memory_space<smem>>
    %383 = vector.broadcast %382 : f32 to vector<16x16xf32>
    %384 = arith.mulf %383, %2 : vector<16x16xf32>
    %c28_208 = arith.constant 28 : index
    %c1_209 = arith.constant 1 : index
    %385 = memref.load %arg3[%c28_208, %c1_209] : memref<32x4xf32, #tpu.memory_space<smem>>
    %386 = vector.broadcast %385 : f32 to vector<16x16xf32>
    %387 = arith.mulf %386, %5 : vector<16x16xf32>
    %388 = arith.addf %384, %387 : vector<16x16xf32>
    %c28_210 = arith.constant 28 : index
    %c2_211 = arith.constant 2 : index
    %389 = memref.load %arg3[%c28_210, %c2_211] : memref<32x4xf32, #tpu.memory_space<smem>>
    %390 = vector.broadcast %389 : f32 to vector<16x16xf32>
    %391 = arith.mulf %390, %8 : vector<16x16xf32>
    %392 = arith.addf %388, %391 : vector<16x16xf32>
    %c28_212 = arith.constant 28 : index
    %c3_213 = arith.constant 3 : index
    %393 = memref.load %arg3[%c28_212, %c3_213] : memref<32x4xf32, #tpu.memory_space<smem>>
    %394 = vector.broadcast %393 : f32 to vector<16x16xf32>
    %395 = arith.mulf %394, %11 : vector<16x16xf32>
    %396 = arith.addf %392, %395 : vector<16x16xf32>
    %cst_214 = arith.constant dense<0.000000e+00> : vector<16x64xf32>
    %397 = tpu.matmul %396, %19, %cst_214 {dimension_numbers = #tpu.dot_dimension_numbers<[1], [0], [0], [1], [0, 0, 1, 1], [], []>} : vector<16x16xf32>, vector<16x64xf32>, vector<16x64xf32> -> vector<16x64xf32>
    %398 = arith.addf %381, %397 : vector<16x64xf32>
    %c4_215 = arith.constant 4 : index
    %399 = memref.load %arg4[%c4_215] : memref<8xf32, #tpu.memory_space<smem>>
    %400 = vector.broadcast %399 : f32 to vector<16x64xf32>
    %401 = arith.addf %398, %400 : vector<16x64xf32>
    %cst_216 = arith.constant 0.000000e+00 : f32
    %402 = vector.broadcast %cst_216 : f32 to vector<16x64xf32>
    %403 = arith.cmpf ogt, %401, %402 : vector<16x64xf32>
    %cst_217 = arith.constant 0.00999999977 : f32
    %404 = vector.broadcast %cst_217 : f32 to vector<16x64xf32>
    %405 = arith.mulf %404, %401 : vector<16x64xf32>
    %406 = arith.select %403, %401, %405 : vector<16x64xi1>, vector<16x64xf32>
    %c0_218 = arith.constant 0 : index
    %c4_219 = arith.constant 4 : index
    %c0_220 = arith.constant 0 : index
    %c0_221 = arith.constant 0 : index
    %407 = vector.load %arg6[%c0_218, %c4_219, %c0_220, %c0_221] : memref<1x8x16x64xf32, #tpu.memory_space<vmem>>, vector<1x1x16x64xf32>
    %408 = vector.shape_cast %407 : vector<1x1x16x64xf32> to vector<16x64xf32>
    %409 = vector.shape_cast %406 : vector<16x64xf32> to vector<1x1x16x64xf32>
    tpu.vector_store %arg6[%c0_218, %c4_219, %c0_220, %c0_221], %409 {strides = array<i32>} : memref<1x8x16x64xf32, #tpu.memory_space<vmem>>, vector<1x1x16x64xf32>,
    %c5 = arith.constant 5 : index
    %c0_222 = arith.constant 0 : index
    %410 = memref.load %arg3[%c5, %c0_222] : memref<32x4xf32, #tpu.memory_space<smem>>
    %411 = vector.broadcast %410 : f32 to vector<16x16xf32>
    %412 = arith.mulf %411, %2 : vector<16x16xf32>
    %c5_223 = arith.constant 5 : index
    %c1_224 = arith.constant 1 : index
    %413 = memref.load %arg3[%c5_223, %c1_224] : memref<32x4xf32, #tpu.memory_space<smem>>
    %414 = vector.broadcast %413 : f32 to vector<16x16xf32>
    %415 = arith.mulf %414, %5 : vector<16x16xf32>
    %416 = arith.addf %412, %415 : vector<16x16xf32>
    %c5_225 = arith.constant 5 : index
    %c2_226 = arith.constant 2 : index
    %417 = memref.load %arg3[%c5_225, %c2_226] : memref<32x4xf32, #tpu.memory_space<smem>>
    %418 = vector.broadcast %417 : f32 to vector<16x16xf32>
    %419 = arith.mulf %418, %8 : vector<16x16xf32>
    %420 = arith.addf %416, %419 : vector<16x16xf32>
    %c5_227 = arith.constant 5 : index
    %c3_228 = arith.constant 3 : index
    %421 = memref.load %arg3[%c5_227, %c3_228] : memref<32x4xf32, #tpu.memory_space<smem>>
    %422 = vector.broadcast %421 : f32 to vector<16x16xf32>
    %423 = arith.mulf %422, %11 : vector<16x16xf32>
    %424 = arith.addf %420, %423 : vector<16x16xf32>
    %cst_229 = arith.constant dense<0.000000e+00> : vector<16x64xf32>
    %425 = tpu.matmul %424, %13, %cst_229 {dimension_numbers = #tpu.dot_dimension_numbers<[1], [0], [0], [1], [0, 0, 1, 1], [], []>} : vector<16x16xf32>, vector<16x64xf32>, vector<16x64xf32> -> vector<16x64xf32>
    %c13 = arith.constant 13 : index
    %c0_230 = arith.constant 0 : index
    %426 = memref.load %arg3[%c13, %c0_230] : memref<32x4xf32, #tpu.memory_space<smem>>
    %427 = vector.broadcast %426 : f32 to vector<16x16xf32>
    %428 = arith.mulf %427, %2 : vector<16x16xf32>
    %c13_231 = arith.constant 13 : index
    %c1_232 = arith.constant 1 : index
    %429 = memref.load %arg3[%c13_231, %c1_232] : memref<32x4xf32, #tpu.memory_space<smem>>
    %430 = vector.broadcast %429 : f32 to vector<16x16xf32>
    %431 = arith.mulf %430, %5 : vector<16x16xf32>
    %432 = arith.addf %428, %431 : vector<16x16xf32>
    %c13_233 = arith.constant 13 : index
    %c2_234 = arith.constant 2 : index
    %433 = memref.load %arg3[%c13_233, %c2_234] : memref<32x4xf32, #tpu.memory_space<smem>>
    %434 = vector.broadcast %433 : f32 to vector<16x16xf32>
    %435 = arith.mulf %434, %8 : vector<16x16xf32>
    %436 = arith.addf %432, %435 : vector<16x16xf32>
    %c13_235 = arith.constant 13 : index
    %c3_236 = arith.constant 3 : index
    %437 = memref.load %arg3[%c13_235, %c3_236] : memref<32x4xf32, #tpu.memory_space<smem>>
    %438 = vector.broadcast %437 : f32 to vector<16x16xf32>
    %439 = arith.mulf %438, %11 : vector<16x16xf32>
    %440 = arith.addf %436, %439 : vector<16x16xf32>
    %cst_237 = arith.constant dense<0.000000e+00> : vector<16x64xf32>
    %441 = tpu.matmul %440, %15, %cst_237 {dimension_numbers = #tpu.dot_dimension_numbers<[1], [0], [0], [1], [0, 0, 1, 1], [], []>} : vector<16x16xf32>, vector<16x64xf32>, vector<16x64xf32> -> vector<16x64xf32>
    %442 = arith.addf %425, %441 : vector<16x64xf32>
    %c21 = arith.constant 21 : index
    %c0_238 = arith.constant 0 : index
    %443 = memref.load %arg3[%c21, %c0_238] : memref<32x4xf32, #tpu.memory_space<smem>>
    %444 = vector.broadcast %443 : f32 to vector<16x16xf32>
    %445 = arith.mulf %444, %2 : vector<16x16xf32>
    %c21_239 = arith.constant 21 : index
    %c1_240 = arith.constant 1 : index
    %446 = memref.load %arg3[%c21_239, %c1_240] : memref<32x4xf32, #tpu.memory_space<smem>>
    %447 = vector.broadcast %446 : f32 to vector<16x16xf32>
    %448 = arith.mulf %447, %5 : vector<16x16xf32>
    %449 = arith.addf %445, %448 : vector<16x16xf32>
    %c21_241 = arith.constant 21 : index
    %c2_242 = arith.constant 2 : index
    %450 = memref.load %arg3[%c21_241, %c2_242] : memref<32x4xf32, #tpu.memory_space<smem>>
    %451 = vector.broadcast %450 : f32 to vector<16x16xf32>
    %452 = arith.mulf %451, %8 : vector<16x16xf32>
    %453 = arith.addf %449, %452 : vector<16x16xf32>
    %c21_243 = arith.constant 21 : index
    %c3_244 = arith.constant 3 : index
    %454 = memref.load %arg3[%c21_243, %c3_244] : memref<32x4xf32, #tpu.memory_space<smem>>
    %455 = vector.broadcast %454 : f32 to vector<16x16xf32>
    %456 = arith.mulf %455, %11 : vector<16x16xf32>
    %457 = arith.addf %453, %456 : vector<16x16xf32>
    %cst_245 = arith.constant dense<0.000000e+00> : vector<16x64xf32>
    %458 = tpu.matmul %457, %17, %cst_245 {dimension_numbers = #tpu.dot_dimension_numbers<[1], [0], [0], [1], [0, 0, 1, 1], [], []>} : vector<16x16xf32>, vector<16x64xf32>, vector<16x64xf32> -> vector<16x64xf32>
    %459 = arith.addf %442, %458 : vector<16x64xf32>
    %c29 = arith.constant 29 : index
    %c0_246 = arith.constant 0 : index
    %460 = memref.load %arg3[%c29, %c0_246] : memref<32x4xf32, #tpu.memory_space<smem>>
    %461 = vector.broadcast %460 : f32 to vector<16x16xf32>
    %462 = arith.mulf %461, %2 : vector<16x16xf32>
    %c29_247 = arith.constant 29 : index
    %c1_248 = arith.constant 1 : index
    %463 = memref.load %arg3[%c29_247, %c1_248] : memref<32x4xf32, #tpu.memory_space<smem>>
    %464 = vector.broadcast %463 : f32 to vector<16x16xf32>
    %465 = arith.mulf %464, %5 : vector<16x16xf32>
    %466 = arith.addf %462, %465 : vector<16x16xf32>
    %c29_249 = arith.constant 29 : index
    %c2_250 = arith.constant 2 : index
    %467 = memref.load %arg3[%c29_249, %c2_250] : memref<32x4xf32, #tpu.memory_space<smem>>
    %468 = vector.broadcast %467 : f32 to vector<16x16xf32>
    %469 = arith.mulf %468, %8 : vector<16x16xf32>
    %470 = arith.addf %466, %469 : vector<16x16xf32>
    %c29_251 = arith.constant 29 : index
    %c3_252 = arith.constant 3 : index
    %471 = memref.load %arg3[%c29_251, %c3_252] : memref<32x4xf32, #tpu.memory_space<smem>>
    %472 = vector.broadcast %471 : f32 to vector<16x16xf32>
    %473 = arith.mulf %472, %11 : vector<16x16xf32>
    %474 = arith.addf %470, %473 : vector<16x16xf32>
    %cst_253 = arith.constant dense<0.000000e+00> : vector<16x64xf32>
    %475 = tpu.matmul %474, %19, %cst_253 {dimension_numbers = #tpu.dot_dimension_numbers<[1], [0], [0], [1], [0, 0, 1, 1], [], []>} : vector<16x16xf32>, vector<16x64xf32>, vector<16x64xf32> -> vector<16x64xf32>
    %476 = arith.addf %459, %475 : vector<16x64xf32>
    %c5_254 = arith.constant 5 : index
    %477 = memref.load %arg4[%c5_254] : memref<8xf32, #tpu.memory_space<smem>>
    %478 = vector.broadcast %477 : f32 to vector<16x64xf32>
    %479 = arith.addf %476, %478 : vector<16x64xf32>
    %cst_255 = arith.constant 0.000000e+00 : f32
    %480 = vector.broadcast %cst_255 : f32 to vector<16x64xf32>
    %481 = arith.cmpf ogt, %479, %480 : vector<16x64xf32>
    %cst_256 = arith.constant 0.00999999977 : f32
    %482 = vector.broadcast %cst_256 : f32 to vector<16x64xf32>
    %483 = arith.mulf %482, %479 : vector<16x64xf32>
    %484 = arith.select %481, %479, %483 : vector<16x64xi1>, vector<16x64xf32>
    %c0_257 = arith.constant 0 : index
    %c5_258 = arith.constant 5 : index
    %c0_259 = arith.constant 0 : index
    %c0_260 = arith.constant 0 : index
    %485 = vector.load %arg6[%c0_257, %c5_258, %c0_259, %c0_260] : memref<1x8x16x64xf32, #tpu.memory_space<vmem>>, vector<1x1x16x64xf32>
    %486 = vector.shape_cast %485 : vector<1x1x16x64xf32> to vector<16x64xf32>
    %487 = vector.shape_cast %484 : vector<16x64xf32> to vector<1x1x16x64xf32>
    tpu.vector_store %arg6[%c0_257, %c5_258, %c0_259, %c0_260], %487 {strides = array<i32>} : memref<1x8x16x64xf32, #tpu.memory_space<vmem>>, vector<1x1x16x64xf32>,
    %c6 = arith.constant 6 : index
    %c0_261 = arith.constant 0 : index
    %488 = memref.load %arg3[%c6, %c0_261] : memref<32x4xf32, #tpu.memory_space<smem>>
    %489 = vector.broadcast %488 : f32 to vector<16x16xf32>
    %490 = arith.mulf %489, %2 : vector<16x16xf32>
    %c6_262 = arith.constant 6 : index
    %c1_263 = arith.constant 1 : index
    %491 = memref.load %arg3[%c6_262, %c1_263] : memref<32x4xf32, #tpu.memory_space<smem>>
    %492 = vector.broadcast %491 : f32 to vector<16x16xf32>
    %493 = arith.mulf %492, %5 : vector<16x16xf32>
    %494 = arith.addf %490, %493 : vector<16x16xf32>
    %c6_264 = arith.constant 6 : index
    %c2_265 = arith.constant 2 : index
    %495 = memref.load %arg3[%c6_264, %c2_265] : memref<32x4xf32, #tpu.memory_space<smem>>
    %496 = vector.broadcast %495 : f32 to vector<16x16xf32>
    %497 = arith.mulf %496, %8 : vector<16x16xf32>
    %498 = arith.addf %494, %497 : vector<16x16xf32>
    %c6_266 = arith.constant 6 : index
    %c3_267 = arith.constant 3 : index
    %499 = memref.load %arg3[%c6_266, %c3_267] : memref<32x4xf32, #tpu.memory_space<smem>>
    %500 = vector.broadcast %499 : f32 to vector<16x16xf32>
    %501 = arith.mulf %500, %11 : vector<16x16xf32>
    %502 = arith.addf %498, %501 : vector<16x16xf32>
    %cst_268 = arith.constant dense<0.000000e+00> : vector<16x64xf32>
    %503 = tpu.matmul %502, %13, %cst_268 {dimension_numbers = #tpu.dot_dimension_numbers<[1], [0], [0], [1], [0, 0, 1, 1], [], []>} : vector<16x16xf32>, vector<16x64xf32>, vector<16x64xf32> -> vector<16x64xf32>
    %c14 = arith.constant 14 : index
    %c0_269 = arith.constant 0 : index
    %504 = memref.load %arg3[%c14, %c0_269] : memref<32x4xf32, #tpu.memory_space<smem>>
    %505 = vector.broadcast %504 : f32 to vector<16x16xf32>
    %506 = arith.mulf %505, %2 : vector<16x16xf32>
    %c14_270 = arith.constant 14 : index
    %c1_271 = arith.constant 1 : index
    %507 = memref.load %arg3[%c14_270, %c1_271] : memref<32x4xf32, #tpu.memory_space<smem>>
    %508 = vector.broadcast %507 : f32 to vector<16x16xf32>
    %509 = arith.mulf %508, %5 : vector<16x16xf32>
    %510 = arith.addf %506, %509 : vector<16x16xf32>
    %c14_272 = arith.constant 14 : index
    %c2_273 = arith.constant 2 : index
    %511 = memref.load %arg3[%c14_272, %c2_273] : memref<32x4xf32, #tpu.memory_space<smem>>
    %512 = vector.broadcast %511 : f32 to vector<16x16xf32>
    %513 = arith.mulf %512, %8 : vector<16x16xf32>
    %514 = arith.addf %510, %513 : vector<16x16xf32>
    %c14_274 = arith.constant 14 : index
    %c3_275 = arith.constant 3 : index
    %515 = memref.load %arg3[%c14_274, %c3_275] : memref<32x4xf32, #tpu.memory_space<smem>>
    %516 = vector.broadcast %515 : f32 to vector<16x16xf32>
    %517 = arith.mulf %516, %11 : vector<16x16xf32>
    %518 = arith.addf %514, %517 : vector<16x16xf32>
    %cst_276 = arith.constant dense<0.000000e+00> : vector<16x64xf32>
    %519 = tpu.matmul %518, %15, %cst_276 {dimension_numbers = #tpu.dot_dimension_numbers<[1], [0], [0], [1], [0, 0, 1, 1], [], []>} : vector<16x16xf32>, vector<16x64xf32>, vector<16x64xf32> -> vector<16x64xf32>
    %520 = arith.addf %503, %519 : vector<16x64xf32>
    %c22 = arith.constant 22 : index
    %c0_277 = arith.constant 0 : index
    %521 = memref.load %arg3[%c22, %c0_277] : memref<32x4xf32, #tpu.memory_space<smem>>
    %522 = vector.broadcast %521 : f32 to vector<16x16xf32>
    %523 = arith.mulf %522, %2 : vector<16x16xf32>
    %c22_278 = arith.constant 22 : index
    %c1_279 = arith.constant 1 : index
    %524 = memref.load %arg3[%c22_278, %c1_279] : memref<32x4xf32, #tpu.memory_space<smem>>
    %525 = vector.broadcast %524 : f32 to vector<16x16xf32>
    %526 = arith.mulf %525, %5 : vector<16x16xf32>
    %527 = arith.addf %523, %526 : vector<16x16xf32>
    %c22_280 = arith.constant 22 : index
    %c2_281 = arith.constant 2 : index
    %528 = memref.load %arg3[%c22_280, %c2_281] : memref<32x4xf32, #tpu.memory_space<smem>>
    %529 = vector.broadcast %528 : f32 to vector<16x16xf32>
    %530 = arith.mulf %529, %8 : vector<16x16xf32>
    %531 = arith.addf %527, %530 : vector<16x16xf32>
    %c22_282 = arith.constant 22 : index
    %c3_283 = arith.constant 3 : index
    %532 = memref.load %arg3[%c22_282, %c3_283] : memref<32x4xf32, #tpu.memory_space<smem>>
    %533 = vector.broadcast %532 : f32 to vector<16x16xf32>
    %534 = arith.mulf %533, %11 : vector<16x16xf32>
    %535 = arith.addf %531, %534 : vector<16x16xf32>
    %cst_284 = arith.constant dense<0.000000e+00> : vector<16x64xf32>
    %536 = tpu.matmul %535, %17, %cst_284 {dimension_numbers = #tpu.dot_dimension_numbers<[1], [0], [0], [1], [0, 0, 1, 1], [], []>} : vector<16x16xf32>, vector<16x64xf32>, vector<16x64xf32> -> vector<16x64xf32>
    %537 = arith.addf %520, %536 : vector<16x64xf32>
    %c30 = arith.constant 30 : index
    %c0_285 = arith.constant 0 : index
    %538 = memref.load %arg3[%c30, %c0_285] : memref<32x4xf32, #tpu.memory_space<smem>>
    %539 = vector.broadcast %538 : f32 to vector<16x16xf32>
    %540 = arith.mulf %539, %2 : vector<16x16xf32>
    %c30_286 = arith.constant 30 : index
    %c1_287 = arith.constant 1 : index
    %541 = memref.load %arg3[%c30_286, %c1_287] : memref<32x4xf32, #tpu.memory_space<smem>>
    %542 = vector.broadcast %541 : f32 to vector<16x16xf32>
    %543 = arith.mulf %542, %5 : vector<16x16xf32>
    %544 = arith.addf %540, %543 : vector<16x16xf32>
    %c30_288 = arith.constant 30 : index
    %c2_289 = arith.constant 2 : index
    %545 = memref.load %arg3[%c30_288, %c2_289] : memref<32x4xf32, #tpu.memory_space<smem>>
    %546 = vector.broadcast %545 : f32 to vector<16x16xf32>
    %547 = arith.mulf %546, %8 : vector<16x16xf32>
    %548 = arith.addf %544, %547 : vector<16x16xf32>
    %c30_290 = arith.constant 30 : index
    %c3_291 = arith.constant 3 : index
    %549 = memref.load %arg3[%c30_290, %c3_291] : memref<32x4xf32, #tpu.memory_space<smem>>
    %550 = vector.broadcast %549 : f32 to vector<16x16xf32>
    %551 = arith.mulf %550, %11 : vector<16x16xf32>
    %552 = arith.addf %548, %551 : vector<16x16xf32>
    %cst_292 = arith.constant dense<0.000000e+00> : vector<16x64xf32>
    %553 = tpu.matmul %552, %19, %cst_292 {dimension_numbers = #tpu.dot_dimension_numbers<[1], [0], [0], [1], [0, 0, 1, 1], [], []>} : vector<16x16xf32>, vector<16x64xf32>, vector<16x64xf32> -> vector<16x64xf32>
    %554 = arith.addf %537, %553 : vector<16x64xf32>
    %c6_293 = arith.constant 6 : index
    %555 = memref.load %arg4[%c6_293] : memref<8xf32, #tpu.memory_space<smem>>
    %556 = vector.broadcast %555 : f32 to vector<16x64xf32>
    %557 = arith.addf %554, %556 : vector<16x64xf32>
    %cst_294 = arith.constant 0.000000e+00 : f32
    %558 = vector.broadcast %cst_294 : f32 to vector<16x64xf32>
    %559 = arith.cmpf ogt, %557, %558 : vector<16x64xf32>
    %cst_295 = arith.constant 0.00999999977 : f32
    %560 = vector.broadcast %cst_295 : f32 to vector<16x64xf32>
    %561 = arith.mulf %560, %557 : vector<16x64xf32>
    %562 = arith.select %559, %557, %561 : vector<16x64xi1>, vector<16x64xf32>
    %c0_296 = arith.constant 0 : index
    %c6_297 = arith.constant 6 : index
    %c0_298 = arith.constant 0 : index
    %c0_299 = arith.constant 0 : index
    %563 = vector.load %arg6[%c0_296, %c6_297, %c0_298, %c0_299] : memref<1x8x16x64xf32, #tpu.memory_space<vmem>>, vector<1x1x16x64xf32>
    %564 = vector.shape_cast %563 : vector<1x1x16x64xf32> to vector<16x64xf32>
    %565 = vector.shape_cast %562 : vector<16x64xf32> to vector<1x1x16x64xf32>
    tpu.vector_store %arg6[%c0_296, %c6_297, %c0_298, %c0_299], %565 {strides = array<i32>} : memref<1x8x16x64xf32, #tpu.memory_space<vmem>>, vector<1x1x16x64xf32>,
    %c7 = arith.constant 7 : index
    %c0_300 = arith.constant 0 : index
    %566 = memref.load %arg3[%c7, %c0_300] : memref<32x4xf32, #tpu.memory_space<smem>>
    %567 = vector.broadcast %566 : f32 to vector<16x16xf32>
    %568 = arith.mulf %567, %2 : vector<16x16xf32>
    %c7_301 = arith.constant 7 : index
    %c1_302 = arith.constant 1 : index
    %569 = memref.load %arg3[%c7_301, %c1_302] : memref<32x4xf32, #tpu.memory_space<smem>>
    %570 = vector.broadcast %569 : f32 to vector<16x16xf32>
    %571 = arith.mulf %570, %5 : vector<16x16xf32>
    %572 = arith.addf %568, %571 : vector<16x16xf32>
    %c7_303 = arith.constant 7 : index
    %c2_304 = arith.constant 2 : index
    %573 = memref.load %arg3[%c7_303, %c2_304] : memref<32x4xf32, #tpu.memory_space<smem>>
    %574 = vector.broadcast %573 : f32 to vector<16x16xf32>
    %575 = arith.mulf %574, %8 : vector<16x16xf32>
    %576 = arith.addf %572, %575 : vector<16x16xf32>
    %c7_305 = arith.constant 7 : index
    %c3_306 = arith.constant 3 : index
    %577 = memref.load %arg3[%c7_305, %c3_306] : memref<32x4xf32, #tpu.memory_space<smem>>
    %578 = vector.broadcast %577 : f32 to vector<16x16xf32>
    %579 = arith.mulf %578, %11 : vector<16x16xf32>
    %580 = arith.addf %576, %579 : vector<16x16xf32>
    %cst_307 = arith.constant dense<0.000000e+00> : vector<16x64xf32>
    %581 = tpu.matmul %580, %13, %cst_307 {dimension_numbers = #tpu.dot_dimension_numbers<[1], [0], [0], [1], [0, 0, 1, 1], [], []>} : vector<16x16xf32>, vector<16x64xf32>, vector<16x64xf32> -> vector<16x64xf32>
    %c15 = arith.constant 15 : index
    %c0_308 = arith.constant 0 : index
    %582 = memref.load %arg3[%c15, %c0_308] : memref<32x4xf32, #tpu.memory_space<smem>>
    %583 = vector.broadcast %582 : f32 to vector<16x16xf32>
    %584 = arith.mulf %583, %2 : vector<16x16xf32>
    %c15_309 = arith.constant 15 : index
    %c1_310 = arith.constant 1 : index
    %585 = memref.load %arg3[%c15_309, %c1_310] : memref<32x4xf32, #tpu.memory_space<smem>>
    %586 = vector.broadcast %585 : f32 to vector<16x16xf32>
    %587 = arith.mulf %586, %5 : vector<16x16xf32>
    %588 = arith.addf %584, %587 : vector<16x16xf32>
    %c15_311 = arith.constant 15 : index
    %c2_312 = arith.constant 2 : index
    %589 = memref.load %arg3[%c15_311, %c2_312] : memref<32x4xf32, #tpu.memory_space<smem>>
    %590 = vector.broadcast %589 : f32 to vector<16x16xf32>
    %591 = arith.mulf %590, %8 : vector<16x16xf32>
    %592 = arith.addf %588, %591 : vector<16x16xf32>
    %c15_313 = arith.constant 15 : index
    %c3_314 = arith.constant 3 : index
    %593 = memref.load %arg3[%c15_313, %c3_314] : memref<32x4xf32, #tpu.memory_space<smem>>
    %594 = vector.broadcast %593 : f32 to vector<16x16xf32>
    %595 = arith.mulf %594, %11 : vector<16x16xf32>
    %596 = arith.addf %592, %595 : vector<16x16xf32>
    %cst_315 = arith.constant dense<0.000000e+00> : vector<16x64xf32>
    %597 = tpu.matmul %596, %15, %cst_315 {dimension_numbers = #tpu.dot_dimension_numbers<[1], [0], [0], [1], [0, 0, 1, 1], [], []>} : vector<16x16xf32>, vector<16x64xf32>, vector<16x64xf32> -> vector<16x64xf32>
    %598 = arith.addf %581, %597 : vector<16x64xf32>
    %c23 = arith.constant 23 : index
    %c0_316 = arith.constant 0 : index
    %599 = memref.load %arg3[%c23, %c0_316] : memref<32x4xf32, #tpu.memory_space<smem>>
    %600 = vector.broadcast %599 : f32 to vector<16x16xf32>
    %601 = arith.mulf %600, %2 : vector<16x16xf32>
    %c23_317 = arith.constant 23 : index
    %c1_318 = arith.constant 1 : index
    %602 = memref.load %arg3[%c23_317, %c1_318] : memref<32x4xf32, #tpu.memory_space<smem>>
    %603 = vector.broadcast %602 : f32 to vector<16x16xf32>
    %604 = arith.mulf %603, %5 : vector<16x16xf32>
    %605 = arith.addf %601, %604 : vector<16x16xf32>
    %c23_319 = arith.constant 23 : index
    %c2_320 = arith.constant 2 : index
    %606 = memref.load %arg3[%c23_319, %c2_320] : memref<32x4xf32, #tpu.memory_space<smem>>
    %607 = vector.broadcast %606 : f32 to vector<16x16xf32>
    %608 = arith.mulf %607, %8 : vector<16x16xf32>
    %609 = arith.addf %605, %608 : vector<16x16xf32>
    %c23_321 = arith.constant 23 : index
    %c3_322 = arith.constant 3 : index
    %610 = memref.load %arg3[%c23_321, %c3_322] : memref<32x4xf32, #tpu.memory_space<smem>>
    %611 = vector.broadcast %610 : f32 to vector<16x16xf32>
    %612 = arith.mulf %611, %11 : vector<16x16xf32>
    %613 = arith.addf %609, %612 : vector<16x16xf32>
    %cst_323 = arith.constant dense<0.000000e+00> : vector<16x64xf32>
    %614 = tpu.matmul %613, %17, %cst_323 {dimension_numbers = #tpu.dot_dimension_numbers<[1], [0], [0], [1], [0, 0, 1, 1], [], []>} : vector<16x16xf32>, vector<16x64xf32>, vector<16x64xf32> -> vector<16x64xf32>
    %615 = arith.addf %598, %614 : vector<16x64xf32>
    %c31 = arith.constant 31 : index
    %c0_324 = arith.constant 0 : index
    %616 = memref.load %arg3[%c31, %c0_324] : memref<32x4xf32, #tpu.memory_space<smem>>
    %617 = vector.broadcast %616 : f32 to vector<16x16xf32>
    %618 = arith.mulf %617, %2 : vector<16x16xf32>
    %c31_325 = arith.constant 31 : index
    %c1_326 = arith.constant 1 : index
    %619 = memref.load %arg3[%c31_325, %c1_326] : memref<32x4xf32, #tpu.memory_space<smem>>
    %620 = vector.broadcast %619 : f32 to vector<16x16xf32>
    %621 = arith.mulf %620, %5 : vector<16x16xf32>
    %622 = arith.addf %618, %621 : vector<16x16xf32>
    %c31_327 = arith.constant 31 : index
    %c2_328 = arith.constant 2 : index
    %623 = memref.load %arg3[%c31_327, %c2_328] : memref<32x4xf32, #tpu.memory_space<smem>>
    %624 = vector.broadcast %623 : f32 to vector<16x16xf32>
    %625 = arith.mulf %624, %8 : vector<16x16xf32>
    %626 = arith.addf %622, %625 : vector<16x16xf32>
    %c31_329 = arith.constant 31 : index
    %c3_330 = arith.constant 3 : index
    %627 = memref.load %arg3[%c31_329, %c3_330] : memref<32x4xf32, #tpu.memory_space<smem>>
    %628 = vector.broadcast %627 : f32 to vector<16x16xf32>
    %629 = arith.mulf %628, %11 : vector<16x16xf32>
    %630 = arith.addf %626, %629 : vector<16x16xf32>
    %cst_331 = arith.constant dense<0.000000e+00> : vector<16x64xf32>
    %631 = tpu.matmul %630, %19, %cst_331 {dimension_numbers = #tpu.dot_dimension_numbers<[1], [0], [0], [1], [0, 0, 1, 1], [], []>} : vector<16x16xf32>, vector<16x64xf32>, vector<16x64xf32> -> vector<16x64xf32>
    %632 = arith.addf %615, %631 : vector<16x64xf32>
    %c7_332 = arith.constant 7 : index
    %633 = memref.load %arg4[%c7_332] : memref<8xf32, #tpu.memory_space<smem>>
    %634 = vector.broadcast %633 : f32 to vector<16x64xf32>
    %635 = arith.addf %632, %634 : vector<16x64xf32>
    %cst_333 = arith.constant 0.000000e+00 : f32
    %636 = vector.broadcast %cst_333 : f32 to vector<16x64xf32>
    %637 = arith.cmpf ogt, %635, %636 : vector<16x64xf32>
    %cst_334 = arith.constant 0.00999999977 : f32
    %638 = vector.broadcast %cst_334 : f32 to vector<16x64xf32>
    %639 = arith.mulf %638, %635 : vector<16x64xf32>
    %640 = arith.select %637, %635, %639 : vector<16x64xi1>, vector<16x64xf32>
    %c0_335 = arith.constant 0 : index
    %c7_336 = arith.constant 7 : index
    %c0_337 = arith.constant 0 : index
    %c0_338 = arith.constant 0 : index
    %641 = vector.load %arg6[%c0_335, %c7_336, %c0_337, %c0_338] : memref<1x8x16x64xf32, #tpu.memory_space<vmem>>, vector<1x1x16x64xf32>
    %642 = vector.shape_cast %641 : vector<1x1x16x64xf32> to vector<16x64xf32>
    %643 = vector.shape_cast %640 : vector<16x64xf32> to vector<1x1x16x64xf32>
    tpu.vector_store %arg6[%c0_335, %c7_336, %c0_337, %c0_338], %643 {strides = array<i32>} : memref<1x8x16x64xf32, #tpu.memory_space<vmem>>, vector<1x1x16x64xf32>,
    return
  }
  func.func @transform_0(%arg0: i32, %arg1: i32) -> (i32, i32, i32, i32) {
    %c0_i32 = arith.constant 0 : i32
    %c0_i32_0 = arith.constant 0 : i32
    %c0_i32_1 = arith.constant 0 : i32
    return %arg0, %c0_i32, %arg1, %c0_i32_0 : i32, i32, i32, i32
  }
  func.func @transform_1(%arg0: i32, %arg1: i32) -> (i32, i32) {
    %c0_i32 = arith.constant 0 : i32
    %c0_i32_0 = arith.constant 0 : i32
    %c0_i32_1 = arith.constant 0 : i32
    return %c0_i32, %c0_i32_0 : i32, i32
  }
  func.func @transform_2(%arg0: i32, %arg1: i32) -> i32 {
    %c0_i32 = arith.constant 0 : i32
    %c0_i32_0 = arith.constant 0 : i32
    return %c0_i32 : i32
  }
  func.func @transform_3(%arg0: i32, %arg1: i32) -> (i32, i32, i32) {
    %c0_i32 = arith.constant 0 : i32
    %c0_i32_0 = arith.constant 0 : i32
    %c0_i32_1 = arith.constant 0 : i32
    %c0_i32_2 = arith.constant 0 : i32
    return %c0_i32, %c0_i32_0, %c0_i32_1 : i32, i32, i32
  }
  func.func @transform_4(%arg0: i32, %arg1: i32) -> (i32, i32, i32, i32) {
    %c0_i32 = arith.constant 0 : i32
    %c0_i32_0 = arith.constant 0 : i32
    %c0_i32_1 = arith.constant 0 : i32
    return %arg0, %c0_i32, %arg1, %c0_i32_0 : i32, i32, i32, i32
  }
}

</mosaic_0001>

<llo_original>
// kernel: upconv_forward.1
$region0: #{upconv_forward.1}
  #allocation0 [shape = 'u32[]', space=smem, size = 0x4, offset = 0x4, fixed_abs, tag = 'smem constant byte address 0x4 - core index']
  #allocation1 [shape = 'u32[72,128]{1,0:T(1,128)}', space=vmem, size = 0x9000, scoped, tag = 'internal scratch']
  %s0 = inlined_call_operand.vmem [shape: bf16[2,4,16,16], index: 0, kind: input, shape index: {}]
  %s1 = inlined_call_operand.vmem [shape: f32[32,4], index: 1, kind: input, shape index: {}]
  %s2 = inlined_call_operand.vmem [shape: f32[8], index: 2, kind: input, shape index: {}]
  %s3 = inlined_call_operand.vmem [shape: f32[4,16,64], index: 3, kind: input, shape index: {}]
  %s4 = inlined_call_operand.vmem [shape: f32[2,8,16,64], index: 4, kind: output, shape index: {}]
  %s5 = sld [smem:[#allocation0]]
  $region57: #{upconv_forward.1} parent=0
    _
  %s7 = ssub.s32 1, %s5
  %s8 = scalar_select 0, %s7, %s5
  $region1: #{upconv_forward.1} parent=0
    #allocation2 [shape = 'u8[16384]{0}', space=smem, size = 0x4000, scoped, tag = 'input window, operand 1, single buffered']
    #allocation3 [shape = 's32[2]{0}', space=sflag, size = 0x8, scoped, tag = 'scoped memory for upconv_forward.1']
    #allocation4 [shape = 'u8[512]{0}', space=smem, size = 0x200, scoped, tag = 'input window, operand 2, single buffered']
    #allocation5 [shape = 's32[1]{0}', space=sflag, size = 0x4, scoped, tag = 'scoped memory for upconv_forward.1']
    %9 = vsyncpa [#allocation3], 0
    %10 = vsyncpa [#allocation5], 0
    loop: start=0, step=1, limit=4
    $region2: #{upconv_forward.1} parent=1 // loop_pre_header
      _
    $region3: #{upconv_forward.1} parent=1 // loop_header
      %s12 = sphi 0, %s16
      %p13 = scmp.ge.s32.totalorder %s12, 4
      %s19 = sphi 0, %s31
      %s20 = sphi 0, %s27
      %s21 = sphi 0, %s19
      %s22 = sphi 0, %s20
      %s23 = sphi 0, %s21
      %s24 = sphi 0, %s22
      %s36 = sphi 0, %s38
      %s39 = sphi 0, %s36
      %s40 = sphi 0, %s39
      %s56 = sphi 0, %s40
      %s60 = sphi 0, %s60
      %s62 = sphi 0, %s60
      %s63 = sphi 0, %s62
      %s77 = sphi 0, %s63
      %s81 = sphi 0, %s81
      %s83 = sphi 0, %s81
      %s84 = sphi 0, %s83
      %s98 = sphi 0, %s84
      %s102 = sphi 0, %s102
      %s104 = sphi 0, %s102
      %s105 = sphi 0, %s104
      %s119 = sphi 0, %s105
      %s127 = sphi 0, %s129
      %s130 = sphi 0, %s127
      %s131 = sphi 0, %s130
      %s147 = sphi 0, %s131
    $region4: #{upconv_forward.1} parent=1 // loop_header_branch
      %15 = sbr.rel (%p13) target = $region8
    $region5: #{upconv_forward.1} parent=1 // loop_body
      %s17 = ssub.s32 %s12, 1
      %s18 = ssub.s32 %s12, 2
      %s25 = sadd.s32 1, %s20
      %p26 = scmp.ge.s32.totalorder %s25, 1
      %s27 = scalar_select %p26, 0, %s25
      %s28 = sadd.s32 1, %s19
      %s29 = scalar_select %p26, %s28, %s19
      %p30 = scmp.ge.s32.totalorder %s29, 2
      %s31 = scalar_select %p30, 0, %s29
      %s32 = ssub.s32 %s19, %s31
      %s33 = ssub.s32 %s20, %s27
      %s34 = sor.u32 %s32, %s33
      %p35 = scmp.eq.s32.totalorder %s34, 0
      %s37 = sadd.s32 %s36, 1
      %s38 = scalar_select %p35, %s36, %s37
      %p41 = pneg %p35
      %p42 = scmp.eq.s32.totalorder %s12, 1
      %p43 = por %p41, %p42
      %p44 = scmp.ne.s32.totalorder %s36, %s39
      %p45 = scmp.eq.s32.totalorder %s12, 0
      %p46 = por %p44, %p45
      %p47 = scmp.ne.s32.totalorder %s36, %s39
      %p48 = scmp.eq.s32.totalorder %s17, 1
      %p49 = por %p47, %p48
      %p50 = scmp.ne.s32.totalorder %s39, %s40
      %p51 = scmp.eq.s32.totalorder %s17, 0
      %p52 = por %p50, %p51
      %p53 = scmp.ne.s32.totalorder %s39, %s40
      %p54 = scmp.eq.s32.totalorder %s18, 1
      %p55 = por %p53, %p54
      %p57 = scmp.ne.s32.totalorder %s40, %s56
      %p58 = scmp.eq.s32.totalorder %s18, 0
      %p59 = por %p57, %p58
      %s61 = sadd.s32 %s60, 1
      %p64 = scmp.eq.s32.totalorder %s12, 1
      %p65 = scmp.ne.s32.totalorder %s60, %s62
      %p66 = scmp.eq.s32.totalorder %s12, 0
      %p67 = por %p65, %p66
      %p68 = scmp.ne.s32.totalorder %s60, %s62
      %p69 = scmp.eq.s32.totalorder %s17, 1
      %p70 = por %p68, %p69
      %p71 = scmp.ne.s32.totalorder %s62, %s63
      %p72 = scmp.eq.s32.totalorder %s17, 0
      %p73 = por %p71, %p72
      %p74 = scmp.ne.s32.totalorder %s62, %s63
      %p75 = scmp.eq.s32.totalorder %s18, 1
      %p76 = por %p74, %p75
      %p78 = scmp.ne.s32.totalorder %s63, %s77
      %p79 = scmp.eq.s32.totalorder %s18, 0
      %p80 = por %p78, %p79
      %s82 = sadd.s32 %s81, 1
      %p85 = scmp.eq.s32.totalorder %s12, 1
      %p86 = scmp.ne.s32.totalorder %s81, %s83
      %p87 = scmp.eq.s32.totalorder %s12, 0
      %p88 = por %p86, %p87
      %p89 = scmp.ne.s32.totalorder %s81, %s83
      %p90 = scmp.eq.s32.totalorder %s17, 1
      %p91 = por %p89, %p90
      %p92 = scmp.ne.s32.totalorder %s83, %s84
      %p93 = scmp.eq.s32.totalorder %s17, 0
      %p94 = por %p92, %p93
      %p95 = scmp.ne.s32.totalorder %s83, %s84
      %p96 = scmp.eq.s32.totalorder %s18, 1
      %p97 = por %p95, %p96
      %p99 = scmp.ne.s32.totalorder %s84, %s98
      %p100 = scmp.eq.s32.totalorder %s18, 0
      %p101 = por %p99, %p100
      %s103 = sadd.s32 %s102, 1
      %p106 = scmp.eq.s32.totalorder %s12, 1
      %p107 = scmp.ne.s32.totalorder %s102, %s104
      %p108 = scmp.eq.s32.totalorder %s12, 0
      %p109 = por %p107, %p108
      %p110 = scmp.ne.s32.totalorder %s102, %s104
      %p111 = scmp.eq.s32.totalorder %s17, 1
      %p112 = por %p110, %p111
      %p113 = scmp.ne.s32.totalorder %s104, %s105
      %p114 = scmp.eq.s32.totalorder %s17, 0
      %p115 = por %p113, %p114
      %p116 = scmp.ne.s32.totalorder %s104, %s105
      %p117 = scmp.eq.s32.totalorder %s18, 1
      %p118 = por %p116, %p117
      %p120 = scmp.ne.s32.totalorder %s105, %s119
      %p121 = scmp.eq.s32.totalorder %s18, 0
      %p122 = por %p120, %p121
      %s123 = ssub.s32 %s19, %s31
      %s124 = ssub.s32 %s20, %s27
      %s125 = sor.u32 %s123, %s124
      %p126 = scmp.eq.s32.totalorder %s125, 0
      %s128 = sadd.s32 %s127, 1
      %s129 = scalar_select %p126, %s127, %s128
      %p132 = pneg %p126
      %p133 = scmp.eq.s32.totalorder %s12, 1
      %p134 = por %p132, %p133
      %p135 = scmp.ne.s32.totalorder %s127, %s130
      %p136 = scmp.eq.s32.totalorder %s12, 0
      %p137 = por %p135, %p136
      %p138 = scmp.ne.s32.totalorder %s127, %s130
      %p139 = scmp.eq.s32.totalorder %s17, 1
      %p140 = por %p138, %p139
      %p141 = scmp.ne.s32.totalorder %s130, %s131
      %p142 = scmp.eq.s32.totalorder %s17, 0
      %p143 = por %p141, %p142
      %p144 = scmp.ne.s32.totalorder %s130, %s131
      %p145 = scmp.eq.s32.totalorder %s18, 1
      %p146 = por %p144, %p145
      %p148 = scmp.ne.s32.totalorder %s131, %s147
      %p149 = scmp.eq.s32.totalorder %s18, 0
      %p150 = por %p148, %p149
      %p151 = scmp.le.s32.totalorder 1, %s12
      %p152 = scmp.lt.s32.totalorder %s12, 3
      %p153 = pnand %p151, %p152
      %p154 = pneg %p153
      // Predicated region
      $region9: #{upconv_forward.1} parent=5 // pred_check
        _
      $region10: #{upconv_forward.1} parent=5 // pred_check_branch
        %156 = sbr.rel (%p153) target = $region12
      $region11: #{upconv_forward.1} parent=5 // pred_region
        %s157 = ssub.s32 %s12, 1
        // Predicated region
        $region13: #{upconv_forward.1} parent=11 // pred_check
          %p158 = pneg %p73
        $region14: #{upconv_forward.1} parent=11 // pred_check_branch
          %160 = sbr.rel (%p158) target = $region16
        $region15: #{upconv_forward.1} parent=11 // pred_region
          %162 = vsyncadd [#allocation3], 0
          %s163 = sshll.u32 %s1, 4
          %s164 = int_to_ptr.vmem [resolvable:$true] %s163
          %169 = dma.vmem_to_smem %s164, 512, [#allocation2], [#allocation3], 128, 128, 8
        $region16: #{upconv_forward.1} parent=11 // pred_fallthru
          _
        // Predicated region
        $region17: #{upconv_forward.1} parent=11 // pred_check
          %p170 = pneg %p94
        $region18: #{upconv_forward.1} parent=11 // pred_check_branch
          %172 = sbr.rel (%p170) target = $region20
        $region19: #{upconv_forward.1} parent=11 // pred_region
          %174 = vsyncadd [#allocation5], 0
          %s176 = sshll.u32 %s2, 4
          %s177 = int_to_ptr.vmem [resolvable:$true] %s176
          %179 = dma.vmem_to_smem %s177, 16, [#allocation4], [#allocation5]
        $region20: #{upconv_forward.1} parent=11 // pred_fallthru
          _
        // Predicated region
        $region21: #{upconv_forward.1} parent=11 // pred_check
          %p180 = pneg %p115
        $region22: #{upconv_forward.1} parent=11 // pred_check_branch
          %182 = sbr.rel (%p180) target = $region24
        $region23: #{upconv_forward.1} parent=11 // pred_region
          _
        $region24: #{upconv_forward.1} parent=11 // pred_fallthru
          _
      $region12: #{upconv_forward.1} parent=5 // pred_fallthru
        _
      %p183 = scmp.lt.s32.totalorder %s12, 2
      // Predicated region
      $region25: #{upconv_forward.1} parent=5 // pred_check
        %p184 = pneg %p183
      $region26: #{upconv_forward.1} parent=5 // pred_check_branch
        %186 = sbr.rel (%p184) target = $region28
      $region27: #{upconv_forward.1} parent=5 // pred_region
        // Predicated region
        $region29: #{upconv_forward.1} parent=27 // pred_check
          %p187 = pneg %p46
        $region30: #{upconv_forward.1} parent=27 // pred_check_branch
          %189 = sbr.rel (%p187) target = $region32
        $region31: #{upconv_forward.1} parent=27 // pred_region
          %s190 = smul.u32 2, %s20
          %p191 = scmp.lt.s32.totalorder %s19, 1
          %s192 = scalar_select %p191, %s19, 1
          %p193 = scmp.lt.s32.totalorder %s190, 1
          %s194 = scalar_select %p193, %s190, 1
          %s195 = smul.addr %s192, 8
          %s196 = sadd.s32 %s194, %s195
          %s197 = smul.addr %s196, 4
          %s198 = scalar_lea.vmem %s0, %s197
          %s199 = smul.u32 2, %s20
        $region32: #{upconv_forward.1} parent=27 // pred_fallthru
          _
      $region28: #{upconv_forward.1} parent=5 // pred_fallthru
        _
      %p200 = scmp.le.s32.totalorder 1, %s12
      %p201 = scmp.lt.s32.totalorder %s12, 3
      %p202 = pnand %p200, %p201
      %p203 = pneg %p202
      // Predicated region
      $region33: #{upconv_forward.1} parent=5 // pred_check
        _
      $region34: #{upconv_forward.1} parent=5 // pred_check_branch
        %205 = sbr.rel (%p202) target = $region36
      $region35: #{upconv_forward.1} parent=5 // pred_region
        %s206 = ssub.s32 %s12, 1
        // Predicated region
        $region37: #{upconv_forward.1} parent=35 // pred_check
          %p207 = pneg %p73
        $region38: #{upconv_forward.1} parent=35 // pred_check_branch
          %209 = sbr.rel (%p207) target = $region40
        $region39: #{upconv_forward.1} parent=35 // pred_region
          %211 = dma.done [#allocation3], 512
        $region40: #{upconv_forward.1} parent=35 // pred_fallthru
          _
        // Predicated region
        $region41: #{upconv_forward.1} parent=35 // pred_check
          %p212 = pneg %p94
        $region42: #{upconv_forward.1} parent=35 // pred_check_branch
          %214 = sbr.rel (%p212) target = $region44
        $region43: #{upconv_forward.1} parent=35 // pred_region
          %216 = dma.done [#allocation5], 16
        $region44: #{upconv_forward.1} parent=35 // pred_fallthru
          _
        %217 = sfence
        %s218 = smul.u32 2, %s22
        %p219 = scmp.lt.s32.totalorder %s21, 1
        %s220 = scalar_select %p219, %s21, 1
        %p221 = scmp.lt.s32.totalorder %s218, 1
        %s222 = scalar_select %p221, %s218, 1
        %s223 = smul.addr %s220, 8
        %s224 = sadd.s32 %s222, %s223
        %s225 = smul.addr %s224, 4
        %s226 = scalar_lea.vmem %s0, %s225
        %p227 = pneg %p52
        %p228 = pneg %p49
        %p229 = pneg %p73
        %p230 = pneg %p70
        %p231 = pneg %p94
        %p232 = pneg %p91
        %p233 = pneg %p115
        %p234 = pneg %p112
        %p235 = pneg %p143
        %p236 = pneg %p140
        %s237 = smul.u32 2, %s22
        %p238 = scmp.lt.s32.totalorder %s21, 1
        %s239 = scalar_select %p238, %s21, 1
        %p240 = scmp.lt.s32.totalorder %s237, 1
        %s241 = scalar_select %p240, %s237, 1
        %s242 = smul.addr %s239, 16
        %s243 = sadd.s32 %s241, %s242
        %s244 = smul.addr %s243, 8
        %s245 = scalar_lea.vmem %s4, %s244
        %s246 = smul.u32 2, %s22
        %p247 = scmp.lt.s32.totalorder %s21, 1
        %s248 = scalar_select %p247, %s21, 1
        %p249 = scmp.lt.s32.totalorder %s246, 1
        %s250 = scalar_select %p249, %s246, 1
        %s251 = smul.addr %s248, 8
        %s252 = sadd.s32 %s250, %s251
        %s253 = smul.addr %s252, 4
        %s254 = scalar_lea.vmem %s0, %s253
        %s255 = smul.u32 2, %s22
        %s256 = smul.u32 2, %s22
        %p257 = scmp.lt.s32.totalorder %s21, 1
        %s258 = scalar_select %p257, %s21, 1
        %p259 = scmp.lt.s32.totalorder %s256, 1
        %s260 = scalar_select %p259, %s256, 1
        %s261 = smul.addr %s258, 16
        %s262 = sadd.s32 %s260, %s261
        %s263 = smul.addr %s262, 8
        %s264 = scalar_lea.vmem %s4, %s263
        %s265 = smul.u32 2, %s22
        %v266 = vld [vmem:[%s254] sm:$0xf]
        %v267 = vld [vmem:[%s254 + $0x4] sm:$0xf]
        %v268 = vunpack.c.l.bf16 %v266
        %v269 = vunpack.c.l.bf16 %v267
        %s270 = scalar_lea.vmem %s254, 8
        %v271 = vld [vmem:[%s270] sm:$0xf]
        %v272 = vld [vmem:[%s270 + $0x4] sm:$0xf]
        %v273 = vunpack.c.l.bf16 %v271
        %v274 = vunpack.c.l.bf16 %v272
        %s275 = scalar_lea.vmem %s254, 16
        %v276 = vld [vmem:[%s275] sm:$0xf]
        %v277 = vld [vmem:[%s275 + $0x4] sm:$0xf]
        %v278 = vunpack.c.l.bf16 %v276
        %v279 = vunpack.c.l.bf16 %v277
        %s280 = scalar_lea.vmem %s254, 24
        %v281 = vld [vmem:[%s280] sm:$0xf]
        %v282 = vld [vmem:[%s280 + $0x4] sm:$0xf]
        %v283 = vunpack.c.l.bf16 %v281
        %v284 = vunpack.c.l.bf16 %v282
        %v285 = vld [vmem:[%s3] sm:$0xff]
        %v286 = vld [vmem:[%s3 + $0x8] sm:$0xff]
        %s287 = scalar_lea.vmem %s3, 16
        %v288 = vld [vmem:[%s287] sm:$0xff]
        %v289 = vld [vmem:[%s287 + $0x8] sm:$0xff]
        %s290 = scalar_lea.vmem %s3, 32
        %v291 = vld [vmem:[%s290] sm:$0xff]
        %v292 = vld [vmem:[%s290 + $0x8] sm:$0xff]
        %s293 = scalar_lea.vmem %s3, 48
        %v294 = vld [vmem:[%s293] sm:$0xff]
        %v295 = vld [vmem:[%s293 + $0x8] sm:$0xff]
        %s296 = sld [smem:[#allocation2]]
        %v297 = vstv %s296
        %v298 = vmul.f32 %v297, %v268
        %v299 = vmul.f32 %v297, %v269
        %s300 = sld [smem:[#allocation2 + $0x1]]
        %v301 = vstv %s300
        %v302 = vmul.f32 %v301, %v273
        %v303 = vmul.f32 %v301, %v274
        %v304 = vadd.f32 %v298, %v302
        %v305 = vadd.f32 %v299, %v303
        %s306 = sld [smem:[#allocation2 + $0x2]]
        %v307 = vstv %s306
        %v308 = vmul.f32 %v307, %v278
        %v309 = vmul.f32 %v307, %v279
        %v310 = vadd.f32 %v304, %v308
        %v311 = vadd.f32 %v305, %v309
        %s312 = sld [smem:[#allocation2 + $0x3]]
        %v313 = vstv %s312
        %v314 = vmul.f32 %v313, %v283
        %v315 = vmul.f32 %v313, %v284
        %v316 = vadd.f32 %v310, %v314
        %v317 = vadd.f32 %v311, %v315
        %s318 = sld [smem:[#allocation2 + $0x400]]
        %v319 = vstv %s318
        %v320 = vmul.f32 %v319, %v268
        %v321 = vmul.f32 %v319, %v269
        %s322 = sld [smem:[#allocation2 + $0x401]]
        %v323 = vstv %s322
        %v324 = vmul.f32 %v323, %v273
        %v325 = vmul.f32 %v323, %v274
        %v326 = vadd.f32 %v320, %v324
        %v327 = vadd.f32 %v321, %v325
        %s328 = sld [smem:[#allocation2 + $0x402]]
        %v329 = vstv %s328
        %v330 = vmul.f32 %v329, %v278
        %v331 = vmul.f32 %v329, %v279
        %v332 = vadd.f32 %v326, %v330
        %v333 = vadd.f32 %v327, %v331
        %s334 = sld [smem:[#allocation2 + $0x403]]
        %v335 = vstv %s334
        %v336 = vmul.f32 %v335, %v283
        %v337 = vmul.f32 %v335, %v284
        %v338 = vadd.f32 %v332, %v336
        %v339 = vadd.f32 %v333, %v337
        %vm340 = vcmask 130048
        %v342 = vsel %vm340, %v338, 0
        %v345 = vsel %vm340, %v339, 0
        %347 = vmatpush.msra.mxu0 0.0
        %348 = vmatpush.msra.mxu0 0.0
        %349 = vmatpush.msra.mxu0 0.0
        %350 = vmatpush.msra.mxu0 0.0
        %351 = vmatpush.msra.mxu0 0.0
        %352 = vmatpush.msra.mxu0 0.0
        %353 = vmatpush.msra.mxu0 0.0
        %354 = vmatpush.msra.mxu0 0.0
        %355 = vmatpush.msra.mxu0 0.0
        %356 = vmatpush.msra.mxu0 0.0
        %357 = vmatpush.msra.mxu0 0.0
        %358 = vmatpush.msra.mxu0 0.0
        %359 = vmatpush.msra.mxu0 0.0
        %360 = vmatpush.msra.mxu0 0.0
        %361 = vmatpush.msra.mxu0 %v289
        %362 = vmatpush.msra.mxu0 %v288
        %363 = vmatmul.f32.gmra.mxu0 %v342
        %v364 = vpop.f32.mrf.mxu0
        %v365 = vadd.f32 0.0, %v364
        %366 = vmatmul.f32.gmra.mxu0 %v345
        %v367 = vpop.f32.mrf.mxu0
        %v368 = vadd.f32 0.0, %v367
        %369 = vdwg.mxu0
        %v371 = vsel %vm340, %v316, 0
        %v374 = vsel %vm340, %v317, 0
        %376 = vmatpush.msra.mxu0 0.0
        %377 = vmatpush.msra.mxu0 0.0
        %378 = vmatpush.msra.mxu0 0.0
        %379 = vmatpush.msra.mxu0 0.0
        %380 = vmatpush.msra.mxu0 0.0
        %381 = vmatpush.msra.mxu0 0.0
        %382 = vmatpush.msra.mxu0 0.0
        %383 = vmatpush.msra.mxu0 0.0
        %384 = vmatpush.msra.mxu0 0.0
        %385 = vmatpush.msra.mxu0 0.0
        %386 = vmatpush.msra.mxu0 0.0
        %387 = vmatpush.msra.mxu0 0.0
        %388 = vmatpush.msra.mxu0 0.0
        %389 = vmatpush.msra.mxu0 0.0
        %390 = vmatpush.msra.mxu0 %v286
        %391 = vmatpush.msra.mxu0 %v285
        %392 = vmatmul.f32.gmra.mxu0 %v371
        %v393 = vpop.f32.mrf.mxu0
        %v394 = vadd.f32 %v365, %v393
        %395 = vmatmul.f32.gmra.mxu0 %v374
        %v396 = vpop.f32.mrf.mxu0
        %v397 = vadd.f32 %v368, %v396
        %398 = vdwg.mxu0
        %s399 = sld [smem:[#allocation2 + $0x800]]
        %v400 = vstv %s399
        %v401 = vmul.f32 %v400, %v268
        %v402 = vmul.f32 %v400, %v269
        %s403 = sld [smem:[#allocation2 + $0x801]]
        %v404 = vstv %s403
        %v405 = vmul.f32 %v404, %v273
        %v406 = vmul.f32 %v404, %v274
        %v407 = vadd.f32 %v401, %v405
        %v408 = vadd.f32 %v402, %v406
        %s409 = sld [smem:[#allocation2 + $0x802]]
        %v410 = vstv %s409
        %v411 = vmul.f32 %v410, %v278
        %v412 = vmul.f32 %v410, %v279
        %v413 = vadd.f32 %v407, %v411
        %v414 = vadd.f32 %v408, %v412
        %s415 = sld [smem:[#allocation2 + $0x803]]
        %v416 = vstv %s415
        %v417 = vmul.f32 %v416, %v283
        %v418 = vmul.f32 %v416, %v284
        %v419 = vadd.f32 %v413, %v417
        %v420 = vadd.f32 %v414, %v418
        %v422 = vsel %vm340, %v419, 0
        %v425 = vsel %vm340, %v420, 0
        %427 = vmatpush.msra.mxu0 0.0
        %428 = vmatpush.msra.mxu0 0.0
        %429 = vmatpush.msra.mxu0 0.0
        %430 = vmatpush.msra.mxu0 0.0
        %431 = vmatpush.msra.mxu0 0.0
        %432 = vmatpush.msra.mxu0 0.0
        %433 = vmatpush.msra.mxu0 0.0
        %434 = vmatpush.msra.mxu0 0.0
        %435 = vmatpush.msra.mxu0 0.0
        %436 = vmatpush.msra.mxu0 0.0
        %437 = vmatpush.msra.mxu0 0.0
        %438 = vmatpush.msra.mxu0 0.0
        %439 = vmatpush.msra.mxu0 0.0
        %440 = vmatpush.msra.mxu0 0.0
        %441 = vmatpush.msra.mxu0 %v292
        %442 = vmatpush.msra.mxu0 %v291
        %443 = vmatmul.f32.gmra.mxu0 %v422
        %v444 = vpop.f32.mrf.mxu0
        %v445 = vadd.f32 0.0, %v444
        %446 = vmatmul.f32.gmra.mxu0 %v425
        %v447 = vpop.f32.mrf.mxu0
        %v448 = vadd.f32 0.0, %v447
        %449 = vdwg.mxu0
        %v450 = vadd.f32 %v394, %v445
        %v451 = vadd.f32 %v397, %v448
        %s452 = sld [smem:[#allocation2 + $0xc00]]
        %v453 = vstv %s452
        %v454 = vmul.f32 %v453, %v268
        %v455 = vmul.f32 %v453, %v269
        %s456 = sld [smem:[#allocation2 + $0xc01]]
        %v457 = vstv %s456
        %v458 = vmul.f32 %v457, %v273
        %v459 = vmul.f32 %v457, %v274
        %v460 = vadd.f32 %v454, %v458
        %v461 = vadd.f32 %v455, %v459
        %s462 = sld [smem:[#allocation2 + $0xc02]]
        %v463 = vstv %s462
        %v464 = vmul.f32 %v463, %v278
        %v465 = vmul.f32 %v463, %v279
        %v466 = vadd.f32 %v460, %v464
        %v467 = vadd.f32 %v461, %v465
        %s468 = sld [smem:[#allocation2 + $0xc03]]
        %v469 = vstv %s468
        %v470 = vmul.f32 %v469, %v283
        %v471 = vmul.f32 %v469, %v284
        %v472 = vadd.f32 %v466, %v470
        %v473 = vadd.f32 %v467, %v471
        %v475 = vsel %vm340, %v472, 0
        %v478 = vsel %vm340, %v473, 0
        %480 = vmatpush.msra.mxu0 0.0
        %481 = vmatpush.msra.mxu0 0.0
        %482 = vmatpush.msra.mxu0 0.0
        %483 = vmatpush.msra.mxu0 0.0
        %484 = vmatpush.msra.mxu0 0.0
        %485 = vmatpush.msra.mxu0 0.0
        %486 = vmatpush.msra.mxu0 0.0
        %487 = vmatpush.msra.mxu0 0.0
        %488 = vmatpush.msra.mxu0 0.0
        %489 = vmatpush.msra.mxu0 0.0
        %490 = vmatpush.msra.mxu0 0.0
        %491 = vmatpush.msra.mxu0 0.0
        %492 = vmatpush.msra.mxu0 0.0
        %493 = vmatpush.msra.mxu0 0.0
        %494 = vmatpush.msra.mxu0 %v295
        %495 = vmatpush.msra.mxu0 %v294
        %496 = vmatmul.f32.gmra.mxu0 %v475
        %v497 = vpop.f32.mrf.mxu0
        %v498 = vadd.f32 0.0, %v497
        %499 = vmatmul.f32.gmra.mxu0 %v478
        %v500 = vpop.f32.mrf.mxu0
        %v501 = vadd.f32 0.0, %v500
        %502 = vdwg.mxu0
        %v503 = vadd.f32 %v450, %v498
        %v504 = vadd.f32 %v451, %v501
        %s505 = sld [smem:[#allocation4]]
        %v506 = vstv %s505
        %v507 = vadd.f32 %v503, %v506
        %v508 = vadd.f32 %v504, %v506
        %vm509 = vcmp.gt.f32.partialorder %v507, 0.0
        %vm510 = vcmp.gt.f32.partialorder %v508, 0.0
        %v511 = vmul.f32 %v507, 0.01
        %v512 = vmul.f32 %v508, 0.01
        %v513 = vsel %vm509, %v507, %v511
        %v514 = vsel %vm510, %v508, %v512
        %vm515 = vcmask 523264
        %516 = vst.msk [vmem:[%s264] sm:$0xff] %vm515, %v513
        %517 = vst.msk [vmem:[%s264 + $0x8] sm:$0xff] %vm515, %v514
        %s518 = sld [smem:[#allocation2 + $0x80]]
        %v519 = vstv %s518
        %v520 = vmul.f32 %v519, %v268
        %v521 = vmul.f32 %v519, %v269
        %s522 = sld [smem:[#allocation2 + $0x81]]
        %v523 = vstv %s522
        %v524 = vmul.f32 %v523, %v273
        %v525 = vmul.f32 %v523, %v274
        %v526 = vadd.f32 %v520, %v524
        %v527 = vadd.f32 %v521, %v525
        %s528 = sld [smem:[#allocation2 + $0x82]]
        %v529 = vstv %s528
        %v530 = vmul.f32 %v529, %v278
        %v531 = vmul.f32 %v529, %v279
        %v532 = vadd.f32 %v526, %v530
        %v533 = vadd.f32 %v527, %v531
        %s534 = sld [smem:[#allocation2 + $0x83]]
        %v535 = vstv %s534
        %v536 = vmul.f32 %v535, %v283
        %v537 = vmul.f32 %v535, %v284
        %v538 = vadd.f32 %v532, %v536
        %v539 = vadd.f32 %v533, %v537
        %s540 = sld [smem:[#allocation2 + $0x480]]
        %v541 = vstv %s540
        %v542 = vmul.f32 %v541, %v268
        %v543 = vmul.f32 %v541, %v269
        %s544 = sld [smem:[#allocation2 + $0x481]]
        %v545 = vstv %s544
        %v546 = vmul.f32 %v545, %v273
        %v547 = vmul.f32 %v545, %v274
        %v548 = vadd.f32 %v542, %v546
        %v549 = vadd.f32 %v543, %v547
        %s550 = sld [smem:[#allocation2 + $0x482]]
        %v551 = vstv %s550
        %v552 = vmul.f32 %v551, %v278
        %v553 = vmul.f32 %v551, %v279
        %v554 = vadd.f32 %v548, %v552
        %v555 = vadd.f32 %v549, %v553
        %s556 = sld [smem:[#allocation2 + $0x483]]
        %v557 = vstv %s556
        %v558 = vmul.f32 %v557, %v283
        %v559 = vmul.f32 %v557, %v284
        %v560 = vadd.f32 %v554, %v558
        %v561 = vadd.f32 %v555, %v559
        %v563 = vsel %vm340, %v560, 0
        %v566 = vsel %vm340, %v561, 0
        %568 = vmatpush.msra.mxu0 0.0
        %569 = vmatpush.msra.mxu0 0.0
        %570 = vmatpush.msra.mxu0 0.0
        %571 = vmatpush.msra.mxu0 0.0
        %572 = vmatpush.msra.mxu0 0.0
        %573 = vmatpush.msra.mxu0 0.0
        %574 = vmatpush.msra.mxu0 0.0
        %575 = vmatpush.msra.mxu0 0.0
        %576 = vmatpush.msra.mxu0 0.0
        %577 = vmatpush.msra.mxu0 0.0
        %578 = vmatpush.msra.mxu0 0.0
        %579 = vmatpush.msra.mxu0 0.0
        %580 = vmatpush.msra.mxu0 0.0
        %581 = vmatpush.msra.mxu0 0.0
        %582 = vmatpush.msra.mxu0 %v289
        %583 = vmatpush.msra.mxu0 %v288
        %584 = vmatmul.f32.gmra.mxu0 %v563
        %v585 = vpop.f32.mrf.mxu0
        %v586 = vadd.f32 0.0, %v585
        %587 = vmatmul.f32.gmra.mxu0 %v566
        %v588 = vpop.f32.mrf.mxu0
        %v589 = vadd.f32 0.0, %v588
        %590 = vdwg.mxu0
        %v592 = vsel %vm340, %v538, 0
        %v595 = vsel %vm340, %v539, 0
        %597 = vmatpush.msra.mxu0 0.0
        %598 = vmatpush.msra.mxu0 0.0
        %599 = vmatpush.msra.mxu0 0.0
        %600 = vmatpush.msra.mxu0 0.0
        %601 = vmatpush.msra.mxu0 0.0
        %602 = vmatpush.msra.mxu0 0.0
        %603 = vmatpush.msra.mxu0 0.0
        %604 = vmatpush.msra.mxu0 0.0
        %605 = vmatpush.msra.mxu0 0.0
        %606 = vmatpush.msra.mxu0 0.0
        %607 = vmatpush.msra.mxu0 0.0
        %608 = vmatpush.msra.mxu0 0.0
        %609 = vmatpush.msra.mxu0 0.0
        %610 = vmatpush.msra.mxu0 0.0
        %611 = vmatpush.msra.mxu0 %v286
        %612 = vmatpush.msra.mxu0 %v285
        %613 = vmatmul.f32.gmra.mxu0 %v592
        %v614 = vpop.f32.mrf.mxu0
        %v615 = vadd.f32 %v586, %v614
        %616 = vmatmul.f32.gmra.mxu0 %v595
        %v617 = vpop.f32.mrf.mxu0
        %v618 = vadd.f32 %v589, %v617
        %619 = vdwg.mxu0
        %s620 = sld [smem:[#allocation2 + $0x880]]
        %v621 = vstv %s620
        %v622 = vmul.f32 %v621, %v268
        %v623 = vmul.f32 %v621, %v269
        %s624 = sld [smem:[#allocation2 + $0x881]]
        %v625 = vstv %s624
        %v626 = vmul.f32 %v625, %v273
        %v627 = vmul.f32 %v625, %v274
        %v628 = vadd.f32 %v622, %v626
        %v629 = vadd.f32 %v623, %v627
        %s630 = sld [smem:[#allocation2 + $0x882]]
        %v631 = vstv %s630
        %v632 = vmul.f32 %v631, %v278
        %v633 = vmul.f32 %v631, %v279
        %v634 = vadd.f32 %v628, %v632
        %v635 = vadd.f32 %v629, %v633
        %s636 = sld [smem:[#allocation2 + $0x883]]
        %v637 = vstv %s636
        %v638 = vmul.f32 %v637, %v283
        %v639 = vmul.f32 %v637, %v284
        %v640 = vadd.f32 %v634, %v638
        %v641 = vadd.f32 %v635, %v639
        %v643 = vsel %vm340, %v640, 0
        %v646 = vsel %vm340, %v641, 0
        %648 = vmatpush.msra.mxu0 0.0
        %649 = vmatpush.msra.mxu0 0.0
        %650 = vmatpush.msra.mxu0 0.0
        %651 = vmatpush.msra.mxu0 0.0
        %652 = vmatpush.msra.mxu0 0.0
        %653 = vmatpush.msra.mxu0 0.0
        %654 = vmatpush.msra.mxu0 0.0
        %655 = vmatpush.msra.mxu0 0.0
        %656 = vmatpush.msra.mxu0 0.0
        %657 = vmatpush.msra.mxu0 0.0
        %658 = vmatpush.msra.mxu0 0.0
        %659 = vmatpush.msra.mxu0 0.0
        %660 = vmatpush.msra.mxu0 0.0
        %661 = vmatpush.msra.mxu0 0.0
        %662 = vmatpush.msra.mxu0 %v292
        %663 = vmatpush.msra.mxu0 %v291
        %664 = vmatmul.f32.gmra.mxu0 %v643
        %v665 = vpop.f32.mrf.mxu0
        %v666 = vadd.f32 0.0, %v665
        %667 = vmatmul.f32.gmra.mxu0 %v646
        %v668 = vpop.f32.mrf.mxu0
        %v669 = vadd.f32 0.0, %v668
        %670 = vdwg.mxu0
        %v671 = vadd.f32 %v615, %v666
        %v672 = vadd.f32 %v618, %v669
        %s673 = sld [smem:[#allocation2 + $0xc80]]
        %v674 = vstv %s673
        %v675 = vmul.f32 %v674, %v268
        %v676 = vmul.f32 %v674, %v269
        %s677 = sld [smem:[#allocation2 + $0xc81]]
        %v678 = vstv %s677
        %v679 = vmul.f32 %v678, %v273
        %v680 = vmul.f32 %v678, %v274
        %v681 = vadd.f32 %v675, %v679
        %v682 = vadd.f32 %v676, %v680
        %s683 = sld [smem:[#allocation2 + $0xc82]]
        %v684 = vstv %s683
        %v685 = vmul.f32 %v684, %v278
        %v686 = vmul.f32 %v684, %v279
        %v687 = vadd.f32 %v681, %v685
        %v688 = vadd.f32 %v682, %v686
        %s689 = sld [smem:[#allocation2 + $0xc83]]
        %v690 = vstv %s689
        %v691 = vmul.f32 %v690, %v283
        %v692 = vmul.f32 %v690, %v284
        %v693 = vadd.f32 %v687, %v691
        %v694 = vadd.f32 %v688, %v692
        %v696 = vsel %vm340, %v693, 0
        %v699 = vsel %vm340, %v694, 0
        %701 = vmatpush.msra.mxu0 0.0
        %702 = vmatpush.msra.mxu0 0.0
        %703 = vmatpush.msra.mxu0 0.0
        %704 = vmatpush.msra.mxu0 0.0
        %705 = vmatpush.msra.mxu0 0.0
        %706 = vmatpush.msra.mxu0 0.0
        %707 = vmatpush.msra.mxu0 0.0
        %708 = vmatpush.msra.mxu0 0.0
        %709 = vmatpush.msra.mxu0 0.0
        %710 = vmatpush.msra.mxu0 0.0
        %711 = vmatpush.msra.mxu0 0.0
        %712 = vmatpush.msra.mxu0 0.0
        %713 = vmatpush.msra.mxu0 0.0
        %714 = vmatpush.msra.mxu0 0.0
        %715 = vmatpush.msra.mxu0 %v295
        %716 = vmatpush.msra.mxu0 %v294
        %717 = vmatmul.f32.gmra.mxu0 %v696
        %v718 = vpop.f32.mrf.mxu0
        %v719 = vadd.f32 0.0, %v718
        %720 = vmatmul.f32.gmra.mxu0 %v699
        %v721 = vpop.f32.mrf.mxu0
        %v722 = vadd.f32 0.0, %v721
        %723 = vdwg.mxu0
        %v724 = vadd.f32 %v671, %v719
        %v725 = vadd.f32 %v672, %v722
        %s726 = sld [smem:[#allocation4 + $0x1]]
        %v727 = vstv %s726
        %v728 = vadd.f32 %v724, %v727
        %v729 = vadd.f32 %v725, %v727
        %vm730 = vcmp.gt.f32.partialorder %v728, 0.0
        %vm731 = vcmp.gt.f32.partialorder %v729, 0.0
        %v732 = vmul.f32 %v728, 0.01
        %v733 = vmul.f32 %v729, 0.01
        %v734 = vsel %vm730, %v728, %v732
        %v735 = vsel %vm731, %v729, %v733
        %s736 = scalar_lea.vmem %s264, 16
        %737 = vst.msk [vmem:[%s736] sm:$0xff] %vm515, %v734
        %738 = vst.msk [vmem:[%s736 + $0x8] sm:$0xff] %vm515, %v735
        %s739 = sld [smem:[#allocation2 + $0x100]]
        %v740 = vstv %s739
        %v741 = vmul.f32 %v740, %v268
        %v742 = vmul.f32 %v740, %v269
        %s743 = sld [smem:[#allocation2 + $0x101]]
        %v744 = vstv %s743
        %v745 = vmul.f32 %v744, %v273
        %v746 = vmul.f32 %v744, %v274
        %v747 = vadd.f32 %v741, %v745
        %v748 = vadd.f32 %v742, %v746
        %s749 = sld [smem:[#allocation2 + $0x102]]
        %v750 = vstv %s749
        %v751 = vmul.f32 %v750, %v278
        %v752 = vmul.f32 %v750, %v279
        %v753 = vadd.f32 %v747, %v751
        %v754 = vadd.f32 %v748, %v752
        %s755 = sld [smem:[#allocation2 + $0x103]]
        %v756 = vstv %s755
        %v757 = vmul.f32 %v756, %v283
        %v758 = vmul.f32 %v756, %v284
        %v759 = vadd.f32 %v753, %v757
        %v760 = vadd.f32 %v754, %v758
        %s761 = sld [smem:[#allocation2 + $0x500]]
        %v762 = vstv %s761
        %v763 = vmul.f32 %v762, %v268
        %v764 = vmul.f32 %v762, %v269
        %s765 = sld [smem:[#allocation2 + $0x501]]
        %v766 = vstv %s765
        %v767 = vmul.f32 %v766, %v273
        %v768 = vmul.f32 %v766, %v274
        %v769 = vadd.f32 %v763, %v767
        %v770 = vadd.f32 %v764, %v768
        %s771 = sld [smem:[#allocation2 + $0x502]]
        %v772 = vstv %s771
        %v773 = vmul.f32 %v772, %v278
        %v774 = vmul.f32 %v772, %v279
        %v775 = vadd.f32 %v769, %v773
        %v776 = vadd.f32 %v770, %v774
        %s777 = sld [smem:[#allocation2 + $0x503]]
        %v778 = vstv %s777
        %v779 = vmul.f32 %v778, %v283
        %v780 = vmul.f32 %v778, %v284
        %v781 = vadd.f32 %v775, %v779
        %v782 = vadd.f32 %v776, %v780
        %v784 = vsel %vm340, %v781, 0
        %v787 = vsel %vm340, %v782, 0
        %789 = vmatpush.msra.mxu0 0.0
        %790 = vmatpush.msra.mxu0 0.0
        %791 = vmatpush.msra.mxu0 0.0
        %792 = vmatpush.msra.mxu0 0.0
        %793 = vmatpush.msra.mxu0 0.0
        %794 = vmatpush.msra.mxu0 0.0
        %795 = vmatpush.msra.mxu0 0.0
        %796 = vmatpush.msra.mxu0 0.0
        %797 = vmatpush.msra.mxu0 0.0
        %798 = vmatpush.msra.mxu0 0.0
        %799 = vmatpush.msra.mxu0 0.0
        %800 = vmatpush.msra.mxu0 0.0
        %801 = vmatpush.msra.mxu0 0.0
        %802 = vmatpush.msra.mxu0 0.0
        %803 = vmatpush.msra.mxu0 %v289
        %804 = vmatpush.msra.mxu0 %v288
        %805 = vmatmul.f32.gmra.mxu0 %v784
        %v806 = vpop.f32.mrf.mxu0
        %v807 = vadd.f32 0.0, %v806
        %808 = vmatmul.f32.gmra.mxu0 %v787
        %v809 = vpop.f32.mrf.mxu0
        %v810 = vadd.f32 0.0, %v809
        %811 = vdwg.mxu0
        %v813 = vsel %vm340, %v759, 0
        %v816 = vsel %vm340, %v760, 0
        %818 = vmatpush.msra.mxu0 0.0
        %819 = vmatpush.msra.mxu0 0.0
        %820 = vmatpush.msra.mxu0 0.0
        %821 = vmatpush.msra.mxu0 0.0
        %822 = vmatpush.msra.mxu0 0.0
        %823 = vmatpush.msra.mxu0 0.0
        %824 = vmatpush.msra.mxu0 0.0
        %825 = vmatpush.msra.mxu0 0.0
        %826 = vmatpush.msra.mxu0 0.0
        %827 = vmatpush.msra.mxu0 0.0
        %828 = vmatpush.msra.mxu0 0.0
        %829 = vmatpush.msra.mxu0 0.0
        %830 = vmatpush.msra.mxu0 0.0
        %831 = vmatpush.msra.mxu0 0.0
        %832 = vmatpush.msra.mxu0 %v286
        %833 = vmatpush.msra.mxu0 %v285
        %834 = vmatmul.f32.gmra.mxu0 %v813
        %v835 = vpop.f32.mrf.mxu0
        %v836 = vadd.f32 %v807, %v835
        %837 = vmatmul.f32.gmra.mxu0 %v816
        %v838 = vpop.f32.mrf.mxu0
        %v839 = vadd.f32 %v810, %v838
        %840 = vdwg.mxu0
        %s841 = sld [smem:[#allocation2 + $0x900]]
        %v842 = vstv %s841
        %v843 = vmul.f32 %v842, %v268
        %v844 = vmul.f32 %v842, %v269
        %s845 = sld [smem:[#allocation2 + $0x901]]
        %v846 = vstv %s845
        %v847 = vmul.f32 %v846, %v273
        %v848 = vmul.f32 %v846, %v274
        %v849 = vadd.f32 %v843, %v847
        %v850 = vadd.f32 %v844, %v848
        %s851 = sld [smem:[#allocation2 + $0x902]]
        %v852 = vstv %s851
        %v853 = vmul.f32 %v852, %v278
        %v854 = vmul.f32 %v852, %v279
        %v855 = vadd.f32 %v849, %v853
        %v856 = vadd.f32 %v850, %v854
        %s857 = sld [smem:[#allocation2 + $0x903]]
        %v858 = vstv %s857
        %v859 = vmul.f32 %v858, %v283
        %v860 = vmul.f32 %v858, %v284
        %v861 = vadd.f32 %v855, %v859
        %v862 = vadd.f32 %v856, %v860
        %v864 = vsel %vm340, %v861, 0
        %v867 = vsel %vm340, %v862, 0
        %869 = vmatpush.msra.mxu0 0.0
        %870 = vmatpush.msra.mxu0 0.0
        %871 = vmatpush.msra.mxu0 0.0
        %872 = vmatpush.msra.mxu0 0.0
        %873 = vmatpush.msra.mxu0 0.0
        %874 = vmatpush.msra.mxu0 0.0
        %875 = vmatpush.msra.mxu0 0.0
        %876 = vmatpush.msra.mxu0 0.0
        %877 = vmatpush.msra.mxu0 0.0
        %878 = vmatpush.msra.mxu0 0.0
        %879 = vmatpush.msra.mxu0 0.0
        %880 = vmatpush.msra.mxu0 0.0
        %881 = vmatpush.msra.mxu0 0.0
        %882 = vmatpush.msra.mxu0 0.0
        %883 = vmatpush.msra.mxu0 %v292
        %884 = vmatpush.msra.mxu0 %v291
        %885 = vmatmul.f32.gmra.mxu0 %v864
        %v886 = vpop.f32.mrf.mxu0
        %v887 = vadd.f32 0.0, %v886
        %888 = vmatmul.f32.gmra.mxu0 %v867
        %v889 = vpop.f32.mrf.mxu0
        %v890 = vadd.f32 0.0, %v889
        %891 = vdwg.mxu0
        %v892 = vadd.f32 %v836, %v887
        %v893 = vadd.f32 %v839, %v890
        %s894 = sld [smem:[#allocation2 + $0xd00]]
        %v895 = vstv %s894
        %v896 = vmul.f32 %v895, %v268
        %v897 = vmul.f32 %v895, %v269
        %s898 = sld [smem:[#allocation2 + $0xd01]]
        %v899 = vstv %s898
        %v900 = vmul.f32 %v899, %v273
        %v901 = vmul.f32 %v899, %v274
        %v902 = vadd.f32 %v896, %v900
        %v903 = vadd.f32 %v897, %v901
        %s904 = sld [smem:[#allocation2 + $0xd02]]
        %v905 = vstv %s904
        %v906 = vmul.f32 %v905, %v278
        %v907 = vmul.f32 %v905, %v279
        %v908 = vadd.f32 %v902, %v906
        %v909 = vadd.f32 %v903, %v907
        %s910 = sld [smem:[#allocation2 + $0xd03]]
        %v911 = vstv %s910
        %v912 = vmul.f32 %v911, %v283
        %v913 = vmul.f32 %v911, %v284
        %v914 = vadd.f32 %v908, %v912
        %v915 = vadd.f32 %v909, %v913
        %v917 = vsel %vm340, %v914, 0
        %v920 = vsel %vm340, %v915, 0
        %922 = vmatpush.msra.mxu0 0.0
        %923 = vmatpush.msra.mxu0 0.0
        %924 = vmatpush.msra.mxu0 0.0
        %925 = vmatpush.msra.mxu0 0.0
        %926 = vmatpush.msra.mxu0 0.0
        %927 = vmatpush.msra.mxu0 0.0
        %928 = vmatpush.msra.mxu0 0.0
        %929 = vmatpush.msra.mxu0 0.0
        %930 = vmatpush.msra.mxu0 0.0
        %931 = vmatpush.msra.mxu0 0.0
        %932 = vmatpush.msra.mxu0 0.0
        %933 = vmatpush.msra.mxu0 0.0
        %934 = vmatpush.msra.mxu0 0.0
        %935 = vmatpush.msra.mxu0 0.0
        %936 = vmatpush.msra.mxu0 %v295
        %937 = vmatpush.msra.mxu0 %v294
        %938 = vmatmul.f32.gmra.mxu0 %v917
        %v939 = vpop.f32.mrf.mxu0
        %v940 = vadd.f32 0.0, %v939
        %941 = vmatmul.f32.gmra.mxu0 %v920
        %v942 = vpop.f32.mrf.mxu0
        %v943 = vadd.f32 0.0, %v942
        %944 = vdwg.mxu0
        %v945 = vadd.f32 %v892, %v940
        %v946 = vadd.f32 %v893, %v943
        %s947 = sld [smem:[#allocation4 + $0x2]]
        %v948 = vstv %s947
        %v949 = vadd.f32 %v945, %v948
        %v950 = vadd.f32 %v946, %v948
        %vm951 = vcmp.gt.f32.partialorder %v949, 0.0
        %vm952 = vcmp.gt.f32.partialorder %v950, 0.0
        %v953 = vmul.f32 %v949, 0.01
        %v954 = vmul.f32 %v950, 0.01
        %v955 = vsel %vm951, %v949, %v953
        %v956 = vsel %vm952, %v950, %v954
        %s957 = scalar_lea.vmem %s264, 32
        %958 = vst.msk [vmem:[%s957] sm:$0xff] %vm515, %v955
        %959 = vst.msk [vmem:[%s957 + $0x8] sm:$0xff] %vm515, %v956
        %s960 = sld [smem:[#allocation2 + $0x180]]
        %v961 = vstv %s960
        %v962 = vmul.f32 %v961, %v268
        %v963 = vmul.f32 %v961, %v269
        %s964 = sld [smem:[#allocation2 + $0x181]]
        %v965 = vstv %s964
        %v966 = vmul.f32 %v965, %v273
        %v967 = vmul.f32 %v965, %v274
        %v968 = vadd.f32 %v962, %v966
        %v969 = vadd.f32 %v963, %v967
        %s970 = sld [smem:[#allocation2 + $0x182]]
        %v971 = vstv %s970
        %v972 = vmul.f32 %v971, %v278
        %v973 = vmul.f32 %v971, %v279
        %v974 = vadd.f32 %v968, %v972
        %v975 = vadd.f32 %v969, %v973
        %s976 = sld [smem:[#allocation2 + $0x183]]
        %v977 = vstv %s976
        %v978 = vmul.f32 %v977, %v283
        %v979 = vmul.f32 %v977, %v284
        %v980 = vadd.f32 %v974, %v978
        %v981 = vadd.f32 %v975, %v979
        %s982 = sld [smem:[#allocation2 + $0x580]]
        %v983 = vstv %s982
        %v984 = vmul.f32 %v983, %v268
        %v985 = vmul.f32 %v983, %v269
        %s986 = sld [smem:[#allocation2 + $0x581]]
        %v987 = vstv %s986
        %v988 = vmul.f32 %v987, %v273
        %v989 = vmul.f32 %v987, %v274
        %v990 = vadd.f32 %v984, %v988
        %v991 = vadd.f32 %v985, %v989
        %s992 = sld [smem:[#allocation2 + $0x582]]
        %v993 = vstv %s992
        %v994 = vmul.f32 %v993, %v278
        %v995 = vmul.f32 %v993, %v279
        %v996 = vadd.f32 %v990, %v994
        %v997 = vadd.f32 %v991, %v995
        %s998 = sld [smem:[#allocation2 + $0x583]]
        %v999 = vstv %s998
        %v1000 = vmul.f32 %v999, %v283
        %v1001 = vmul.f32 %v999, %v284
        %v1002 = vadd.f32 %v996, %v1000
        %v1003 = vadd.f32 %v997, %v1001
        %v1005 = vsel %vm340, %v1002, 0
        %v1008 = vsel %vm340, %v1003, 0
        %1010 = vmatpush.msra.mxu0 0.0
        %1011 = vmatpush.msra.mxu0 0.0
        %1012 = vmatpush.msra.mxu0 0.0
        %1013 = vmatpush.msra.mxu0 0.0
        %1014 = vmatpush.msra.mxu0 0.0
        %1015 = vmatpush.msra.mxu0 0.0
        %1016 = vmatpush.msra.mxu0 0.0
        %1017 = vmatpush.msra.mxu0 0.0
        %1018 = vmatpush.msra.mxu0 0.0
        %1019 = vmatpush.msra.mxu0 0.0
        %1020 = vmatpush.msra.mxu0 0.0
        %1021 = vmatpush.msra.mxu0 0.0
        %1022 = vmatpush.msra.mxu0 0.0
        %1023 = vmatpush.msra.mxu0 0.0
        %1024 = vmatpush.msra.mxu0 %v289
        %1025 = vmatpush.msra.mxu0 %v288
        %1026 = vmatmul.f32.gmra.mxu0 %v1005
        %v1027 = vpop.f32.mrf.mxu0
        %v1028 = vadd.f32 0.0, %v1027
        %1029 = vmatmul.f32.gmra.mxu0 %v1008
        %v1030 = vpop.f32.mrf.mxu0
        %v1031 = vadd.f32 0.0, %v1030
        %1032 = vdwg.mxu0
        %v1034 = vsel %vm340, %v980, 0
        %v1037 = vsel %vm340, %v981, 0
        %1039 = vmatpush.msra.mxu0 0.0
        %1040 = vmatpush.msra.mxu0 0.0
        %1041 = vmatpush.msra.mxu0 0.0
        %1042 = vmatpush.msra.mxu0 0.0
        %1043 = vmatpush.msra.mxu0 0.0
        %1044 = vmatpush.msra.mxu0 0.0
        %1045 = vmatpush.msra.mxu0 0.0
        %1046 = vmatpush.msra.mxu0 0.0
        %1047 = vmatpush.msra.mxu0 0.0
        %1048 = vmatpush.msra.mxu0 0.0
        %1049 = vmatpush.msra.mxu0 0.0
        %1050 = vmatpush.msra.mxu0 0.0
        %1051 = vmatpush.msra.mxu0 0.0
        %1052 = vmatpush.msra.mxu0 0.0
        %1053 = vmatpush.msra.mxu0 %v286
        %1054 = vmatpush.msra.mxu0 %v285
        %1055 = vmatmul.f32.gmra.mxu0 %v1034
        %v1056 = vpop.f32.mrf.mxu0
        %v1057 = vadd.f32 %v1028, %v1056
        %1058 = vmatmul.f32.gmra.mxu0 %v1037
        %v1059 = vpop.f32.mrf.mxu0
        %v1060 = vadd.f32 %v1031, %v1059
        %1061 = vdwg.mxu0
        %s1062 = sld [smem:[#allocation2 + $0x980]]
        %v1063 = vstv %s1062
        %v1064 = vmul.f32 %v1063, %v268
        %v1065 = vmul.f32 %v1063, %v269
        %s1066 = sld [smem:[#allocation2 + $0x981]]
        %v1067 = vstv %s1066
        %v1068 = vmul.f32 %v1067, %v273
        %v1069 = vmul.f32 %v1067, %v274
        %v1070 = vadd.f32 %v1064, %v1068
        %v1071 = vadd.f32 %v1065, %v1069
        %s1072 = sld [smem:[#allocation2 + $0x982]]
        %v1073 = vstv %s1072
        %v1074 = vmul.f32 %v1073, %v278
        %v1075 = vmul.f32 %v1073, %v279
        %v1076 = vadd.f32 %v1070, %v1074
        %v1077 = vadd.f32 %v1071, %v1075
        %s1078 = sld [smem:[#allocation2 + $0x983]]
        %v1079 = vstv %s1078
        %v1080 = vmul.f32 %v1079, %v283
        %v1081 = vmul.f32 %v1079, %v284
        %v1082 = vadd.f32 %v1076, %v1080
        %v1083 = vadd.f32 %v1077, %v1081
        %v1085 = vsel %vm340, %v1082, 0
        %v1088 = vsel %vm340, %v1083, 0
        %1090 = vmatpush.msra.mxu0 0.0
        %1091 = vmatpush.msra.mxu0 0.0
        %1092 = vmatpush.msra.mxu0 0.0
        %1093 = vmatpush.msra.mxu0 0.0
        %1094 = vmatpush.msra.mxu0 0.0
        %1095 = vmatpush.msra.mxu0 0.0
        %1096 = vmatpush.msra.mxu0 0.0
        %1097 = vmatpush.msra.mxu0 0.0
        %1098 = vmatpush.msra.mxu0 0.0
        %1099 = vmatpush.msra.mxu0 0.0
        %1100 = vmatpush.msra.mxu0 0.0
        %1101 = vmatpush.msra.mxu0 0.0
        %1102 = vmatpush.msra.mxu0 0.0
        %1103 = vmatpush.msra.mxu0 0.0
        %1104 = vmatpush.msra.mxu0 %v292
        %1105 = vmatpush.msra.mxu0 %v291
        %1106 = vmatmul.f32.gmra.mxu0 %v1085
        %v1107 = vpop.f32.mrf.mxu0
        %v1108 = vadd.f32 0.0, %v1107
        %1109 = vmatmul.f32.gmra.mxu0 %v1088
        %v1110 = vpop.f32.mrf.mxu0
        %v1111 = vadd.f32 0.0, %v1110
        %1112 = vdwg.mxu0
        %v1113 = vadd.f32 %v1057, %v1108
        %v1114 = vadd.f32 %v1060, %v1111
        %s1115 = sld [smem:[#allocation2 + $0xd80]]
        %v1116 = vstv %s1115
        %v1117 = vmul.f32 %v1116, %v268
        %v1118 = vmul.f32 %v1116, %v269
        %s1119 = sld [smem:[#allocation2 + $0xd81]]
        %v1120 = vstv %s1119
        %v1121 = vmul.f32 %v1120, %v273
        %v1122 = vmul.f32 %v1120, %v274
        %v1123 = vadd.f32 %v1117, %v1121
        %v1124 = vadd.f32 %v1118, %v1122
        %s1125 = sld [smem:[#allocation2 + $0xd82]]
        %v1126 = vstv %s1125
        %v1127 = vmul.f32 %v1126, %v278
        %v1128 = vmul.f32 %v1126, %v279
        %v1129 = vadd.f32 %v1123, %v1127
        %v1130 = vadd.f32 %v1124, %v1128
        %s1131 = sld [smem:[#allocation2 + $0xd83]]
        %v1132 = vstv %s1131
        %v1133 = vmul.f32 %v1132, %v283
        %v1134 = vmul.f32 %v1132, %v284
        %v1135 = vadd.f32 %v1129, %v1133
        %v1136 = vadd.f32 %v1130, %v1134
        %v1138 = vsel %vm340, %v1135, 0
        %v1141 = vsel %vm340, %v1136, 0
        %1143 = vmatpush.msra.mxu0 0.0
        %1144 = vmatpush.msra.mxu0 0.0
        %1145 = vmatpush.msra.mxu0 0.0
        %1146 = vmatpush.msra.mxu0 0.0
        %1147 = vmatpush.msra.mxu0 0.0
        %1148 = vmatpush.msra.mxu0 0.0
        %1149 = vmatpush.msra.mxu0 0.0
        %1150 = vmatpush.msra.mxu0 0.0
        %1151 = vmatpush.msra.mxu0 0.0
        %1152 = vmatpush.msra.mxu0 0.0
        %1153 = vmatpush.msra.mxu0 0.0
        %1154 = vmatpush.msra.mxu0 0.0
        %1155 = vmatpush.msra.mxu0 0.0
        %1156 = vmatpush.msra.mxu0 0.0
        %1157 = vmatpush.msra.mxu0 %v295
        %1158 = vmatpush.msra.mxu0 %v294
        %1159 = vmatmul.f32.gmra.mxu0 %v1138
        %v1160 = vpop.f32.mrf.mxu0
        %v1161 = vadd.f32 0.0, %v1160
        %1162 = vmatmul.f32.gmra.mxu0 %v1141
        %v1163 = vpop.f32.mrf.mxu0
        %v1164 = vadd.f32 0.0, %v1163
        %1165 = vdwg.mxu0
        %v1166 = vadd.f32 %v1113, %v1161
        %v1167 = vadd.f32 %v1114, %v1164
        %s1168 = sld [smem:[#allocation4 + $0x3]]
        %v1169 = vstv %s1168
        %v1170 = vadd.f32 %v1166, %v1169
        %v1171 = vadd.f32 %v1167, %v1169
        %vm1172 = vcmp.gt.f32.partialorder %v1170, 0.0
        %vm1173 = vcmp.gt.f32.partialorder %v1171, 0.0
        %v1174 = vmul.f32 %v1170, 0.01
        %v1175 = vmul.f32 %v1171, 0.01
        %v1176 = vsel %vm1172, %v1170, %v1174
        %v1177 = vsel %vm1173, %v1171, %v1175
        %s1178 = scalar_lea.vmem %s264, 48
        %1179 = vst.msk [vmem:[%s1178] sm:$0xff] %vm515, %v1176
        %1180 = vst.msk [vmem:[%s1178 + $0x8] sm:$0xff] %vm515, %v1177
        %s1181 = sld [smem:[#allocation2 + $0x200]]
        %v1182 = vstv %s1181
        %v1183 = vmul.f32 %v1182, %v268
        %v1184 = vmul.f32 %v1182, %v269
        %s1185 = sld [smem:[#allocation2 + $0x201]]
        %v1186 = vstv %s1185
        %v1187 = vmul.f32 %v1186, %v273
        %v1188 = vmul.f32 %v1186, %v274
        %v1189 = vadd.f32 %v1183, %v1187
        %v1190 = vadd.f32 %v1184, %v1188
        %s1191 = sld [smem:[#allocation2 + $0x202]]
        %v1192 = vstv %s1191
        %v1193 = vmul.f32 %v1192, %v278
        %v1194 = vmul.f32 %v1192, %v279
        %v1195 = vadd.f32 %v1189, %v1193
        %v1196 = vadd.f32 %v1190, %v1194
        %s1197 = sld [smem:[#allocation2 + $0x203]]
        %v1198 = vstv %s1197
        %v1199 = vmul.f32 %v1198, %v283
        %v1200 = vmul.f32 %v1198, %v284
        %v1201 = vadd.f32 %v1195, %v1199
        %v1202 = vadd.f32 %v1196, %v1200
        %s1203 = sld [smem:[#allocation2 + $0x600]]
        %v1204 = vstv %s1203
        %v1205 = vmul.f32 %v1204, %v268
        %v1206 = vmul.f32 %v1204, %v269
        %s1207 = sld [smem:[#allocation2 + $0x601]]
        %v1208 = vstv %s1207
        %v1209 = vmul.f32 %v1208, %v273
        %v1210 = vmul.f32 %v1208, %v274
        %v1211 = vadd.f32 %v1205, %v1209
        %v1212 = vadd.f32 %v1206, %v1210
        %s1213 = sld [smem:[#allocation2 + $0x602]]
        %v1214 = vstv %s1213
        %v1215 = vmul.f32 %v1214, %v278
        %v1216 = vmul.f32 %v1214, %v279
        %v1217 = vadd.f32 %v1211, %v1215
        %v1218 = vadd.f32 %v1212, %v1216
        %s1219 = sld [smem:[#allocation2 + $0x603]]
        %v1220 = vstv %s1219
        %v1221 = vmul.f32 %v1220, %v283
        %v1222 = vmul.f32 %v1220, %v284
        %v1223 = vadd.f32 %v1217, %v1221
        %v1224 = vadd.f32 %v1218, %v1222
        %v1226 = vsel %vm340, %v1223, 0
        %v1229 = vsel %vm340, %v1224, 0
        %1231 = vmatpush.msra.mxu0 0.0
        %1232 = vmatpush.msra.mxu0 0.0
        %1233 = vmatpush.msra.mxu0 0.0
        %1234 = vmatpush.msra.mxu0 0.0
        %1235 = vmatpush.msra.mxu0 0.0
        %1236 = vmatpush.msra.mxu0 0.0
        %1237 = vmatpush.msra.mxu0 0.0
        %1238 = vmatpush.msra.mxu0 0.0
        %1239 = vmatpush.msra.mxu0 0.0
        %1240 = vmatpush.msra.mxu0 0.0
        %1241 = vmatpush.msra.mxu0 0.0
        %1242 = vmatpush.msra.mxu0 0.0
        %1243 = vmatpush.msra.mxu0 0.0
        %1244 = vmatpush.msra.mxu0 0.0
        %1245 = vmatpush.msra.mxu0 %v289
        %1246 = vmatpush.msra.mxu0 %v288
        %1247 = vmatmul.f32.gmra.mxu0 %v1226
        %v1248 = vpop.f32.mrf.mxu0
        %v1249 = vadd.f32 0.0, %v1248
        %1250 = vmatmul.f32.gmra.mxu0 %v1229
        %v1251 = vpop.f32.mrf.mxu0
        %v1252 = vadd.f32 0.0, %v1251
        %1253 = vdwg.mxu0
        %v1255 = vsel %vm340, %v1201, 0
        %v1258 = vsel %vm340, %v1202, 0
        %1260 = vmatpush.msra.mxu0 0.0
        %1261 = vmatpush.msra.mxu0 0.0
        %1262 = vmatpush.msra.mxu0 0.0
        %1263 = vmatpush.msra.mxu0 0.0
        %1264 = vmatpush.msra.mxu0 0.0
        %1265 = vmatpush.msra.mxu0 0.0
        %1266 = vmatpush.msra.mxu0 0.0
        %1267 = vmatpush.msra.mxu0 0.0
        %1268 = vmatpush.msra.mxu0 0.0
        %1269 = vmatpush.msra.mxu0 0.0
        %1270 = vmatpush.msra.mxu0 0.0
        %1271 = vmatpush.msra.mxu0 0.0
        %1272 = vmatpush.msra.mxu0 0.0
        %1273 = vmatpush.msra.mxu0 0.0
        %1274 = vmatpush.msra.mxu0 %v286
        %1275 = vmatpush.msra.mxu0 %v285
        %1276 = vmatmul.f32.gmra.mxu0 %v1255
        %v1277 = vpop.f32.mrf.mxu0
        %v1278 = vadd.f32 %v1249, %v1277
        %1279 = vmatmul.f32.gmra.mxu0 %v1258
        %v1280 = vpop.f32.mrf.mxu0
        %v1281 = vadd.f32 %v1252, %v1280
        %1282 = vdwg.mxu0
        %s1283 = sld [smem:[#allocation2 + $0xa00]]
        %v1284 = vstv %s1283
        %v1285 = vmul.f32 %v1284, %v268
        %v1286 = vmul.f32 %v1284, %v269
        %s1287 = sld [smem:[#allocation2 + $0xa01]]
        %v1288 = vstv %s1287
        %v1289 = vmul.f32 %v1288, %v273
        %v1290 = vmul.f32 %v1288, %v274
        %v1291 = vadd.f32 %v1285, %v1289
        %v1292 = vadd.f32 %v1286, %v1290
        %s1293 = sld [smem:[#allocation2 + $0xa02]]
        %v1294 = vstv %s1293
        %v1295 = vmul.f32 %v1294, %v278
        %v1296 = vmul.f32 %v1294, %v279
        %v1297 = vadd.f32 %v1291, %v1295
        %v1298 = vadd.f32 %v1292, %v1296
        %s1299 = sld [smem:[#allocation2 + $0xa03]]
        %v1300 = vstv %s1299
        %v1301 = vmul.f32 %v1300, %v283
        %v1302 = vmul.f32 %v1300, %v284
        %v1303 = vadd.f32 %v1297, %v1301
        %v1304 = vadd.f32 %v1298, %v1302
        %v1306 = vsel %vm340, %v1303, 0
        %v1309 = vsel %vm340, %v1304, 0
        %1311 = vmatpush.msra.mxu0 0.0
        %1312 = vmatpush.msra.mxu0 0.0
        %1313 = vmatpush.msra.mxu0 0.0
        %1314 = vmatpush.msra.mxu0 0.0
        %1315 = vmatpush.msra.mxu0 0.0
        %1316 = vmatpush.msra.mxu0 0.0
        %1317 = vmatpush.msra.mxu0 0.0
        %1318 = vmatpush.msra.mxu0 0.0
        %1319 = vmatpush.msra.mxu0 0.0
        %1320 = vmatpush.msra.mxu0 0.0
        %1321 = vmatpush.msra.mxu0 0.0
        %1322 = vmatpush.msra.mxu0 0.0
        %1323 = vmatpush.msra.mxu0 0.0
        %1324 = vmatpush.msra.mxu0 0.0
        %1325 = vmatpush.msra.mxu0 %v292
        %1326 = vmatpush.msra.mxu0 %v291
        %1327 = vmatmul.f32.gmra.mxu0 %v1306
        %v1328 = vpop.f32.mrf.mxu0
        %v1329 = vadd.f32 0.0, %v1328
        %1330 = vmatmul.f32.gmra.mxu0 %v1309
        %v1331 = vpop.f32.mrf.mxu0
        %v1332 = vadd.f32 0.0, %v1331
        %1333 = vdwg.mxu0
        %v1334 = vadd.f32 %v1278, %v1329
        %v1335 = vadd.f32 %v1281, %v1332
        %s1336 = sld [smem:[#allocation2 + $0xe00]]
        %v1337 = vstv %s1336
        %v1338 = vmul.f32 %v1337, %v268
        %v1339 = vmul.f32 %v1337, %v269
        %s1340 = sld [smem:[#allocation2 + $0xe01]]
        %v1341 = vstv %s1340
        %v1342 = vmul.f32 %v1341, %v273
        %v1343 = vmul.f32 %v1341, %v274
        %v1344 = vadd.f32 %v1338, %v1342
        %v1345 = vadd.f32 %v1339, %v1343
        %s1346 = sld [smem:[#allocation2 + $0xe02]]
        %v1347 = vstv %s1346
        %v1348 = vmul.f32 %v1347, %v278
        %v1349 = vmul.f32 %v1347, %v279
        %v1350 = vadd.f32 %v1344, %v1348
        %v1351 = vadd.f32 %v1345, %v1349
        %s1352 = sld [smem:[#allocation2 + $0xe03]]
        %v1353 = vstv %s1352
        %v1354 = vmul.f32 %v1353, %v283
        %v1355 = vmul.f32 %v1353, %v284
        %v1356 = vadd.f32 %v1350, %v1354
        %v1357 = vadd.f32 %v1351, %v1355
        %v1359 = vsel %vm340, %v1356, 0
        %v1362 = vsel %vm340, %v1357, 0
        %1364 = vmatpush.msra.mxu0 0.0
        %1365 = vmatpush.msra.mxu0 0.0
        %1366 = vmatpush.msra.mxu0 0.0
        %1367 = vmatpush.msra.mxu0 0.0
        %1368 = vmatpush.msra.mxu0 0.0
        %1369 = vmatpush.msra.mxu0 0.0
        %1370 = vmatpush.msra.mxu0 0.0
        %1371 = vmatpush.msra.mxu0 0.0
        %1372 = vmatpush.msra.mxu0 0.0
        %1373 = vmatpush.msra.mxu0 0.0
        %1374 = vmatpush.msra.mxu0 0.0
        %1375 = vmatpush.msra.mxu0 0.0
        %1376 = vmatpush.msra.mxu0 0.0
        %1377 = vmatpush.msra.mxu0 0.0
        %1378 = vmatpush.msra.mxu0 %v295
        %1379 = vmatpush.msra.mxu0 %v294
        %1380 = vmatmul.f32.gmra.mxu0 %v1359
        %v1381 = vpop.f32.mrf.mxu0
        %v1382 = vadd.f32 0.0, %v1381
        %1383 = vmatmul.f32.gmra.mxu0 %v1362
        %v1384 = vpop.f32.mrf.mxu0
        %v1385 = vadd.f32 0.0, %v1384
        %1386 = vdwg.mxu0
        %v1387 = vadd.f32 %v1334, %v1382
        %v1388 = vadd.f32 %v1335, %v1385
        %s1389 = sld [smem:[#allocation4 + $0x4]]
        %v1390 = vstv %s1389
        %v1391 = vadd.f32 %v1387, %v1390
        %v1392 = vadd.f32 %v1388, %v1390
        %vm1393 = vcmp.gt.f32.partialorder %v1391, 0.0
        %vm1394 = vcmp.gt.f32.partialorder %v1392, 0.0
        %v1395 = vmul.f32 %v1391, 0.01
        %v1396 = vmul.f32 %v1392, 0.01
        %v1397 = vsel %vm1393, %v1391, %v1395
        %v1398 = vsel %vm1394, %v1392, %v1396
        %s1399 = scalar_lea.vmem %s264, 64
        %1400 = vst.msk [vmem:[%s1399] sm:$0xff] %vm515, %v1397
        %1401 = vst.msk [vmem:[%s1399 + $0x8] sm:$0xff] %vm515, %v1398
        %s1402 = sld [smem:[#allocation2 + $0x280]]
        %v1403 = vstv %s1402
        %v1404 = vmul.f32 %v1403, %v268
        %v1405 = vmul.f32 %v1403, %v269
        %s1406 = sld [smem:[#allocation2 + $0x281]]
        %v1407 = vstv %s1406
        %v1408 = vmul.f32 %v1407, %v273
        %v1409 = vmul.f32 %v1407, %v274
        %v1410 = vadd.f32 %v1404, %v1408
        %v1411 = vadd.f32 %v1405, %v1409
        %s1412 = sld [smem:[#allocation2 + $0x282]]
        %v1413 = vstv %s1412
        %v1414 = vmul.f32 %v1413, %v278
        %v1415 = vmul.f32 %v1413, %v279
        %v1416 = vadd.f32 %v1410, %v1414
        %v1417 = vadd.f32 %v1411, %v1415
        %s1418 = sld [smem:[#allocation2 + $0x283]]
        %v1419 = vstv %s1418
        %v1420 = vmul.f32 %v1419, %v283
        %v1421 = vmul.f32 %v1419, %v284
        %v1422 = vadd.f32 %v1416, %v1420
        %v1423 = vadd.f32 %v1417, %v1421
        %s1424 = sld [smem:[#allocation2 + $0x680]]
        %v1425 = vstv %s1424
        %v1426 = vmul.f32 %v1425, %v268
        %v1427 = vmul.f32 %v1425, %v269
        %s1428 = sld [smem:[#allocation2 + $0x681]]
        %v1429 = vstv %s1428
        %v1430 = vmul.f32 %v1429, %v273
        %v1431 = vmul.f32 %v1429, %v274
        %v1432 = vadd.f32 %v1426, %v1430
        %v1433 = vadd.f32 %v1427, %v1431
        %s1434 = sld [smem:[#allocation2 + $0x682]]
        %v1435 = vstv %s1434
        %v1436 = vmul.f32 %v1435, %v278
        %v1437 = vmul.f32 %v1435, %v279
        %v1438 = vadd.f32 %v1432, %v1436
        %v1439 = vadd.f32 %v1433, %v1437
        %s1440 = sld [smem:[#allocation2 + $0x683]]
        %v1441 = vstv %s1440
        %v1442 = vmul.f32 %v1441, %v283
        %v1443 = vmul.f32 %v1441, %v284
        %v1444 = vadd.f32 %v1438, %v1442
        %v1445 = vadd.f32 %v1439, %v1443
        %v1447 = vsel %vm340, %v1444, 0
        %v1450 = vsel %vm340, %v1445, 0
        %1452 = vmatpush.msra.mxu0 0.0
        %1453 = vmatpush.msra.mxu0 0.0
        %1454 = vmatpush.msra.mxu0 0.0
        %1455 = vmatpush.msra.mxu0 0.0
        %1456 = vmatpush.msra.mxu0 0.0
        %1457 = vmatpush.msra.mxu0 0.0
        %1458 = vmatpush.msra.mxu0 0.0
        %1459 = vmatpush.msra.mxu0 0.0
        %1460 = vmatpush.msra.mxu0 0.0
        %1461 = vmatpush.msra.mxu0 0.0
        %1462 = vmatpush.msra.mxu0 0.0
        %1463 = vmatpush.msra.mxu0 0.0
        %1464 = vmatpush.msra.mxu0 0.0
        %1465 = vmatpush.msra.mxu0 0.0
        %1466 = vmatpush.msra.mxu0 %v289
        %1467 = vmatpush.msra.mxu0 %v288
        %1468 = vmatmul.f32.gmra.mxu0 %v1447
        %v1469 = vpop.f32.mrf.mxu0
        %v1470 = vadd.f32 0.0, %v1469
        %1471 = vmatmul.f32.gmra.mxu0 %v1450
        %v1472 = vpop.f32.mrf.mxu0
        %v1473 = vadd.f32 0.0, %v1472
        %1474 = vdwg.mxu0
        %v1476 = vsel %vm340, %v1422, 0
        %v1479 = vsel %vm340, %v1423, 0
        %1481 = vmatpush.msra.mxu0 0.0
        %1482 = vmatpush.msra.mxu0 0.0
        %1483 = vmatpush.msra.mxu0 0.0
        %1484 = vmatpush.msra.mxu0 0.0
        %1485 = vmatpush.msra.mxu0 0.0
        %1486 = vmatpush.msra.mxu0 0.0
        %1487 = vmatpush.msra.mxu0 0.0
        %1488 = vmatpush.msra.mxu0 0.0
        %1489 = vmatpush.msra.mxu0 0.0
        %1490 = vmatpush.msra.mxu0 0.0
        %1491 = vmatpush.msra.mxu0 0.0
        %1492 = vmatpush.msra.mxu0 0.0
        %1493 = vmatpush.msra.mxu0 0.0
        %1494 = vmatpush.msra.mxu0 0.0
        %1495 = vmatpush.msra.mxu0 %v286
        %1496 = vmatpush.msra.mxu0 %v285
        %1497 = vmatmul.f32.gmra.mxu0 %v1476
        %v1498 = vpop.f32.mrf.mxu0
        %v1499 = vadd.f32 %v1470, %v1498
        %1500 = vmatmul.f32.gmra.mxu0 %v1479
        %v1501 = vpop.f32.mrf.mxu0
        %v1502 = vadd.f32 %v1473, %v1501
        %1503 = vdwg.mxu0
        %s1504 = sld [smem:[#allocation2 + $0xa80]]
        %v1505 = vstv %s1504
        %v1506 = vmul.f32 %v1505, %v268
        %v1507 = vmul.f32 %v1505, %v269
        %s1508 = sld [smem:[#allocation2 + $0xa81]]
        %v1509 = vstv %s1508
        %v1510 = vmul.f32 %v1509, %v273
        %v1511 = vmul.f32 %v1509, %v274
        %v1512 = vadd.f32 %v1506, %v1510
        %v1513 = vadd.f32 %v1507, %v1511
        %s1514 = sld [smem:[#allocation2 + $0xa82]]
        %v1515 = vstv %s1514
        %v1516 = vmul.f32 %v1515, %v278
        %v1517 = vmul.f32 %v1515, %v279
        %v1518 = vadd.f32 %v1512, %v1516
        %v1519 = vadd.f32 %v1513, %v1517
        %s1520 = sld [smem:[#allocation2 + $0xa83]]
        %v1521 = vstv %s1520
        %v1522 = vmul.f32 %v1521, %v283
        %v1523 = vmul.f32 %v1521, %v284
        %v1524 = vadd.f32 %v1518, %v1522
        %v1525 = vadd.f32 %v1519, %v1523
        %v1527 = vsel %vm340, %v1524, 0
        %v1530 = vsel %vm340, %v1525, 0
        %1532 = vmatpush.msra.mxu0 0.0
        %1533 = vmatpush.msra.mxu0 0.0
        %1534 = vmatpush.msra.mxu0 0.0
        %1535 = vmatpush.msra.mxu0 0.0
        %1536 = vmatpush.msra.mxu0 0.0
        %1537 = vmatpush.msra.mxu0 0.0
        %1538 = vmatpush.msra.mxu0 0.0
        %1539 = vmatpush.msra.mxu0 0.0
        %1540 = vmatpush.msra.mxu0 0.0
        %1541 = vmatpush.msra.mxu0 0.0
        %1542 = vmatpush.msra.mxu0 0.0
        %1543 = vmatpush.msra.mxu0 0.0
        %1544 = vmatpush.msra.mxu0 0.0
        %1545 = vmatpush.msra.mxu0 0.0
        %1546 = vmatpush.msra.mxu0 %v292
        %1547 = vmatpush.msra.mxu0 %v291
        %1548 = vmatmul.f32.gmra.mxu0 %v1527
        %v1549 = vpop.f32.mrf.mxu0
        %v1550 = vadd.f32 0.0, %v1549
        %1551 = vmatmul.f32.gmra.mxu0 %v1530
        %v1552 = vpop.f32.mrf.mxu0
        %v1553 = vadd.f32 0.0, %v1552
        %1554 = vdwg.mxu0
        %v1555 = vadd.f32 %v1499, %v1550
        %v1556 = vadd.f32 %v1502, %v1553
        %s1557 = sld [smem:[#allocation2 + $0xe80]]
        %v1558 = vstv %s1557
        %v1559 = vmul.f32 %v1558, %v268
        %v1560 = vmul.f32 %v1558, %v269
        %s1561 = sld [smem:[#allocation2 + $0xe81]]
        %v1562 = vstv %s1561
        %v1563 = vmul.f32 %v1562, %v273
        %v1564 = vmul.f32 %v1562, %v274
        %v1565 = vadd.f32 %v1559, %v1563
        %v1566 = vadd.f32 %v1560, %v1564
        %s1567 = sld [smem:[#allocation2 + $0xe82]]
        %v1568 = vstv %s1567
        %v1569 = vmul.f32 %v1568, %v278
        %v1570 = vmul.f32 %v1568, %v279
        %v1571 = vadd.f32 %v1565, %v1569
        %v1572 = vadd.f32 %v1566, %v1570
        %s1573 = sld [smem:[#allocation2 + $0xe83]]
        %v1574 = vstv %s1573
        %v1575 = vmul.f32 %v1574, %v283
        %v1576 = vmul.f32 %v1574, %v284
        %v1577 = vadd.f32 %v1571, %v1575
        %v1578 = vadd.f32 %v1572, %v1576
        %v1580 = vsel %vm340, %v1577, 0
        %v1583 = vsel %vm340, %v1578, 0
        %1585 = vmatpush.msra.mxu0 0.0
        %1586 = vmatpush.msra.mxu0 0.0
        %1587 = vmatpush.msra.mxu0 0.0
        %1588 = vmatpush.msra.mxu0 0.0
        %1589 = vmatpush.msra.mxu0 0.0
        %1590 = vmatpush.msra.mxu0 0.0
        %1591 = vmatpush.msra.mxu0 0.0
        %1592 = vmatpush.msra.mxu0 0.0
        %1593 = vmatpush.msra.mxu0 0.0
        %1594 = vmatpush.msra.mxu0 0.0
        %1595 = vmatpush.msra.mxu0 0.0
        %1596 = vmatpush.msra.mxu0 0.0
        %1597 = vmatpush.msra.mxu0 0.0
        %1598 = vmatpush.msra.mxu0 0.0
        %1599 = vmatpush.msra.mxu0 %v295
        %1600 = vmatpush.msra.mxu0 %v294
        %1601 = vmatmul.f32.gmra.mxu0 %v1580
        %v1602 = vpop.f32.mrf.mxu0
        %v1603 = vadd.f32 0.0, %v1602
        %1604 = vmatmul.f32.gmra.mxu0 %v1583
        %v1605 = vpop.f32.mrf.mxu0
        %v1606 = vadd.f32 0.0, %v1605
        %1607 = vdwg.mxu0
        %v1608 = vadd.f32 %v1555, %v1603
        %v1609 = vadd.f32 %v1556, %v1606
        %s1610 = sld [smem:[#allocation4 + $0x5]]
        %v1611 = vstv %s1610
        %v1612 = vadd.f32 %v1608, %v1611
        %v1613 = vadd.f32 %v1609, %v1611
        %vm1614 = vcmp.gt.f32.partialorder %v1612, 0.0
        %vm1615 = vcmp.gt.f32.partialorder %v1613, 0.0
        %v1616 = vmul.f32 %v1612, 0.01
        %v1617 = vmul.f32 %v1613, 0.01
        %v1618 = vsel %vm1614, %v1612, %v1616
        %v1619 = vsel %vm1615, %v1613, %v1617
        %s1620 = scalar_lea.vmem %s264, 80
        %1621 = vst.msk [vmem:[%s1620] sm:$0xff] %vm515, %v1618
        %1622 = vst.msk [vmem:[%s1620 + $0x8] sm:$0xff] %vm515, %v1619
        %s1623 = sld [smem:[#allocation2 + $0x300]]
        %v1624 = vstv %s1623
        %v1625 = vmul.f32 %v1624, %v268
        %v1626 = vmul.f32 %v1624, %v269
        %s1627 = sld [smem:[#allocation2 + $0x301]]
        %v1628 = vstv %s1627
        %v1629 = vmul.f32 %v1628, %v273
        %v1630 = vmul.f32 %v1628, %v274
        %v1631 = vadd.f32 %v1625, %v1629
        %v1632 = vadd.f32 %v1626, %v1630
        %s1633 = sld [smem:[#allocation2 + $0x302]]
        %v1634 = vstv %s1633
        %v1635 = vmul.f32 %v1634, %v278
        %v1636 = vmul.f32 %v1634, %v279
        %v1637 = vadd.f32 %v1631, %v1635
        %v1638 = vadd.f32 %v1632, %v1636
        %s1639 = sld [smem:[#allocation2 + $0x303]]
        %v1640 = vstv %s1639
        %v1641 = vmul.f32 %v1640, %v283
        %v1642 = vmul.f32 %v1640, %v284
        %v1643 = vadd.f32 %v1637, %v1641
        %v1644 = vadd.f32 %v1638, %v1642
        %s1645 = sld [smem:[#allocation2 + $0x700]]
        %v1646 = vstv %s1645
        %v1647 = vmul.f32 %v1646, %v268
        %v1648 = vmul.f32 %v1646, %v269
        %s1649 = sld [smem:[#allocation2 + $0x701]]
        %v1650 = vstv %s1649
        %v1651 = vmul.f32 %v1650, %v273
        %v1652 = vmul.f32 %v1650, %v274
        %v1653 = vadd.f32 %v1647, %v1651
        %v1654 = vadd.f32 %v1648, %v1652
        %s1655 = sld [smem:[#allocation2 + $0x702]]
        %v1656 = vstv %s1655
        %v1657 = vmul.f32 %v1656, %v278
        %v1658 = vmul.f32 %v1656, %v279
        %v1659 = vadd.f32 %v1653, %v1657
        %v1660 = vadd.f32 %v1654, %v1658
        %s1661 = sld [smem:[#allocation2 + $0x703]]
        %v1662 = vstv %s1661
        %v1663 = vmul.f32 %v1662, %v283
        %v1664 = vmul.f32 %v1662, %v284
        %v1665 = vadd.f32 %v1659, %v1663
        %v1666 = vadd.f32 %v1660, %v1664
        %v1668 = vsel %vm340, %v1665, 0
        %v1671 = vsel %vm340, %v1666, 0
        %1673 = vmatpush.msra.mxu0 0.0
        %1674 = vmatpush.msra.mxu0 0.0
        %1675 = vmatpush.msra.mxu0 0.0
        %1676 = vmatpush.msra.mxu0 0.0
        %1677 = vmatpush.msra.mxu0 0.0
        %1678 = vmatpush.msra.mxu0 0.0
        %1679 = vmatpush.msra.mxu0 0.0
        %1680 = vmatpush.msra.mxu0 0.0
        %1681 = vmatpush.msra.mxu0 0.0
        %1682 = vmatpush.msra.mxu0 0.0
        %1683 = vmatpush.msra.mxu0 0.0
        %1684 = vmatpush.msra.mxu0 0.0
        %1685 = vmatpush.msra.mxu0 0.0
        %1686 = vmatpush.msra.mxu0 0.0
        %1687 = vmatpush.msra.mxu0 %v289
        %1688 = vmatpush.msra.mxu0 %v288
        %1689 = vmatmul.f32.gmra.mxu0 %v1668
        %v1690 = vpop.f32.mrf.mxu0
        %v1691 = vadd.f32 0.0, %v1690
        %1692 = vmatmul.f32.gmra.mxu0 %v1671
        %v1693 = vpop.f32.mrf.mxu0
        %v1694 = vadd.f32 0.0, %v1693
        %1695 = vdwg.mxu0
        %v1697 = vsel %vm340, %v1643, 0
        %v1700 = vsel %vm340, %v1644, 0
        %1702 = vmatpush.msra.mxu0 0.0
        %1703 = vmatpush.msra.mxu0 0.0
        %1704 = vmatpush.msra.mxu0 0.0
        %1705 = vmatpush.msra.mxu0 0.0
        %1706 = vmatpush.msra.mxu0 0.0
        %1707 = vmatpush.msra.mxu0 0.0
        %1708 = vmatpush.msra.mxu0 0.0
        %1709 = vmatpush.msra.mxu0 0.0
        %1710 = vmatpush.msra.mxu0 0.0
        %1711 = vmatpush.msra.mxu0 0.0
        %1712 = vmatpush.msra.mxu0 0.0
        %1713 = vmatpush.msra.mxu0 0.0
        %1714 = vmatpush.msra.mxu0 0.0
        %1715 = vmatpush.msra.mxu0 0.0
        %1716 = vmatpush.msra.mxu0 %v286
        %1717 = vmatpush.msra.mxu0 %v285
        %1718 = vmatmul.f32.gmra.mxu0 %v1697
        %v1719 = vpop.f32.mrf.mxu0
        %v1720 = vadd.f32 %v1691, %v1719
        %1721 = vmatmul.f32.gmra.mxu0 %v1700
        %v1722 = vpop.f32.mrf.mxu0
        %v1723 = vadd.f32 %v1694, %v1722
        %1724 = vdwg.mxu0
        %s1725 = sld [smem:[#allocation2 + $0xb00]]
        %v1726 = vstv %s1725
        %v1727 = vmul.f32 %v1726, %v268
        %v1728 = vmul.f32 %v1726, %v269
        %s1729 = sld [smem:[#allocation2 + $0xb01]]
        %v1730 = vstv %s1729
        %v1731 = vmul.f32 %v1730, %v273
        %v1732 = vmul.f32 %v1730, %v274
        %v1733 = vadd.f32 %v1727, %v1731
        %v1734 = vadd.f32 %v1728, %v1732
        %s1735 = sld [smem:[#allocation2 + $0xb02]]
        %v1736 = vstv %s1735
        %v1737 = vmul.f32 %v1736, %v278
        %v1738 = vmul.f32 %v1736, %v279
        %v1739 = vadd.f32 %v1733, %v1737
        %v1740 = vadd.f32 %v1734, %v1738
        %s1741 = sld [smem:[#allocation2 + $0xb03]]
        %v1742 = vstv %s1741
        %v1743 = vmul.f32 %v1742, %v283
        %v1744 = vmul.f32 %v1742, %v284
        %v1745 = vadd.f32 %v1739, %v1743
        %v1746 = vadd.f32 %v1740, %v1744
        %v1748 = vsel %vm340, %v1745, 0
        %v1751 = vsel %vm340, %v1746, 0
        %1753 = vmatpush.msra.mxu0 0.0
        %1754 = vmatpush.msra.mxu0 0.0
        %1755 = vmatpush.msra.mxu0 0.0
        %1756 = vmatpush.msra.mxu0 0.0
        %1757 = vmatpush.msra.mxu0 0.0
        %1758 = vmatpush.msra.mxu0 0.0
        %1759 = vmatpush.msra.mxu0 0.0
        %1760 = vmatpush.msra.mxu0 0.0
        %1761 = vmatpush.msra.mxu0 0.0
        %1762 = vmatpush.msra.mxu0 0.0
        %1763 = vmatpush.msra.mxu0 0.0
        %1764 = vmatpush.msra.mxu0 0.0
        %1765 = vmatpush.msra.mxu0 0.0
        %1766 = vmatpush.msra.mxu0 0.0
        %1767 = vmatpush.msra.mxu0 %v292
        %1768 = vmatpush.msra.mxu0 %v291
        %1769 = vmatmul.f32.gmra.mxu0 %v1748
        %v1770 = vpop.f32.mrf.mxu0
        %v1771 = vadd.f32 0.0, %v1770
        %1772 = vmatmul.f32.gmra.mxu0 %v1751
        %v1773 = vpop.f32.mrf.mxu0
        %v1774 = vadd.f32 0.0, %v1773
        %1775 = vdwg.mxu0
        %v1776 = vadd.f32 %v1720, %v1771
        %v1777 = vadd.f32 %v1723, %v1774
        %s1778 = sld [smem:[#allocation2 + $0xf00]]
        %v1779 = vstv %s1778
        %v1780 = vmul.f32 %v1779, %v268
        %v1781 = vmul.f32 %v1779, %v269
        %s1782 = sld [smem:[#allocation2 + $0xf01]]
        %v1783 = vstv %s1782
        %v1784 = vmul.f32 %v1783, %v273
        %v1785 = vmul.f32 %v1783, %v274
        %v1786 = vadd.f32 %v1780, %v1784
        %v1787 = vadd.f32 %v1781, %v1785
        %s1788 = sld [smem:[#allocation2 + $0xf02]]
        %v1789 = vstv %s1788
        %v1790 = vmul.f32 %v1789, %v278
        %v1791 = vmul.f32 %v1789, %v279
        %v1792 = vadd.f32 %v1786, %v1790
        %v1793 = vadd.f32 %v1787, %v1791
        %s1794 = sld [smem:[#allocation2 + $0xf03]]
        %v1795 = vstv %s1794
        %v1796 = vmul.f32 %v1795, %v283
        %v1797 = vmul.f32 %v1795, %v284
        %v1798 = vadd.f32 %v1792, %v1796
        %v1799 = vadd.f32 %v1793, %v1797
        %v1801 = vsel %vm340, %v1798, 0
        %v1804 = vsel %vm340, %v1799, 0
        %1806 = vmatpush.msra.mxu0 0.0
        %1807 = vmatpush.msra.mxu0 0.0
        %1808 = vmatpush.msra.mxu0 0.0
        %1809 = vmatpush.msra.mxu0 0.0
        %1810 = vmatpush.msra.mxu0 0.0
        %1811 = vmatpush.msra.mxu0 0.0
        %1812 = vmatpush.msra.mxu0 0.0
        %1813 = vmatpush.msra.mxu0 0.0
        %1814 = vmatpush.msra.mxu0 0.0
        %1815 = vmatpush.msra.mxu0 0.0
        %1816 = vmatpush.msra.mxu0 0.0
        %1817 = vmatpush.msra.mxu0 0.0
        %1818 = vmatpush.msra.mxu0 0.0
        %1819 = vmatpush.msra.mxu0 0.0
        %1820 = vmatpush.msra.mxu0 %v295
        %1821 = vmatpush.msra.mxu0 %v294
        %1822 = vmatmul.f32.gmra.mxu0 %v1801
        %v1823 = vpop.f32.mrf.mxu0
        %v1824 = vadd.f32 0.0, %v1823
        %1825 = vmatmul.f32.gmra.mxu0 %v1804
        %v1826 = vpop.f32.mrf.mxu0
        %v1827 = vadd.f32 0.0, %v1826
        %1828 = vdwg.mxu0
        %v1829 = vadd.f32 %v1776, %v1824
        %v1830 = vadd.f32 %v1777, %v1827
        %s1831 = sld [smem:[#allocation4 + $0x6]]
        %v1832 = vstv %s1831
        %v1833 = vadd.f32 %v1829, %v1832
        %v1834 = vadd.f32 %v1830, %v1832
        %vm1835 = vcmp.gt.f32.partialorder %v1833, 0.0
        %vm1836 = vcmp.gt.f32.partialorder %v1834, 0.0
        %v1837 = vmul.f32 %v1833, 0.01
        %v1838 = vmul.f32 %v1834, 0.01
        %v1839 = vsel %vm1835, %v1833, %v1837
        %v1840 = vsel %vm1836, %v1834, %v1838
        %s1841 = scalar_lea.vmem %s264, 96
        %1842 = vst.msk [vmem:[%s1841] sm:$0xff] %vm515, %v1839
        %1843 = vst.msk [vmem:[%s1841 + $0x8] sm:$0xff] %vm515, %v1840
        %s1844 = sld [smem:[#allocation2 + $0x380]]
        %v1845 = vstv %s1844
        %v1846 = vmul.f32 %v1845, %v268
        %v1847 = vmul.f32 %v1845, %v269
        %s1848 = sld [smem:[#allocation2 + $0x381]]
        %v1849 = vstv %s1848
        %v1850 = vmul.f32 %v1849, %v273
        %v1851 = vmul.f32 %v1849, %v274
        %v1852 = vadd.f32 %v1846, %v1850
        %v1853 = vadd.f32 %v1847, %v1851
        %s1854 = sld [smem:[#allocation2 + $0x382]]
        %v1855 = vstv %s1854
        %v1856 = vmul.f32 %v1855, %v278
        %v1857 = vmul.f32 %v1855, %v279
        %v1858 = vadd.f32 %v1852, %v1856
        %v1859 = vadd.f32 %v1853, %v1857
        %s1860 = sld [smem:[#allocation2 + $0x383]]
        %v1861 = vstv %s1860
        %v1862 = vmul.f32 %v1861, %v283
        %v1863 = vmul.f32 %v1861, %v284
        %v1864 = vadd.f32 %v1858, %v1862
        %v1865 = vadd.f32 %v1859, %v1863
        %s1866 = sld [smem:[#allocation2 + $0x780]]
        %v1867 = vstv %s1866
        %v1868 = vmul.f32 %v1867, %v268
        %v1869 = vmul.f32 %v1867, %v269
        %s1870 = sld [smem:[#allocation2 + $0x781]]
        %v1871 = vstv %s1870
        %v1872 = vmul.f32 %v1871, %v273
        %v1873 = vmul.f32 %v1871, %v274
        %v1874 = vadd.f32 %v1868, %v1872
        %v1875 = vadd.f32 %v1869, %v1873
        %s1876 = sld [smem:[#allocation2 + $0x782]]
        %v1877 = vstv %s1876
        %v1878 = vmul.f32 %v1877, %v278
        %v1879 = vmul.f32 %v1877, %v279
        %v1880 = vadd.f32 %v1874, %v1878
        %v1881 = vadd.f32 %v1875, %v1879
        %s1882 = sld [smem:[#allocation2 + $0x783]]
        %v1883 = vstv %s1882
        %v1884 = vmul.f32 %v1883, %v283
        %v1885 = vmul.f32 %v1883, %v284
        %v1886 = vadd.f32 %v1880, %v1884
        %v1887 = vadd.f32 %v1881, %v1885
        %v1889 = vsel %vm340, %v1886, 0
        %v1892 = vsel %vm340, %v1887, 0
        %1894 = vmatpush.msra.mxu0 0.0
        %1895 = vmatpush.msra.mxu0 0.0
        %1896 = vmatpush.msra.mxu0 0.0
        %1897 = vmatpush.msra.mxu0 0.0
        %1898 = vmatpush.msra.mxu0 0.0
        %1899 = vmatpush.msra.mxu0 0.0
        %1900 = vmatpush.msra.mxu0 0.0
        %1901 = vmatpush.msra.mxu0 0.0
        %1902 = vmatpush.msra.mxu0 0.0
        %1903 = vmatpush.msra.mxu0 0.0
        %1904 = vmatpush.msra.mxu0 0.0
        %1905 = vmatpush.msra.mxu0 0.0
        %1906 = vmatpush.msra.mxu0 0.0
        %1907 = vmatpush.msra.mxu0 0.0
        %1908 = vmatpush.msra.mxu0 %v289
        %1909 = vmatpush.msra.mxu0 %v288
        %1910 = vmatmul.f32.gmra.mxu0 %v1889
        %v1911 = vpop.f32.mrf.mxu0
        %v1912 = vadd.f32 0.0, %v1911
        %1913 = vmatmul.f32.gmra.mxu0 %v1892
        %v1914 = vpop.f32.mrf.mxu0
        %v1915 = vadd.f32 0.0, %v1914
        %1916 = vdwg.mxu0
        %v1918 = vsel %vm340, %v1864, 0
        %v1921 = vsel %vm340, %v1865, 0
        %1923 = vmatpush.msra.mxu0 0.0
        %1924 = vmatpush.msra.mxu0 0.0
        %1925 = vmatpush.msra.mxu0 0.0
        %1926 = vmatpush.msra.mxu0 0.0
        %1927 = vmatpush.msra.mxu0 0.0
        %1928 = vmatpush.msra.mxu0 0.0
        %1929 = vmatpush.msra.mxu0 0.0
        %1930 = vmatpush.msra.mxu0 0.0
        %1931 = vmatpush.msra.mxu0 0.0
        %1932 = vmatpush.msra.mxu0 0.0
        %1933 = vmatpush.msra.mxu0 0.0
        %1934 = vmatpush.msra.mxu0 0.0
        %1935 = vmatpush.msra.mxu0 0.0
        %1936 = vmatpush.msra.mxu0 0.0
        %1937 = vmatpush.msra.mxu0 %v286
        %1938 = vmatpush.msra.mxu0 %v285
        %1939 = vmatmul.f32.gmra.mxu0 %v1918
        %v1940 = vpop.f32.mrf.mxu0
        %v1941 = vadd.f32 %v1912, %v1940
        %1942 = vmatmul.f32.gmra.mxu0 %v1921
        %v1943 = vpop.f32.mrf.mxu0
        %v1944 = vadd.f32 %v1915, %v1943
        %1945 = vdwg.mxu0
        %s1946 = sld [smem:[#allocation2 + $0xb80]]
        %v1947 = vstv %s1946
        %v1948 = vmul.f32 %v1947, %v268
        %v1949 = vmul.f32 %v1947, %v269
        %s1950 = sld [smem:[#allocation2 + $0xb81]]
        %v1951 = vstv %s1950
        %v1952 = vmul.f32 %v1951, %v273
        %v1953 = vmul.f32 %v1951, %v274
        %v1954 = vadd.f32 %v1948, %v1952
        %v1955 = vadd.f32 %v1949, %v1953
        %s1956 = sld [smem:[#allocation2 + $0xb82]]
        %v1957 = vstv %s1956
        %v1958 = vmul.f32 %v1957, %v278
        %v1959 = vmul.f32 %v1957, %v279
        %v1960 = vadd.f32 %v1954, %v1958
        %v1961 = vadd.f32 %v1955, %v1959
        %s1962 = sld [smem:[#allocation2 + $0xb83]]
        %v1963 = vstv %s1962
        %v1964 = vmul.f32 %v1963, %v283
        %v1965 = vmul.f32 %v1963, %v284
        %v1966 = vadd.f32 %v1960, %v1964
        %v1967 = vadd.f32 %v1961, %v1965
        %v1969 = vsel %vm340, %v1966, 0
        %v1972 = vsel %vm340, %v1967, 0
        %1974 = vmatpush.msra.mxu0 0.0
        %1975 = vmatpush.msra.mxu0 0.0
        %1976 = vmatpush.msra.mxu0 0.0
        %1977 = vmatpush.msra.mxu0 0.0
        %1978 = vmatpush.msra.mxu0 0.0
        %1979 = vmatpush.msra.mxu0 0.0
        %1980 = vmatpush.msra.mxu0 0.0
        %1981 = vmatpush.msra.mxu0 0.0
        %1982 = vmatpush.msra.mxu0 0.0
        %1983 = vmatpush.msra.mxu0 0.0
        %1984 = vmatpush.msra.mxu0 0.0
        %1985 = vmatpush.msra.mxu0 0.0
        %1986 = vmatpush.msra.mxu0 0.0
        %1987 = vmatpush.msra.mxu0 0.0
        %1988 = vmatpush.msra.mxu0 %v292
        %1989 = vmatpush.msra.mxu0 %v291
        %1990 = vmatmul.f32.gmra.mxu0 %v1969
        %v1991 = vpop.f32.mrf.mxu0
        %v1992 = vadd.f32 0.0, %v1991
        %1993 = vmatmul.f32.gmra.mxu0 %v1972
        %v1994 = vpop.f32.mrf.mxu0
        %v1995 = vadd.f32 0.0, %v1994
        %1996 = vdwg.mxu0
        %v1997 = vadd.f32 %v1941, %v1992
        %v1998 = vadd.f32 %v1944, %v1995
        %s1999 = sld [smem:[#allocation2 + $0xf80]]
        %v2000 = vstv %s1999
        %v2001 = vmul.f32 %v2000, %v268
        %v2002 = vmul.f32 %v2000, %v269
        %s2003 = sld [smem:[#allocation2 + $0xf81]]
        %v2004 = vstv %s2003
        %v2005 = vmul.f32 %v2004, %v273
        %v2006 = vmul.f32 %v2004, %v274
        %v2007 = vadd.f32 %v2001, %v2005
        %v2008 = vadd.f32 %v2002, %v2006
        %s2009 = sld [smem:[#allocation2 + $0xf82]]
        %v2010 = vstv %s2009
        %v2011 = vmul.f32 %v2010, %v278
        %v2012 = vmul.f32 %v2010, %v279
        %v2013 = vadd.f32 %v2007, %v2011
        %v2014 = vadd.f32 %v2008, %v2012
        %s2015 = sld [smem:[#allocation2 + $0xf83]]
        %v2016 = vstv %s2015
        %v2017 = vmul.f32 %v2016, %v283
        %v2018 = vmul.f32 %v2016, %v284
        %v2019 = vadd.f32 %v2013, %v2017
        %v2020 = vadd.f32 %v2014, %v2018
        %v2022 = vsel %vm340, %v2019, 0
        %v2025 = vsel %vm340, %v2020, 0
        %2027 = vmatpush.msra.mxu0 0.0
        %2028 = vmatpush.msra.mxu0 0.0
        %2029 = vmatpush.msra.mxu0 0.0
        %2030 = vmatpush.msra.mxu0 0.0
        %2031 = vmatpush.msra.mxu0 0.0
        %2032 = vmatpush.msra.mxu0 0.0
        %2033 = vmatpush.msra.mxu0 0.0
        %2034 = vmatpush.msra.mxu0 0.0
        %2035 = vmatpush.msra.mxu0 0.0
        %2036 = vmatpush.msra.mxu0 0.0
        %2037 = vmatpush.msra.mxu0 0.0
        %2038 = vmatpush.msra.mxu0 0.0
        %2039 = vmatpush.msra.mxu0 0.0
        %2040 = vmatpush.msra.mxu0 0.0
        %2041 = vmatpush.msra.mxu0 %v295
        %2042 = vmatpush.msra.mxu0 %v294
        %2043 = vmatmul.f32.gmra.mxu0 %v2022
        %v2044 = vpop.f32.mrf.mxu0
        %v2045 = vadd.f32 0.0, %v2044
        %2046 = vmatmul.f32.gmra.mxu0 %v2025
        %v2047 = vpop.f32.mrf.mxu0
        %v2048 = vadd.f32 0.0, %v2047
        %2049 = vdwg.mxu0
        %v2050 = vadd.f32 %v1997, %v2045
        %v2051 = vadd.f32 %v1998, %v2048
        %s2052 = sld [smem:[#allocation4 + $0x7]]
        %v2053 = vstv %s2052
        %v2054 = vadd.f32 %v2050, %v2053
        %v2055 = vadd.f32 %v2051, %v2053
        %vm2056 = vcmp.gt.f32.partialorder %v2054, 0.0
        %vm2057 = vcmp.gt.f32.partialorder %v2055, 0.0
        %v2058 = vmul.f32 %v2054, 0.01
        %v2059 = vmul.f32 %v2055, 0.01
        %v2060 = vsel %vm2056, %v2054, %v2058
        %v2061 = vsel %vm2057, %v2055, %v2059
        %s2062 = scalar_lea.vmem %s264, 112
        %2063 = vst.msk [vmem:[%s2062] sm:$0xff] %vm515, %v2060
        %2064 = vst.msk [vmem:[%s2062 + $0x8] sm:$0xff] %vm515, %v2061
        %s2065 = smul.u32 2, %s22
        %p2066 = scmp.lt.s32.totalorder %s21, 1
        %s2067 = scalar_select %p2066, %s21, 1
        %p2068 = scmp.lt.s32.totalorder %s2065, 1
        %s2069 = scalar_select %p2068, %s2065, 1
        %s2070 = smul.addr %s2067, 16
        %s2071 = sadd.s32 %s2069, %s2070
        %s2072 = smul.addr %s2071, 8
        %s2073 = scalar_lea.vmem %s4, %s2072
        // Predicated region
        $region45: #{upconv_forward.1} parent=35 // pred_check
          %p2074 = pneg %p140
        $region46: #{upconv_forward.1} parent=35 // pred_check_branch
          %2076 = sbr.rel (%p2074) target = $region48
        $region47: #{upconv_forward.1} parent=35 // pred_region
          %s2077 = smul.u32 2, %s22
        $region48: #{upconv_forward.1} parent=35 // pred_fallthru
          _
      $region36: #{upconv_forward.1} parent=5 // pred_fallthru
        _
      %p2078 = scmp.le.s32.totalorder 2, %s12
      // Predicated region
      $region49: #{upconv_forward.1} parent=5 // pred_check
        %p2079 = pneg %p2078
      $region50: #{upconv_forward.1} parent=5 // pred_check_branch
        %2081 = sbr.rel (%p2079) target = $region52
      $region51: #{upconv_forward.1} parent=5 // pred_region
        %s2082 = ssub.s32 %s12, 2
        // Predicated region
        $region53: #{upconv_forward.1} parent=51 // pred_check
          %p2083 = pneg %p146
        $region54: #{upconv_forward.1} parent=51 // pred_check_branch
          %2085 = sbr.rel (%p2083) target = $region56
        $region55: #{upconv_forward.1} parent=51 // pred_region
          %s2086 = smul.u32 2, %s24
          %p2087 = scmp.lt.s32.totalorder %s23, 1
          %s2088 = scalar_select %p2087, %s23, 1
          %p2089 = scmp.lt.s32.totalorder %s2086, 1
          %s2090 = scalar_select %p2089, %s2086, 1
          %s2091 = smul.addr %s2088, 16
          %s2092 = sadd.s32 %s2090, %s2091
          %s2093 = smul.addr %s2092, 8
          %s2094 = scalar_lea.vmem %s4, %s2093
        $region56: #{upconv_forward.1} parent=51 // pred_fallthru
          _
      $region52: #{upconv_forward.1} parent=5 // pred_fallthru
        _
    $region6: #{upconv_forward.1} parent=1 // loop_footer
      %s16 = sadd.s32 1, %s12
    $region7: #{upconv_forward.1} parent=1 // loop_footer_branch
      %11 = sbr.rel target = $region3
    $region8: #{upconv_forward.1} parent=1 // loop_exit
      _
    %2095 = vsyncpa [#allocation3], 1
    %s2096 = scalar_lea.sflag [#allocation3], 1
    %2097 = vsyncpa %s2096, 1
    %2098 = vsyncpa [#allocation5], 1

</llo_original>
